<compile_context>
chip_gen: v7x
topology: tpu7x:2x2x1
jax: 0.10.0
libtpu: 0.0.40
codegen_flags: <defaults>
</compile_context>

<pallas_src>
import functools

import jax
import jax.numpy as jnp
from jax import lax
from jax.experimental import pallas as pl
from jax.experimental.pallas import tpu as pltpu


def _round_up(x, m):
    return ((x + m - 1) // m) * m


# ------------------------------------------------------------------ kernel --
def _make_kernel(T, Bp, Dp):
    """Kernel closure over the static padded sizes."""

    def kernel(x_ref,                       # [T*Bp, Dp]   time-major padded input
               wih1_ref, whh1_ref, b1_ref,  # layer 1: [Dp,4Dp], [Dp,4Dp], [1,4Dp]
               wih2_ref, whh2_ref, b2_ref,  # layer 2
               wfc_ref, bfc_ref,            # [1,Dp], [1,1]
               out_ref,                     # [Bp, 128]
               xp_ref, h1all_ref):          # scratch: [T*Bp,4Dp], [T*Bp,Dp]

        def run_layer(whh_ref, hall_ref):
            def step(t, carry):
                h, c = carry
                row = pl.multiple_of(t * Bp, Bp)
                # gates = (precomputed x-projection) + h @ W_hh  (one lane-dense matmul)
                gates = (xp_ref[pl.ds(row, Bp), :]
                         + jnp.dot(h, whh_ref[...],
                                   preferred_element_type=jnp.float32))
                # PyTorch LSTM gate order: i, f, g, o (stacked along lanes).
                i = jax.nn.sigmoid(gates[:, 0 * Dp:1 * Dp])
                f = jax.nn.sigmoid(gates[:, 1 * Dp:2 * Dp])
                g = jnp.tanh(gates[:, 2 * Dp:3 * Dp])
                o = jax.nn.sigmoid(gates[:, 3 * Dp:4 * Dp])
                c_new = f * c + i * g
                h_new = o * jnp.tanh(c_new)
                if hall_ref is not None:
                    hall_ref[pl.ds(row, Bp), :] = h_new
                return h_new, c_new

            h0 = jnp.zeros((Bp, Dp), jnp.float32)
            c0 = jnp.zeros((Bp, Dp), jnp.float32)
            # Recurrence carried in vregs; fully unrolled for LLO visibility.
            return lax.fori_loop(0, T, step, (h0, c0), unroll=True)

        # ---- layer 1: batched input projection, then unrolled recurrence ----
        xp_ref[...] = (jnp.dot(x_ref[...], wih1_ref[...],
                               preferred_element_type=jnp.float32)
                       + b1_ref[...])
        run_layer(whh1_ref, h1all_ref)

        # ---- layer 2: project all layer-1 outputs at once, then recur ----
        xp_ref[...] = (jnp.dot(h1all_ref[...], wih2_ref[...],
                               preferred_element_type=jnp.float32)
                       + b2_ref[...])
        h2_last, _ = run_layer(whh2_ref, None)

        # ---- final Linear(D->1) on last hidden state: VPU mul + lane reduce ----
        y = jnp.sum(h2_last * wfc_ref[...], axis=-1, keepdims=True) + bfc_ref[...]
        out_ref[...] = jnp.broadcast_to(y, out_ref.shape)   # full-vreg, unmasked store

    return kernel


# ----------------------------------------------------------------- wrapper --
def day_model3_forward(rnn_inputs, cnn_inputs, raw_inputs, params):
    """Returns (fc_hid, out_seq) matching Day_Model_3.forward."""
    x = jnp.concatenate([rnn_inputs, cnn_inputs, raw_inputs],
                        axis=2).astype(jnp.float32)           # [B, T, D]
    B, T, D = x.shape
    Bp = _round_up(max(B, 8), 8)         # sublane-aligned batch
    Dp = _round_up(max(D, 128), 128)     # lane-aligned feature dim

    wih1, whh1, b1, wih2, whh2, b2, wfc, bfc = params

    def pack_w(w):   # [4, D_in, D_out] -> [Dp, 4*Dp], gates stacked on lanes
        out = jnp.zeros((Dp, 4 * Dp), jnp.float32)
        for g in range(4):
            out = out.at[:D, g * Dp:g * Dp + D].set(w[g])
        return out

    def pack_b(b):   # [4, 1, D] -> [1, 4*Dp]
        out = jnp.zeros((1, 4 * Dp), jnp.float32)
        for g in range(4):
            out = out.at[0, g * Dp:g * Dp + D].set(b[g, 0])
        return out

    W_ih1, W_hh1, B1 = pack_w(wih1), pack_w(whh1), pack_b(b1)
    W_ih2, W_hh2, B2 = pack_w(wih2), pack_w(whh2), pack_b(b2)
    W_fc = jnp.zeros((1, Dp), jnp.float32).at[0, :D].set(wfc[:, 0])
    B_fc = bfc.reshape(1, 1).astype(jnp.float32)

    # Time-major, zero-padded, flattened: [T*Bp, Dp] (one tiny fused XLA prologue).
    x_tm = jnp.transpose(x, (1, 0, 2))                        # [T, B, D]
    x_pad = (jnp.zeros((T, Bp, Dp), jnp.float32)
             .at[:, :B, :D].set(x_tm)
             .reshape(T * Bp, Dp))

    vmem_specs = [pl.BlockSpec(memory_space=pltpu.MemorySpace.VMEM)
                  for _ in range(9)]

    out = pl.pallas_call(
        _make_kernel(T, Bp, Dp),
        out_shape=jax.ShapeDtypeStruct((Bp, 128), jnp.float32),
        in_specs=vmem_specs,
        out_specs=pl.BlockSpec(memory_space=pltpu.MemorySpace.VMEM),
        scratch_shapes=[pltpu.VMEM((T * Bp, 4 * Dp), jnp.float32),   # gate precompute
                        pltpu.VMEM((T * Bp, Dp), jnp.float32)],      # layer-1 outputs
    )(x_pad, W_ih1, W_hh1, B1, W_ih2, W_hh2, B2, W_fc, B_fc)

    fc_hid = rnn_inputs
    return fc_hid, out[:B, 0]


# -------------------------------------------------------- param init (det) --
def init_params(key, input_size, hid_size):
    D = 2 * hid_size + input_size
    k = 1.0 / jnp.sqrt(jnp.float32(D))

    def uni(key, shape):
        return jax.random.uniform(key, shape, jnp.float32, -k, k)

    keys = jax.random.split(key, 10)
    # Gate-split weights: [4, D_in, D_out], gate order i, f, g, o.
    wih1 = uni(keys[0], (4, D, D))
    whh1 = uni(keys[1], (4, D, D))
    b1 = uni(keys[2], (4, 1, D)) + uni(keys[3], (4, 1, D))   # b_ih + b_hh
    wih2 = uni(keys[4], (4, D, D))
    whh2 = uni(keys[5], (4, D, D))
    b2 = uni(keys[6], (4, 1, D)) + uni(keys[7], (4, 1, D))
    wfc = jax.random.uniform(keys[8], (D, 1), jnp.float32, -k, k)
    bfc = jax.random.uniform(keys[9], (1, 1), jnp.float32, -k, k)
    return (wih1, whh1, b1, wih2, whh2, b2, wfc, bfc)


# ------------------------------------------------------- pure-JAX reference --
def ref_forward(rnn_inputs, cnn_inputs, raw_inputs, params):
    wih1, whh1, b1, wih2, whh2, b2, wfc, bfc = params
    x = jnp.concatenate([rnn_inputs, cnn_inputs, raw_inputs], axis=2)
    B, T, D = x.shape

    def run_layer(x_seq, wih, whh, b):
        def step(carry, xt):
            h, c = carry

            def gate(k):
                return xt @ wih[k] + h @ whh[k] + b[k, 0]

            i = jax.nn.sigmoid(gate(0))
            f = jax.nn.sigmoid(gate(1))
            g = jnp.tanh(gate(2))
            o = jax.nn.sigmoid(gate(3))
            c = f * c + i * g
            h = o * jnp.tanh(c)
            return (h, c), h

        h0 = jnp.zeros((B, D), jnp.float32)
        c0 = jnp.zeros((B, D), jnp.float32)
        _, hs = jax.lax.scan(step, (h0, c0), jnp.transpose(x_seq, (1, 0, 2)))
        return jnp.transpose(hs, (1, 0, 2))

    out1 = run_layer(x, wih1, whh1, b1)
    out2 = run_layer(out1, wih2, whh2, b2)
    y = out2[:, -1, :] @ wfc + bfc
    return rnn_inputs, y[:, 0]


# --------------------------------------------------------------------- main --
if __name__ == "__main__":
    # Small shapes consistent with the module: input_size=4, hid_size=16,
    # seq (input_day) = 8, batch = 2  =>  D = 2*16 + 4 = 36.
    B, T = 2, 8
    input_size, hid_size = 4, 16

    key = jax.random.PRNGKey(0)
    k_rnn, k_cnn, k_raw, k_par = jax.random.split(key, 4)
    rnn_inputs = jax.random.normal(k_rnn, (B, T, hid_size), jnp.float32)
    cnn_inputs = jax.random.normal(k_cnn, (B, T, hid_size), jnp.float32)
    raw_inputs = jax.random.normal(k_raw, (B, T, input_size), jnp.float32)
    params = init_params(k_par, input_size, hid_size)

    fwd = jax.jit(day_model3_forward)
    fc_hid, y = fwd(rnn_inputs, cnn_inputs, raw_inputs, params)
    jax.block_until_ready(y)

    fc_hid_ref, y_ref = ref_forward(rnn_inputs, cnn_inputs, raw_inputs, params)
    assert fc_hid.shape == rnn_inputs.shape
    assert y.shape == (B,)
    assert jnp.allclose(y, y_ref, atol=1e-3, rtol=1e-3), (y, y_ref)

    print("KERNEL_OK")
</pallas_src>

<mosaic_0001>
module attributes {stable_mosaic.version = 11 : i64} {
  func.func @kernel(%arg0: memref<64x128xf32, #tpu.memory_space<vmem>>, %arg1: memref<128x512xf32, #tpu.memory_space<vmem>>, %arg2: memref<128x512xf32, #tpu.memory_space<vmem>>, %arg3: memref<1x512xf32, #tpu.memory_space<vmem>>, %arg4: memref<128x512xf32, #tpu.memory_space<vmem>>, %arg5: memref<128x512xf32, #tpu.memory_space<vmem>>, %arg6: memref<1x512xf32, #tpu.memory_space<vmem>>, %arg7: memref<1x128xf32, #tpu.memory_space<vmem>>, %arg8: memref<1x1xf32, #tpu.memory_space<vmem>>, %arg9: memref<8x128xf32, #tpu.memory_space<vmem>>, %arg10: memref<64x512xf32, #tpu.memory_space<vmem>>, %arg11: memref<64x128xf32, #tpu.memory_space<vmem>>) attributes {dimension_semantics = [], scalar_prefetch = 0 : i64, scratch_operands = 2 : i64, tpu.core_type = #tpu.core_type<tc>} {
    %c0 = arith.constant 0 : index
    %c0_0 = arith.constant 0 : index
    %0 = vector.load %arg0[%c0, %c0_0] : memref<64x128xf32, #tpu.memory_space<vmem>>, vector<64x128xf32>
    %c0_1 = arith.constant 0 : index
    %c0_2 = arith.constant 0 : index
    %1 = vector.load %arg1[%c0_1, %c0_2] : memref<128x512xf32, #tpu.memory_space<vmem>>, vector<128x512xf32>
    %cst = arith.constant dense<0.000000e+00> : vector<64x512xf32>
    %2 = tpu.matmul %0, %1, %cst {dimension_numbers = #tpu.dot_dimension_numbers<[1], [0], [0], [1], [0, 0, 1, 1], [], []>} : vector<64x128xf32>, vector<128x512xf32>, vector<64x512xf32> -> vector<64x512xf32>
    %c0_3 = arith.constant 0 : index
    %c0_4 = arith.constant 0 : index
    %3 = vector.load %arg3[%c0_3, %c0_4] : memref<1x512xf32, #tpu.memory_space<vmem>>, vector<1x512xf32>
    %4 = vector.broadcast %3 : vector<1x512xf32> to vector<64x512xf32>
    %5 = arith.addf %2, %4 : vector<64x512xf32>
    %c0_5 = arith.constant 0 : index
    %c0_6 = arith.constant 0 : index
    %6 = vector.load %arg10[%c0_5, %c0_6] : memref<64x512xf32, #tpu.memory_space<vmem>>, vector<64x512xf32>
    tpu.vector_store %arg10[%c0_5, %c0_6], %5 {strides = array<i32>} : memref<64x512xf32, #tpu.memory_space<vmem>>, vector<64x512xf32>,
    %cst_7 = arith.constant 0.000000e+00 : f32
    %7 = vector.broadcast %cst_7 : f32 to vector<8x128xf32>
    %cst_8 = arith.constant 0.000000e+00 : f32
    %8 = vector.broadcast %cst_8 : f32 to vector<8x128xf32>
    %c0_i32 = arith.constant 0 : i32
    %c8_i32 = arith.constant 8 : i32
    %9 = arith.muli %c0_i32, %c8_i32 : i32
    %10 = tpu.assume_multiple %9, 8 : i32
    %11 = arith.index_cast %10 : i32 to index
    %c0_9 = arith.constant 0 : index
    %12 = vector.load %arg10[%11, %c0_9] : memref<64x512xf32, #tpu.memory_space<vmem>>, vector<8x512xf32>
    %c0_10 = arith.constant 0 : index
    %c0_11 = arith.constant 0 : index
    %13 = vector.load %arg2[%c0_10, %c0_11] : memref<128x512xf32, #tpu.memory_space<vmem>>, vector<128x512xf32>
    %cst_12 = arith.constant dense<0.000000e+00> : vector<8x512xf32>
    %14 = tpu.matmul %7, %13, %cst_12 {dimension_numbers = #tpu.dot_dimension_numbers<[1], [0], [0], [1], [0, 0, 1, 1], [], []>} : vector<8x128xf32>, vector<128x512xf32>, vector<8x512xf32> -> vector<8x512xf32>
    %15 = arith.addf %12, %14 : vector<8x512xf32>
    %16 = vector.extract_strided_slice %15 {offsets = [0, 0], sizes = [8, 128], strides = [1, 1]} : vector<8x512xf32> to vector<8x128xf32>
    %17 = arith.negf %16 : vector<8x128xf32>
    %18 = math.exp %17 : vector<8x128xf32>
    %cst_13 = arith.constant 1.000000e+00 : f32
    %19 = vector.broadcast %cst_13 : f32 to vector<8x128xf32>
    %20 = arith.addf %19, %18 : vector<8x128xf32>
    %21 = arith.divf %19, %20 : vector<8x128xf32>
    %22 = vector.extract_strided_slice %15 {offsets = [0, 128], sizes = [8, 128], strides = [1, 1]} : vector<8x512xf32> to vector<8x128xf32>
    %23 = arith.negf %22 : vector<8x128xf32>
    %24 = math.exp %23 : vector<8x128xf32>
    %cst_14 = arith.constant 1.000000e+00 : f32
    %25 = vector.broadcast %cst_14 : f32 to vector<8x128xf32>
    %26 = arith.addf %25, %24 : vector<8x128xf32>
    %27 = arith.divf %25, %26 : vector<8x128xf32>
    %28 = vector.extract_strided_slice %15 {offsets = [0, 256], sizes = [8, 128], strides = [1, 1]} : vector<8x512xf32> to vector<8x128xf32>
    %29 = math.tanh %28 : vector<8x128xf32>
    %30 = vector.extract_strided_slice %15 {offsets = [0, 384], sizes = [8, 128], strides = [1, 1]} : vector<8x512xf32> to vector<8x128xf32>
    %31 = arith.negf %30 : vector<8x128xf32>
    %32 = math.exp %31 : vector<8x128xf32>
    %cst_15 = arith.constant 1.000000e+00 : f32
    %33 = vector.broadcast %cst_15 : f32 to vector<8x128xf32>
    %34 = arith.addf %33, %32 : vector<8x128xf32>
    %35 = arith.divf %33, %34 : vector<8x128xf32>
    %36 = arith.mulf %27, %8 : vector<8x128xf32>
    %37 = arith.mulf %21, %29 : vector<8x128xf32>
    %38 = arith.addf %36, %37 : vector<8x128xf32>
    %39 = math.tanh %38 : vector<8x128xf32>
    %40 = arith.mulf %35, %39 : vector<8x128xf32>
    %41 = arith.index_cast %10 : i32 to index
    %c0_16 = arith.constant 0 : index
    %42 = vector.load %arg11[%41, %c0_16] : memref<64x128xf32, #tpu.memory_space<vmem>>, vector<8x128xf32>
    tpu.vector_store %arg11[%41, %c0_16], %40 {strides = array<i32>} : memref<64x128xf32, #tpu.memory_space<vmem>>, vector<8x128xf32>,
    %c1_i32 = arith.constant 1 : i32
    %c8_i32_17 = arith.constant 8 : i32
    %43 = arith.muli %c1_i32, %c8_i32_17 : i32
    %44 = tpu.assume_multiple %43, 8 : i32
    %45 = arith.index_cast %44 : i32 to index
    %c0_18 = arith.constant 0 : index
    %46 = vector.load %arg10[%45, %c0_18] : memref<64x512xf32, #tpu.memory_space<vmem>>, vector<8x512xf32>
    %c0_19 = arith.constant 0 : index
    %c0_20 = arith.constant 0 : index
    %47 = vector.load %arg2[%c0_19, %c0_20] : memref<128x512xf32, #tpu.memory_space<vmem>>, vector<128x512xf32>
    %cst_21 = arith.constant dense<0.000000e+00> : vector<8x512xf32>
    %48 = tpu.matmul %40, %47, %cst_21 {dimension_numbers = #tpu.dot_dimension_numbers<[1], [0], [0], [1], [0, 0, 1, 1], [], []>} : vector<8x128xf32>, vector<128x512xf32>, vector<8x512xf32> -> vector<8x512xf32>
    %49 = arith.addf %46, %48 : vector<8x512xf32>
    %50 = vector.extract_strided_slice %49 {offsets = [0, 0], sizes = [8, 128], strides = [1, 1]} : vector<8x512xf32> to vector<8x128xf32>
    %51 = arith.negf %50 : vector<8x128xf32>
    %52 = math.exp %51 : vector<8x128xf32>
    %cst_22 = arith.constant 1.000000e+00 : f32
    %53 = vector.broadcast %cst_22 : f32 to vector<8x128xf32>
    %54 = arith.addf %53, %52 : vector<8x128xf32>
    %55 = arith.divf %53, %54 : vector<8x128xf32>
    %56 = vector.extract_strided_slice %49 {offsets = [0, 128], sizes = [8, 128], strides = [1, 1]} : vector<8x512xf32> to vector<8x128xf32>
    %57 = arith.negf %56 : vector<8x128xf32>
    %58 = math.exp %57 : vector<8x128xf32>
    %cst_23 = arith.constant 1.000000e+00 : f32
    %59 = vector.broadcast %cst_23 : f32 to vector<8x128xf32>
    %60 = arith.addf %59, %58 : vector<8x128xf32>
    %61 = arith.divf %59, %60 : vector<8x128xf32>
    %62 = vector.extract_strided_slice %49 {offsets = [0, 256], sizes = [8, 128], strides = [1, 1]} : vector<8x512xf32> to vector<8x128xf32>
    %63 = math.tanh %62 : vector<8x128xf32>
    %64 = vector.extract_strided_slice %49 {offsets = [0, 384], sizes = [8, 128], strides = [1, 1]} : vector<8x512xf32> to vector<8x128xf32>
    %65 = arith.negf %64 : vector<8x128xf32>
    %66 = math.exp %65 : vector<8x128xf32>
    %cst_24 = arith.constant 1.000000e+00 : f32
    %67 = vector.broadcast %cst_24 : f32 to vector<8x128xf32>
    %68 = arith.addf %67, %66 : vector<8x128xf32>
    %69 = arith.divf %67, %68 : vector<8x128xf32>
    %70 = arith.mulf %61, %38 : vector<8x128xf32>
    %71 = arith.mulf %55, %63 : vector<8x128xf32>
    %72 = arith.addf %70, %71 : vector<8x128xf32>
    %73 = math.tanh %72 : vector<8x128xf32>
    %74 = arith.mulf %69, %73 : vector<8x128xf32>
    %75 = arith.index_cast %44 : i32 to index
    %c0_25 = arith.constant 0 : index
    %76 = vector.load %arg11[%75, %c0_25] : memref<64x128xf32, #tpu.memory_space<vmem>>, vector<8x128xf32>
    tpu.vector_store %arg11[%75, %c0_25], %74 {strides = array<i32>} : memref<64x128xf32, #tpu.memory_space<vmem>>, vector<8x128xf32>,
    %c2_i32 = arith.constant 2 : i32
    %c8_i32_26 = arith.constant 8 : i32
    %77 = arith.muli %c2_i32, %c8_i32_26 : i32
    %78 = tpu.assume_multiple %77, 8 : i32
    %79 = arith.index_cast %78 : i32 to index
    %c0_27 = arith.constant 0 : index
    %80 = vector.load %arg10[%79, %c0_27] : memref<64x512xf32, #tpu.memory_space<vmem>>, vector<8x512xf32>
    %c0_28 = arith.constant 0 : index
    %c0_29 = arith.constant 0 : index
    %81 = vector.load %arg2[%c0_28, %c0_29] : memref<128x512xf32, #tpu.memory_space<vmem>>, vector<128x512xf32>
    %cst_30 = arith.constant dense<0.000000e+00> : vector<8x512xf32>
    %82 = tpu.matmul %74, %81, %cst_30 {dimension_numbers = #tpu.dot_dimension_numbers<[1], [0], [0], [1], [0, 0, 1, 1], [], []>} : vector<8x128xf32>, vector<128x512xf32>, vector<8x512xf32> -> vector<8x512xf32>
    %83 = arith.addf %80, %82 : vector<8x512xf32>
    %84 = vector.extract_strided_slice %83 {offsets = [0, 0], sizes = [8, 128], strides = [1, 1]} : vector<8x512xf32> to vector<8x128xf32>
    %85 = arith.negf %84 : vector<8x128xf32>
    %86 = math.exp %85 : vector<8x128xf32>
    %cst_31 = arith.constant 1.000000e+00 : f32
    %87 = vector.broadcast %cst_31 : f32 to vector<8x128xf32>
    %88 = arith.addf %87, %86 : vector<8x128xf32>
    %89 = arith.divf %87, %88 : vector<8x128xf32>
    %90 = vector.extract_strided_slice %83 {offsets = [0, 128], sizes = [8, 128], strides = [1, 1]} : vector<8x512xf32> to vector<8x128xf32>
    %91 = arith.negf %90 : vector<8x128xf32>
    %92 = math.exp %91 : vector<8x128xf32>
    %cst_32 = arith.constant 1.000000e+00 : f32
    %93 = vector.broadcast %cst_32 : f32 to vector<8x128xf32>
    %94 = arith.addf %93, %92 : vector<8x128xf32>
    %95 = arith.divf %93, %94 : vector<8x128xf32>
    %96 = vector.extract_strided_slice %83 {offsets = [0, 256], sizes = [8, 128], strides = [1, 1]} : vector<8x512xf32> to vector<8x128xf32>
    %97 = math.tanh %96 : vector<8x128xf32>
    %98 = vector.extract_strided_slice %83 {offsets = [0, 384], sizes = [8, 128], strides = [1, 1]} : vector<8x512xf32> to vector<8x128xf32>
    %99 = arith.negf %98 : vector<8x128xf32>
    %100 = math.exp %99 : vector<8x128xf32>
    %cst_33 = arith.constant 1.000000e+00 : f32
    %101 = vector.broadcast %cst_33 : f32 to vector<8x128xf32>
    %102 = arith.addf %101, %100 : vector<8x128xf32>
    %103 = arith.divf %101, %102 : vector<8x128xf32>
    %104 = arith.mulf %95, %72 : vector<8x128xf32>
    %105 = arith.mulf %89, %97 : vector<8x128xf32>
    %106 = arith.addf %104, %105 : vector<8x128xf32>
    %107 = math.tanh %106 : vector<8x128xf32>
    %108 = arith.mulf %103, %107 : vector<8x128xf32>
    %109 = arith.index_cast %78 : i32 to index
    %c0_34 = arith.constant 0 : index
    %110 = vector.load %arg11[%109, %c0_34] : memref<64x128xf32, #tpu.memory_space<vmem>>, vector<8x128xf32>
    tpu.vector_store %arg11[%109, %c0_34], %108 {strides = array<i32>} : memref<64x128xf32, #tpu.memory_space<vmem>>, vector<8x128xf32>,
    %c3_i32 = arith.constant 3 : i32
    %c8_i32_35 = arith.constant 8 : i32
    %111 = arith.muli %c3_i32, %c8_i32_35 : i32
    %112 = tpu.assume_multiple %111, 8 : i32
    %113 = arith.index_cast %112 : i32 to index
    %c0_36 = arith.constant 0 : index
    %114 = vector.load %arg10[%113, %c0_36] : memref<64x512xf32, #tpu.memory_space<vmem>>, vector<8x512xf32>
    %c0_37 = arith.constant 0 : index
    %c0_38 = arith.constant 0 : index
    %115 = vector.load %arg2[%c0_37, %c0_38] : memref<128x512xf32, #tpu.memory_space<vmem>>, vector<128x512xf32>
    %cst_39 = arith.constant dense<0.000000e+00> : vector<8x512xf32>
    %116 = tpu.matmul %108, %115, %cst_39 {dimension_numbers = #tpu.dot_dimension_numbers<[1], [0], [0], [1], [0, 0, 1, 1], [], []>} : vector<8x128xf32>, vector<128x512xf32>, vector<8x512xf32> -> vector<8x512xf32>
    %117 = arith.addf %114, %116 : vector<8x512xf32>
    %118 = vector.extract_strided_slice %117 {offsets = [0, 0], sizes = [8, 128], strides = [1, 1]} : vector<8x512xf32> to vector<8x128xf32>
    %119 = arith.negf %118 : vector<8x128xf32>
    %120 = math.exp %119 : vector<8x128xf32>
    %cst_40 = arith.constant 1.000000e+00 : f32
    %121 = vector.broadcast %cst_40 : f32 to vector<8x128xf32>
    %122 = arith.addf %121, %120 : vector<8x128xf32>
    %123 = arith.divf %121, %122 : vector<8x128xf32>
    %124 = vector.extract_strided_slice %117 {offsets = [0, 128], sizes = [8, 128], strides = [1, 1]} : vector<8x512xf32> to vector<8x128xf32>
    %125 = arith.negf %124 : vector<8x128xf32>
    %126 = math.exp %125 : vector<8x128xf32>
    %cst_41 = arith.constant 1.000000e+00 : f32
    %127 = vector.broadcast %cst_41 : f32 to vector<8x128xf32>
    %128 = arith.addf %127, %126 : vector<8x128xf32>
    %129 = arith.divf %127, %128 : vector<8x128xf32>
    %130 = vector.extract_strided_slice %117 {offsets = [0, 256], sizes = [8, 128], strides = [1, 1]} : vector<8x512xf32> to vector<8x128xf32>
    %131 = math.tanh %130 : vector<8x128xf32>
    %132 = vector.extract_strided_slice %117 {offsets = [0, 384], sizes = [8, 128], strides = [1, 1]} : vector<8x512xf32> to vector<8x128xf32>
    %133 = arith.negf %132 : vector<8x128xf32>
    %134 = math.exp %133 : vector<8x128xf32>
    %cst_42 = arith.constant 1.000000e+00 : f32
    %135 = vector.broadcast %cst_42 : f32 to vector<8x128xf32>
    %136 = arith.addf %135, %134 : vector<8x128xf32>
    %137 = arith.divf %135, %136 : vector<8x128xf32>
    %138 = arith.mulf %129, %106 : vector<8x128xf32>
    %139 = arith.mulf %123, %131 : vector<8x128xf32>
    %140 = arith.addf %138, %139 : vector<8x128xf32>
    %141 = math.tanh %140 : vector<8x128xf32>
    %142 = arith.mulf %137, %141 : vector<8x128xf32>
    %143 = arith.index_cast %112 : i32 to index
    %c0_43 = arith.constant 0 : index
    %144 = vector.load %arg11[%143, %c0_43] : memref<64x128xf32, #tpu.memory_space<vmem>>, vector<8x128xf32>
    tpu.vector_store %arg11[%143, %c0_43], %142 {strides = array<i32>} : memref<64x128xf32, #tpu.memory_space<vmem>>, vector<8x128xf32>,
    %c4_i32 = arith.constant 4 : i32
    %c8_i32_44 = arith.constant 8 : i32
    %145 = arith.muli %c4_i32, %c8_i32_44 : i32
    %146 = tpu.assume_multiple %145, 8 : i32
    %147 = arith.index_cast %146 : i32 to index
    %c0_45 = arith.constant 0 : index
    %148 = vector.load %arg10[%147, %c0_45] : memref<64x512xf32, #tpu.memory_space<vmem>>, vector<8x512xf32>
    %c0_46 = arith.constant 0 : index
    %c0_47 = arith.constant 0 : index
    %149 = vector.load %arg2[%c0_46, %c0_47] : memref<128x512xf32, #tpu.memory_space<vmem>>, vector<128x512xf32>
    %cst_48 = arith.constant dense<0.000000e+00> : vector<8x512xf32>
    %150 = tpu.matmul %142, %149, %cst_48 {dimension_numbers = #tpu.dot_dimension_numbers<[1], [0], [0], [1], [0, 0, 1, 1], [], []>} : vector<8x128xf32>, vector<128x512xf32>, vector<8x512xf32> -> vector<8x512xf32>
    %151 = arith.addf %148, %150 : vector<8x512xf32>
    %152 = vector.extract_strided_slice %151 {offsets = [0, 0], sizes = [8, 128], strides = [1, 1]} : vector<8x512xf32> to vector<8x128xf32>
    %153 = arith.negf %152 : vector<8x128xf32>
    %154 = math.exp %153 : vector<8x128xf32>
    %cst_49 = arith.constant 1.000000e+00 : f32
    %155 = vector.broadcast %cst_49 : f32 to vector<8x128xf32>
    %156 = arith.addf %155, %154 : vector<8x128xf32>
    %157 = arith.divf %155, %156 : vector<8x128xf32>
    %158 = vector.extract_strided_slice %151 {offsets = [0, 128], sizes = [8, 128], strides = [1, 1]} : vector<8x512xf32> to vector<8x128xf32>
    %159 = arith.negf %158 : vector<8x128xf32>
    %160 = math.exp %159 : vector<8x128xf32>
    %cst_50 = arith.constant 1.000000e+00 : f32
    %161 = vector.broadcast %cst_50 : f32 to vector<8x128xf32>
    %162 = arith.addf %161, %160 : vector<8x128xf32>
    %163 = arith.divf %161, %162 : vector<8x128xf32>
    %164 = vector.extract_strided_slice %151 {offsets = [0, 256], sizes = [8, 128], strides = [1, 1]} : vector<8x512xf32> to vector<8x128xf32>
    %165 = math.tanh %164 : vector<8x128xf32>
    %166 = vector.extract_strided_slice %151 {offsets = [0, 384], sizes = [8, 128], strides = [1, 1]} : vector<8x512xf32> to vector<8x128xf32>
    %167 = arith.negf %166 : vector<8x128xf32>
    %168 = math.exp %167 : vector<8x128xf32>
    %cst_51 = arith.constant 1.000000e+00 : f32
    %169 = vector.broadcast %cst_51 : f32 to vector<8x128xf32>
    %170 = arith.addf %169, %168 : vector<8x128xf32>
    %171 = arith.divf %169, %170 : vector<8x128xf32>
    %172 = arith.mulf %163, %140 : vector<8x128xf32>
    %173 = arith.mulf %157, %165 : vector<8x128xf32>
    %174 = arith.addf %172, %173 : vector<8x128xf32>
    %175 = math.tanh %174 : vector<8x128xf32>
    %176 = arith.mulf %171, %175 : vector<8x128xf32>
    %177 = arith.index_cast %146 : i32 to index
    %c0_52 = arith.constant 0 : index
    %178 = vector.load %arg11[%177, %c0_52] : memref<64x128xf32, #tpu.memory_space<vmem>>, vector<8x128xf32>
    tpu.vector_store %arg11[%177, %c0_52], %176 {strides = array<i32>} : memref<64x128xf32, #tpu.memory_space<vmem>>, vector<8x128xf32>,
    %c5_i32 = arith.constant 5 : i32
    %c8_i32_53 = arith.constant 8 : i32
    %179 = arith.muli %c5_i32, %c8_i32_53 : i32
    %180 = tpu.assume_multiple %179, 8 : i32
    %181 = arith.index_cast %180 : i32 to index
    %c0_54 = arith.constant 0 : index
    %182 = vector.load %arg10[%181, %c0_54] : memref<64x512xf32, #tpu.memory_space<vmem>>, vector<8x512xf32>
    %c0_55 = arith.constant 0 : index
    %c0_56 = arith.constant 0 : index
    %183 = vector.load %arg2[%c0_55, %c0_56] : memref<128x512xf32, #tpu.memory_space<vmem>>, vector<128x512xf32>
    %cst_57 = arith.constant dense<0.000000e+00> : vector<8x512xf32>
    %184 = tpu.matmul %176, %183, %cst_57 {dimension_numbers = #tpu.dot_dimension_numbers<[1], [0], [0], [1], [0, 0, 1, 1], [], []>} : vector<8x128xf32>, vector<128x512xf32>, vector<8x512xf32> -> vector<8x512xf32>
    %185 = arith.addf %182, %184 : vector<8x512xf32>
    %186 = vector.extract_strided_slice %185 {offsets = [0, 0], sizes = [8, 128], strides = [1, 1]} : vector<8x512xf32> to vector<8x128xf32>
    %187 = arith.negf %186 : vector<8x128xf32>
    %188 = math.exp %187 : vector<8x128xf32>
    %cst_58 = arith.constant 1.000000e+00 : f32
    %189 = vector.broadcast %cst_58 : f32 to vector<8x128xf32>
    %190 = arith.addf %189, %188 : vector<8x128xf32>
    %191 = arith.divf %189, %190 : vector<8x128xf32>
    %192 = vector.extract_strided_slice %185 {offsets = [0, 128], sizes = [8, 128], strides = [1, 1]} : vector<8x512xf32> to vector<8x128xf32>
    %193 = arith.negf %192 : vector<8x128xf32>
    %194 = math.exp %193 : vector<8x128xf32>
    %cst_59 = arith.constant 1.000000e+00 : f32
    %195 = vector.broadcast %cst_59 : f32 to vector<8x128xf32>
    %196 = arith.addf %195, %194 : vector<8x128xf32>
    %197 = arith.divf %195, %196 : vector<8x128xf32>
    %198 = vector.extract_strided_slice %185 {offsets = [0, 256], sizes = [8, 128], strides = [1, 1]} : vector<8x512xf32> to vector<8x128xf32>
    %199 = math.tanh %198 : vector<8x128xf32>
    %200 = vector.extract_strided_slice %185 {offsets = [0, 384], sizes = [8, 128], strides = [1, 1]} : vector<8x512xf32> to vector<8x128xf32>
    %201 = arith.negf %200 : vector<8x128xf32>
    %202 = math.exp %201 : vector<8x128xf32>
    %cst_60 = arith.constant 1.000000e+00 : f32
    %203 = vector.broadcast %cst_60 : f32 to vector<8x128xf32>
    %204 = arith.addf %203, %202 : vector<8x128xf32>
    %205 = arith.divf %203, %204 : vector<8x128xf32>
    %206 = arith.mulf %197, %174 : vector<8x128xf32>
    %207 = arith.mulf %191, %199 : vector<8x128xf32>
    %208 = arith.addf %206, %207 : vector<8x128xf32>
    %209 = math.tanh %208 : vector<8x128xf32>
    %210 = arith.mulf %205, %209 : vector<8x128xf32>
    %211 = arith.index_cast %180 : i32 to index
    %c0_61 = arith.constant 0 : index
    %212 = vector.load %arg11[%211, %c0_61] : memref<64x128xf32, #tpu.memory_space<vmem>>, vector<8x128xf32>
    tpu.vector_store %arg11[%211, %c0_61], %210 {strides = array<i32>} : memref<64x128xf32, #tpu.memory_space<vmem>>, vector<8x128xf32>,
    %c6_i32 = arith.constant 6 : i32
    %c8_i32_62 = arith.constant 8 : i32
    %213 = arith.muli %c6_i32, %c8_i32_62 : i32
    %214 = tpu.assume_multiple %213, 8 : i32
    %215 = arith.index_cast %214 : i32 to index
    %c0_63 = arith.constant 0 : index
    %216 = vector.load %arg10[%215, %c0_63] : memref<64x512xf32, #tpu.memory_space<vmem>>, vector<8x512xf32>
    %c0_64 = arith.constant 0 : index
    %c0_65 = arith.constant 0 : index
    %217 = vector.load %arg2[%c0_64, %c0_65] : memref<128x512xf32, #tpu.memory_space<vmem>>, vector<128x512xf32>
    %cst_66 = arith.constant dense<0.000000e+00> : vector<8x512xf32>
    %218 = tpu.matmul %210, %217, %cst_66 {dimension_numbers = #tpu.dot_dimension_numbers<[1], [0], [0], [1], [0, 0, 1, 1], [], []>} : vector<8x128xf32>, vector<128x512xf32>, vector<8x512xf32> -> vector<8x512xf32>
    %219 = arith.addf %216, %218 : vector<8x512xf32>
    %220 = vector.extract_strided_slice %219 {offsets = [0, 0], sizes = [8, 128], strides = [1, 1]} : vector<8x512xf32> to vector<8x128xf32>
    %221 = arith.negf %220 : vector<8x128xf32>
    %222 = math.exp %221 : vector<8x128xf32>
    %cst_67 = arith.constant 1.000000e+00 : f32
    %223 = vector.broadcast %cst_67 : f32 to vector<8x128xf32>
    %224 = arith.addf %223, %222 : vector<8x128xf32>
    %225 = arith.divf %223, %224 : vector<8x128xf32>
    %226 = vector.extract_strided_slice %219 {offsets = [0, 128], sizes = [8, 128], strides = [1, 1]} : vector<8x512xf32> to vector<8x128xf32>
    %227 = arith.negf %226 : vector<8x128xf32>
    %228 = math.exp %227 : vector<8x128xf32>
    %cst_68 = arith.constant 1.000000e+00 : f32
    %229 = vector.broadcast %cst_68 : f32 to vector<8x128xf32>
    %230 = arith.addf %229, %228 : vector<8x128xf32>
    %231 = arith.divf %229, %230 : vector<8x128xf32>
    %232 = vector.extract_strided_slice %219 {offsets = [0, 256], sizes = [8, 128], strides = [1, 1]} : vector<8x512xf32> to vector<8x128xf32>
    %233 = math.tanh %232 : vector<8x128xf32>
    %234 = vector.extract_strided_slice %219 {offsets = [0, 384], sizes = [8, 128], strides = [1, 1]} : vector<8x512xf32> to vector<8x128xf32>
    %235 = arith.negf %234 : vector<8x128xf32>
    %236 = math.exp %235 : vector<8x128xf32>
    %cst_69 = arith.constant 1.000000e+00 : f32
    %237 = vector.broadcast %cst_69 : f32 to vector<8x128xf32>
    %238 = arith.addf %237, %236 : vector<8x128xf32>
    %239 = arith.divf %237, %238 : vector<8x128xf32>
    %240 = arith.mulf %231, %208 : vector<8x128xf32>
    %241 = arith.mulf %225, %233 : vector<8x128xf32>
    %242 = arith.addf %240, %241 : vector<8x128xf32>
    %243 = math.tanh %242 : vector<8x128xf32>
    %244 = arith.mulf %239, %243 : vector<8x128xf32>
    %245 = arith.index_cast %214 : i32 to index
    %c0_70 = arith.constant 0 : index
    %246 = vector.load %arg11[%245, %c0_70] : memref<64x128xf32, #tpu.memory_space<vmem>>, vector<8x128xf32>
    tpu.vector_store %arg11[%245, %c0_70], %244 {strides = array<i32>} : memref<64x128xf32, #tpu.memory_space<vmem>>, vector<8x128xf32>,
    %c7_i32 = arith.constant 7 : i32
    %c8_i32_71 = arith.constant 8 : i32
    %247 = arith.muli %c7_i32, %c8_i32_71 : i32
    %248 = tpu.assume_multiple %247, 8 : i32
    %249 = arith.index_cast %248 : i32 to index
    %c0_72 = arith.constant 0 : index
    %250 = vector.load %arg10[%249, %c0_72] : memref<64x512xf32, #tpu.memory_space<vmem>>, vector<8x512xf32>
    %c0_73 = arith.constant 0 : index
    %c0_74 = arith.constant 0 : index
    %251 = vector.load %arg2[%c0_73, %c0_74] : memref<128x512xf32, #tpu.memory_space<vmem>>, vector<128x512xf32>
    %cst_75 = arith.constant dense<0.000000e+00> : vector<8x512xf32>
    %252 = tpu.matmul %244, %251, %cst_75 {dimension_numbers = #tpu.dot_dimension_numbers<[1], [0], [0], [1], [0, 0, 1, 1], [], []>} : vector<8x128xf32>, vector<128x512xf32>, vector<8x512xf32> -> vector<8x512xf32>
    %253 = arith.addf %250, %252 : vector<8x512xf32>
    %254 = vector.extract_strided_slice %253 {offsets = [0, 0], sizes = [8, 128], strides = [1, 1]} : vector<8x512xf32> to vector<8x128xf32>
    %255 = arith.negf %254 : vector<8x128xf32>
    %256 = math.exp %255 : vector<8x128xf32>
    %cst_76 = arith.constant 1.000000e+00 : f32
    %257 = vector.broadcast %cst_76 : f32 to vector<8x128xf32>
    %258 = arith.addf %257, %256 : vector<8x128xf32>
    %259 = arith.divf %257, %258 : vector<8x128xf32>
    %260 = vector.extract_strided_slice %253 {offsets = [0, 128], sizes = [8, 128], strides = [1, 1]} : vector<8x512xf32> to vector<8x128xf32>
    %261 = arith.negf %260 : vector<8x128xf32>
    %262 = math.exp %261 : vector<8x128xf32>
    %cst_77 = arith.constant 1.000000e+00 : f32
    %263 = vector.broadcast %cst_77 : f32 to vector<8x128xf32>
    %264 = arith.addf %263, %262 : vector<8x128xf32>
    %265 = arith.divf %263, %264 : vector<8x128xf32>
    %266 = vector.extract_strided_slice %253 {offsets = [0, 256], sizes = [8, 128], strides = [1, 1]} : vector<8x512xf32> to vector<8x128xf32>
    %267 = math.tanh %266 : vector<8x128xf32>
    %268 = vector.extract_strided_slice %253 {offsets = [0, 384], sizes = [8, 128], strides = [1, 1]} : vector<8x512xf32> to vector<8x128xf32>
    %269 = arith.negf %268 : vector<8x128xf32>
    %270 = math.exp %269 : vector<8x128xf32>
    %cst_78 = arith.constant 1.000000e+00 : f32
    %271 = vector.broadcast %cst_78 : f32 to vector<8x128xf32>
    %272 = arith.addf %271, %270 : vector<8x128xf32>
    %273 = arith.divf %271, %272 : vector<8x128xf32>
    %274 = arith.mulf %265, %242 : vector<8x128xf32>
    %275 = arith.mulf %259, %267 : vector<8x128xf32>
    %276 = arith.addf %274, %275 : vector<8x128xf32>
    %277 = math.tanh %276 : vector<8x128xf32>
    %278 = arith.mulf %273, %277 : vector<8x128xf32>
    %279 = arith.index_cast %248 : i32 to index
    %c0_79 = arith.constant 0 : index
    %280 = vector.load %arg11[%279, %c0_79] : memref<64x128xf32, #tpu.memory_space<vmem>>, vector<8x128xf32>
    tpu.vector_store %arg11[%279, %c0_79], %278 {strides = array<i32>} : memref<64x128xf32, #tpu.memory_space<vmem>>, vector<8x128xf32>,
    %c8_i32_80 = arith.constant 8 : i32
    %c0_81 = arith.constant 0 : index
    %c0_82 = arith.constant 0 : index
    %281 = vector.load %arg11[%c0_81, %c0_82] : memref<64x128xf32, #tpu.memory_space<vmem>>, vector<64x128xf32>
    %c0_83 = arith.constant 0 : index
    %c0_84 = arith.constant 0 : index
    %282 = vector.load %arg4[%c0_83, %c0_84] : memref<128x512xf32, #tpu.memory_space<vmem>>, vector<128x512xf32>
    %cst_85 = arith.constant dense<0.000000e+00> : vector<64x512xf32>
    %283 = tpu.matmul %281, %282, %cst_85 {dimension_numbers = #tpu.dot_dimension_numbers<[1], [0], [0], [1], [0, 0, 1, 1], [], []>} : vector<64x128xf32>, vector<128x512xf32>, vector<64x512xf32> -> vector<64x512xf32>
    %c0_86 = arith.constant 0 : index
    %c0_87 = arith.constant 0 : index
    %284 = vector.load %arg6[%c0_86, %c0_87] : memref<1x512xf32, #tpu.memory_space<vmem>>, vector<1x512xf32>
    %285 = vector.broadcast %284 : vector<1x512xf32> to vector<64x512xf32>
    %286 = arith.addf %283, %285 : vector<64x512xf32>
    %c0_88 = arith.constant 0 : index
    %c0_89 = arith.constant 0 : index
    %287 = vector.load %arg10[%c0_88, %c0_89] : memref<64x512xf32, #tpu.memory_space<vmem>>, vector<64x512xf32>
    tpu.vector_store %arg10[%c0_88, %c0_89], %286 {strides = array<i32>} : memref<64x512xf32, #tpu.memory_space<vmem>>, vector<64x512xf32>,
    %cst_90 = arith.constant 0.000000e+00 : f32
    %288 = vector.broadcast %cst_90 : f32 to vector<8x128xf32>
    %cst_91 = arith.constant 0.000000e+00 : f32
    %289 = vector.broadcast %cst_91 : f32 to vector<8x128xf32>
    %c0_i32_92 = arith.constant 0 : i32
    %c8_i32_93 = arith.constant 8 : i32
    %290 = arith.muli %c0_i32_92, %c8_i32_93 : i32
    %291 = tpu.assume_multiple %290, 8 : i32
    %292 = arith.index_cast %291 : i32 to index
    %c0_94 = arith.constant 0 : index
    %293 = vector.load %arg10[%292, %c0_94] : memref<64x512xf32, #tpu.memory_space<vmem>>, vector<8x512xf32>
    %c0_95 = arith.constant 0 : index
    %c0_96 = arith.constant 0 : index
    %294 = vector.load %arg5[%c0_95, %c0_96] : memref<128x512xf32, #tpu.memory_space<vmem>>, vector<128x512xf32>
    %cst_97 = arith.constant dense<0.000000e+00> : vector<8x512xf32>
    %295 = tpu.matmul %288, %294, %cst_97 {dimension_numbers = #tpu.dot_dimension_numbers<[1], [0], [0], [1], [0, 0, 1, 1], [], []>} : vector<8x128xf32>, vector<128x512xf32>, vector<8x512xf32> -> vector<8x512xf32>
    %296 = arith.addf %293, %295 : vector<8x512xf32>
    %297 = vector.extract_strided_slice %296 {offsets = [0, 0], sizes = [8, 128], strides = [1, 1]} : vector<8x512xf32> to vector<8x128xf32>
    %298 = arith.negf %297 : vector<8x128xf32>
    %299 = math.exp %298 : vector<8x128xf32>
    %cst_98 = arith.constant 1.000000e+00 : f32
    %300 = vector.broadcast %cst_98 : f32 to vector<8x128xf32>
    %301 = arith.addf %300, %299 : vector<8x128xf32>
    %302 = arith.divf %300, %301 : vector<8x128xf32>
    %303 = vector.extract_strided_slice %296 {offsets = [0, 128], sizes = [8, 128], strides = [1, 1]} : vector<8x512xf32> to vector<8x128xf32>
    %304 = arith.negf %303 : vector<8x128xf32>
    %305 = math.exp %304 : vector<8x128xf32>
    %cst_99 = arith.constant 1.000000e+00 : f32
    %306 = vector.broadcast %cst_99 : f32 to vector<8x128xf32>
    %307 = arith.addf %306, %305 : vector<8x128xf32>
    %308 = arith.divf %306, %307 : vector<8x128xf32>
    %309 = vector.extract_strided_slice %296 {offsets = [0, 256], sizes = [8, 128], strides = [1, 1]} : vector<8x512xf32> to vector<8x128xf32>
    %310 = math.tanh %309 : vector<8x128xf32>
    %311 = vector.extract_strided_slice %296 {offsets = [0, 384], sizes = [8, 128], strides = [1, 1]} : vector<8x512xf32> to vector<8x128xf32>
    %312 = arith.negf %311 : vector<8x128xf32>
    %313 = math.exp %312 : vector<8x128xf32>
    %cst_100 = arith.constant 1.000000e+00 : f32
    %314 = vector.broadcast %cst_100 : f32 to vector<8x128xf32>
    %315 = arith.addf %314, %313 : vector<8x128xf32>
    %316 = arith.divf %314, %315 : vector<8x128xf32>
    %317 = arith.mulf %308, %289 : vector<8x128xf32>
    %318 = arith.mulf %302, %310 : vector<8x128xf32>
    %319 = arith.addf %317, %318 : vector<8x128xf32>
    %320 = math.tanh %319 : vector<8x128xf32>
    %321 = arith.mulf %316, %320 : vector<8x128xf32>
    %c1_i32_101 = arith.constant 1 : i32
    %c8_i32_102 = arith.constant 8 : i32
    %322 = arith.muli %c1_i32_101, %c8_i32_102 : i32
    %323 = tpu.assume_multiple %322, 8 : i32
    %324 = arith.index_cast %323 : i32 to index
    %c0_103 = arith.constant 0 : index
    %325 = vector.load %arg10[%324, %c0_103] : memref<64x512xf32, #tpu.memory_space<vmem>>, vector<8x512xf32>
    %c0_104 = arith.constant 0 : index
    %c0_105 = arith.constant 0 : index
    %326 = vector.load %arg5[%c0_104, %c0_105] : memref<128x512xf32, #tpu.memory_space<vmem>>, vector<128x512xf32>
    %cst_106 = arith.constant dense<0.000000e+00> : vector<8x512xf32>
    %327 = tpu.matmul %321, %326, %cst_106 {dimension_numbers = #tpu.dot_dimension_numbers<[1], [0], [0], [1], [0, 0, 1, 1], [], []>} : vector<8x128xf32>, vector<128x512xf32>, vector<8x512xf32> -> vector<8x512xf32>
    %328 = arith.addf %325, %327 : vector<8x512xf32>
    %329 = vector.extract_strided_slice %328 {offsets = [0, 0], sizes = [8, 128], strides = [1, 1]} : vector<8x512xf32> to vector<8x128xf32>
    %330 = arith.negf %329 : vector<8x128xf32>
    %331 = math.exp %330 : vector<8x128xf32>
    %cst_107 = arith.constant 1.000000e+00 : f32
    %332 = vector.broadcast %cst_107 : f32 to vector<8x128xf32>
    %333 = arith.addf %332, %331 : vector<8x128xf32>
    %334 = arith.divf %332, %333 : vector<8x128xf32>
    %335 = vector.extract_strided_slice %328 {offsets = [0, 128], sizes = [8, 128], strides = [1, 1]} : vector<8x512xf32> to vector<8x128xf32>
    %336 = arith.negf %335 : vector<8x128xf32>
    %337 = math.exp %336 : vector<8x128xf32>
    %cst_108 = arith.constant 1.000000e+00 : f32
    %338 = vector.broadcast %cst_108 : f32 to vector<8x128xf32>
    %339 = arith.addf %338, %337 : vector<8x128xf32>
    %340 = arith.divf %338, %339 : vector<8x128xf32>
    %341 = vector.extract_strided_slice %328 {offsets = [0, 256], sizes = [8, 128], strides = [1, 1]} : vector<8x512xf32> to vector<8x128xf32>
    %342 = math.tanh %341 : vector<8x128xf32>
    %343 = vector.extract_strided_slice %328 {offsets = [0, 384], sizes = [8, 128], strides = [1, 1]} : vector<8x512xf32> to vector<8x128xf32>
    %344 = arith.negf %343 : vector<8x128xf32>
    %345 = math.exp %344 : vector<8x128xf32>
    %cst_109 = arith.constant 1.000000e+00 : f32
    %346 = vector.broadcast %cst_109 : f32 to vector<8x128xf32>
    %347 = arith.addf %346, %345 : vector<8x128xf32>
    %348 = arith.divf %346, %347 : vector<8x128xf32>
    %349 = arith.mulf %340, %319 : vector<8x128xf32>
    %350 = arith.mulf %334, %342 : vector<8x128xf32>
    %351 = arith.addf %349, %350 : vector<8x128xf32>
    %352 = math.tanh %351 : vector<8x128xf32>
    %353 = arith.mulf %348, %352 : vector<8x128xf32>
    %c2_i32_110 = arith.constant 2 : i32
    %c8_i32_111 = arith.constant 8 : i32
    %354 = arith.muli %c2_i32_110, %c8_i32_111 : i32
    %355 = tpu.assume_multiple %354, 8 : i32
    %356 = arith.index_cast %355 : i32 to index
    %c0_112 = arith.constant 0 : index
    %357 = vector.load %arg10[%356, %c0_112] : memref<64x512xf32, #tpu.memory_space<vmem>>, vector<8x512xf32>
    %c0_113 = arith.constant 0 : index
    %c0_114 = arith.constant 0 : index
    %358 = vector.load %arg5[%c0_113, %c0_114] : memref<128x512xf32, #tpu.memory_space<vmem>>, vector<128x512xf32>
    %cst_115 = arith.constant dense<0.000000e+00> : vector<8x512xf32>
    %359 = tpu.matmul %353, %358, %cst_115 {dimension_numbers = #tpu.dot_dimension_numbers<[1], [0], [0], [1], [0, 0, 1, 1], [], []>} : vector<8x128xf32>, vector<128x512xf32>, vector<8x512xf32> -> vector<8x512xf32>
    %360 = arith.addf %357, %359 : vector<8x512xf32>
    %361 = vector.extract_strided_slice %360 {offsets = [0, 0], sizes = [8, 128], strides = [1, 1]} : vector<8x512xf32> to vector<8x128xf32>
    %362 = arith.negf %361 : vector<8x128xf32>
    %363 = math.exp %362 : vector<8x128xf32>
    %cst_116 = arith.constant 1.000000e+00 : f32
    %364 = vector.broadcast %cst_116 : f32 to vector<8x128xf32>
    %365 = arith.addf %364, %363 : vector<8x128xf32>
    %366 = arith.divf %364, %365 : vector<8x128xf32>
    %367 = vector.extract_strided_slice %360 {offsets = [0, 128], sizes = [8, 128], strides = [1, 1]} : vector<8x512xf32> to vector<8x128xf32>
    %368 = arith.negf %367 : vector<8x128xf32>
    %369 = math.exp %368 : vector<8x128xf32>
    %cst_117 = arith.constant 1.000000e+00 : f32
    %370 = vector.broadcast %cst_117 : f32 to vector<8x128xf32>
    %371 = arith.addf %370, %369 : vector<8x128xf32>
    %372 = arith.divf %370, %371 : vector<8x128xf32>
    %373 = vector.extract_strided_slice %360 {offsets = [0, 256], sizes = [8, 128], strides = [1, 1]} : vector<8x512xf32> to vector<8x128xf32>
    %374 = math.tanh %373 : vector<8x128xf32>
    %375 = vector.extract_strided_slice %360 {offsets = [0, 384], sizes = [8, 128], strides = [1, 1]} : vector<8x512xf32> to vector<8x128xf32>
    %376 = arith.negf %375 : vector<8x128xf32>
    %377 = math.exp %376 : vector<8x128xf32>
    %cst_118 = arith.constant 1.000000e+00 : f32
    %378 = vector.broadcast %cst_118 : f32 to vector<8x128xf32>
    %379 = arith.addf %378, %377 : vector<8x128xf32>
    %380 = arith.divf %378, %379 : vector<8x128xf32>
    %381 = arith.mulf %372, %351 : vector<8x128xf32>
    %382 = arith.mulf %366, %374 : vector<8x128xf32>
    %383 = arith.addf %381, %382 : vector<8x128xf32>
    %384 = math.tanh %383 : vector<8x128xf32>
    %385 = arith.mulf %380, %384 : vector<8x128xf32>
    %c3_i32_119 = arith.constant 3 : i32
    %c8_i32_120 = arith.constant 8 : i32
    %386 = arith.muli %c3_i32_119, %c8_i32_120 : i32
    %387 = tpu.assume_multiple %386, 8 : i32
    %388 = arith.index_cast %387 : i32 to index
    %c0_121 = arith.constant 0 : index
    %389 = vector.load %arg10[%388, %c0_121] : memref<64x512xf32, #tpu.memory_space<vmem>>, vector<8x512xf32>
    %c0_122 = arith.constant 0 : index
    %c0_123 = arith.constant 0 : index
    %390 = vector.load %arg5[%c0_122, %c0_123] : memref<128x512xf32, #tpu.memory_space<vmem>>, vector<128x512xf32>
    %cst_124 = arith.constant dense<0.000000e+00> : vector<8x512xf32>
    %391 = tpu.matmul %385, %390, %cst_124 {dimension_numbers = #tpu.dot_dimension_numbers<[1], [0], [0], [1], [0, 0, 1, 1], [], []>} : vector<8x128xf32>, vector<128x512xf32>, vector<8x512xf32> -> vector<8x512xf32>
    %392 = arith.addf %389, %391 : vector<8x512xf32>
    %393 = vector.extract_strided_slice %392 {offsets = [0, 0], sizes = [8, 128], strides = [1, 1]} : vector<8x512xf32> to vector<8x128xf32>
    %394 = arith.negf %393 : vector<8x128xf32>
    %395 = math.exp %394 : vector<8x128xf32>
    %cst_125 = arith.constant 1.000000e+00 : f32
    %396 = vector.broadcast %cst_125 : f32 to vector<8x128xf32>
    %397 = arith.addf %396, %395 : vector<8x128xf32>
    %398 = arith.divf %396, %397 : vector<8x128xf32>
    %399 = vector.extract_strided_slice %392 {offsets = [0, 128], sizes = [8, 128], strides = [1, 1]} : vector<8x512xf32> to vector<8x128xf32>
    %400 = arith.negf %399 : vector<8x128xf32>
    %401 = math.exp %400 : vector<8x128xf32>
    %cst_126 = arith.constant 1.000000e+00 : f32
    %402 = vector.broadcast %cst_126 : f32 to vector<8x128xf32>
    %403 = arith.addf %402, %401 : vector<8x128xf32>
    %404 = arith.divf %402, %403 : vector<8x128xf32>
    %405 = vector.extract_strided_slice %392 {offsets = [0, 256], sizes = [8, 128], strides = [1, 1]} : vector<8x512xf32> to vector<8x128xf32>
    %406 = math.tanh %405 : vector<8x128xf32>
    %407 = vector.extract_strided_slice %392 {offsets = [0, 384], sizes = [8, 128], strides = [1, 1]} : vector<8x512xf32> to vector<8x128xf32>
    %408 = arith.negf %407 : vector<8x128xf32>
    %409 = math.exp %408 : vector<8x128xf32>
    %cst_127 = arith.constant 1.000000e+00 : f32
    %410 = vector.broadcast %cst_127 : f32 to vector<8x128xf32>
    %411 = arith.addf %410, %409 : vector<8x128xf32>
    %412 = arith.divf %410, %411 : vector<8x128xf32>
    %413 = arith.mulf %404, %383 : vector<8x128xf32>
    %414 = arith.mulf %398, %406 : vector<8x128xf32>
    %415 = arith.addf %413, %414 : vector<8x128xf32>
    %416 = math.tanh %415 : vector<8x128xf32>
    %417 = arith.mulf %412, %416 : vector<8x128xf32>
    %c4_i32_128 = arith.constant 4 : i32
    %c8_i32_129 = arith.constant 8 : i32
    %418 = arith.muli %c4_i32_128, %c8_i32_129 : i32
    %419 = tpu.assume_multiple %418, 8 : i32
    %420 = arith.index_cast %419 : i32 to index
    %c0_130 = arith.constant 0 : index
    %421 = vector.load %arg10[%420, %c0_130] : memref<64x512xf32, #tpu.memory_space<vmem>>, vector<8x512xf32>
    %c0_131 = arith.constant 0 : index
    %c0_132 = arith.constant 0 : index
    %422 = vector.load %arg5[%c0_131, %c0_132] : memref<128x512xf32, #tpu.memory_space<vmem>>, vector<128x512xf32>
    %cst_133 = arith.constant dense<0.000000e+00> : vector<8x512xf32>
    %423 = tpu.matmul %417, %422, %cst_133 {dimension_numbers = #tpu.dot_dimension_numbers<[1], [0], [0], [1], [0, 0, 1, 1], [], []>} : vector<8x128xf32>, vector<128x512xf32>, vector<8x512xf32> -> vector<8x512xf32>
    %424 = arith.addf %421, %423 : vector<8x512xf32>
    %425 = vector.extract_strided_slice %424 {offsets = [0, 0], sizes = [8, 128], strides = [1, 1]} : vector<8x512xf32> to vector<8x128xf32>
    %426 = arith.negf %425 : vector<8x128xf32>
    %427 = math.exp %426 : vector<8x128xf32>
    %cst_134 = arith.constant 1.000000e+00 : f32
    %428 = vector.broadcast %cst_134 : f32 to vector<8x128xf32>
    %429 = arith.addf %428, %427 : vector<8x128xf32>
    %430 = arith.divf %428, %429 : vector<8x128xf32>
    %431 = vector.extract_strided_slice %424 {offsets = [0, 128], sizes = [8, 128], strides = [1, 1]} : vector<8x512xf32> to vector<8x128xf32>
    %432 = arith.negf %431 : vector<8x128xf32>
    %433 = math.exp %432 : vector<8x128xf32>
    %cst_135 = arith.constant 1.000000e+00 : f32
    %434 = vector.broadcast %cst_135 : f32 to vector<8x128xf32>
    %435 = arith.addf %434, %433 : vector<8x128xf32>
    %436 = arith.divf %434, %435 : vector<8x128xf32>
    %437 = vector.extract_strided_slice %424 {offsets = [0, 256], sizes = [8, 128], strides = [1, 1]} : vector<8x512xf32> to vector<8x128xf32>
    %438 = math.tanh %437 : vector<8x128xf32>
    %439 = vector.extract_strided_slice %424 {offsets = [0, 384], sizes = [8, 128], strides = [1, 1]} : vector<8x512xf32> to vector<8x128xf32>
    %440 = arith.negf %439 : vector<8x128xf32>
    %441 = math.exp %440 : vector<8x128xf32>
    %cst_136 = arith.constant 1.000000e+00 : f32
    %442 = vector.broadcast %cst_136 : f32 to vector<8x128xf32>
    %443 = arith.addf %442, %441 : vector<8x128xf32>
    %444 = arith.divf %442, %443 : vector<8x128xf32>
    %445 = arith.mulf %436, %415 : vector<8x128xf32>
    %446 = arith.mulf %430, %438 : vector<8x128xf32>
    %447 = arith.addf %445, %446 : vector<8x128xf32>
    %448 = math.tanh %447 : vector<8x128xf32>
    %449 = arith.mulf %444, %448 : vector<8x128xf32>
    %c5_i32_137 = arith.constant 5 : i32
    %c8_i32_138 = arith.constant 8 : i32
    %450 = arith.muli %c5_i32_137, %c8_i32_138 : i32
    %451 = tpu.assume_multiple %450, 8 : i32
    %452 = arith.index_cast %451 : i32 to index
    %c0_139 = arith.constant 0 : index
    %453 = vector.load %arg10[%452, %c0_139] : memref<64x512xf32, #tpu.memory_space<vmem>>, vector<8x512xf32>
    %c0_140 = arith.constant 0 : index
    %c0_141 = arith.constant 0 : index
    %454 = vector.load %arg5[%c0_140, %c0_141] : memref<128x512xf32, #tpu.memory_space<vmem>>, vector<128x512xf32>
    %cst_142 = arith.constant dense<0.000000e+00> : vector<8x512xf32>
    %455 = tpu.matmul %449, %454, %cst_142 {dimension_numbers = #tpu.dot_dimension_numbers<[1], [0], [0], [1], [0, 0, 1, 1], [], []>} : vector<8x128xf32>, vector<128x512xf32>, vector<8x512xf32> -> vector<8x512xf32>
    %456 = arith.addf %453, %455 : vector<8x512xf32>
    %457 = vector.extract_strided_slice %456 {offsets = [0, 0], sizes = [8, 128], strides = [1, 1]} : vector<8x512xf32> to vector<8x128xf32>
    %458 = arith.negf %457 : vector<8x128xf32>
    %459 = math.exp %458 : vector<8x128xf32>
    %cst_143 = arith.constant 1.000000e+00 : f32
    %460 = vector.broadcast %cst_143 : f32 to vector<8x128xf32>
    %461 = arith.addf %460, %459 : vector<8x128xf32>
    %462 = arith.divf %460, %461 : vector<8x128xf32>
    %463 = vector.extract_strided_slice %456 {offsets = [0, 128], sizes = [8, 128], strides = [1, 1]} : vector<8x512xf32> to vector<8x128xf32>
    %464 = arith.negf %463 : vector<8x128xf32>
    %465 = math.exp %464 : vector<8x128xf32>
    %cst_144 = arith.constant 1.000000e+00 : f32
    %466 = vector.broadcast %cst_144 : f32 to vector<8x128xf32>
    %467 = arith.addf %466, %465 : vector<8x128xf32>
    %468 = arith.divf %466, %467 : vector<8x128xf32>
    %469 = vector.extract_strided_slice %456 {offsets = [0, 256], sizes = [8, 128], strides = [1, 1]} : vector<8x512xf32> to vector<8x128xf32>
    %470 = math.tanh %469 : vector<8x128xf32>
    %471 = vector.extract_strided_slice %456 {offsets = [0, 384], sizes = [8, 128], strides = [1, 1]} : vector<8x512xf32> to vector<8x128xf32>
    %472 = arith.negf %471 : vector<8x128xf32>
    %473 = math.exp %472 : vector<8x128xf32>
    %cst_145 = arith.constant 1.000000e+00 : f32
    %474 = vector.broadcast %cst_145 : f32 to vector<8x128xf32>
    %475 = arith.addf %474, %473 : vector<8x128xf32>
    %476 = arith.divf %474, %475 : vector<8x128xf32>
    %477 = arith.mulf %468, %447 : vector<8x128xf32>
    %478 = arith.mulf %462, %470 : vector<8x128xf32>
    %479 = arith.addf %477, %478 : vector<8x128xf32>
    %480 = math.tanh %479 : vector<8x128xf32>
    %481 = arith.mulf %476, %480 : vector<8x128xf32>
    %c6_i32_146 = arith.constant 6 : i32
    %c8_i32_147 = arith.constant 8 : i32
    %482 = arith.muli %c6_i32_146, %c8_i32_147 : i32
    %483 = tpu.assume_multiple %482, 8 : i32
    %484 = arith.index_cast %483 : i32 to index
    %c0_148 = arith.constant 0 : index
    %485 = vector.load %arg10[%484, %c0_148] : memref<64x512xf32, #tpu.memory_space<vmem>>, vector<8x512xf32>
    %c0_149 = arith.constant 0 : index
    %c0_150 = arith.constant 0 : index
    %486 = vector.load %arg5[%c0_149, %c0_150] : memref<128x512xf32, #tpu.memory_space<vmem>>, vector<128x512xf32>
    %cst_151 = arith.constant dense<0.000000e+00> : vector<8x512xf32>
    %487 = tpu.matmul %481, %486, %cst_151 {dimension_numbers = #tpu.dot_dimension_numbers<[1], [0], [0], [1], [0, 0, 1, 1], [], []>} : vector<8x128xf32>, vector<128x512xf32>, vector<8x512xf32> -> vector<8x512xf32>
    %488 = arith.addf %485, %487 : vector<8x512xf32>
    %489 = vector.extract_strided_slice %488 {offsets = [0, 0], sizes = [8, 128], strides = [1, 1]} : vector<8x512xf32> to vector<8x128xf32>
    %490 = arith.negf %489 : vector<8x128xf32>
    %491 = math.exp %490 : vector<8x128xf32>
    %cst_152 = arith.constant 1.000000e+00 : f32
    %492 = vector.broadcast %cst_152 : f32 to vector<8x128xf32>
    %493 = arith.addf %492, %491 : vector<8x128xf32>
    %494 = arith.divf %492, %493 : vector<8x128xf32>
    %495 = vector.extract_strided_slice %488 {offsets = [0, 128], sizes = [8, 128], strides = [1, 1]} : vector<8x512xf32> to vector<8x128xf32>
    %496 = arith.negf %495 : vector<8x128xf32>
    %497 = math.exp %496 : vector<8x128xf32>
    %cst_153 = arith.constant 1.000000e+00 : f32
    %498 = vector.broadcast %cst_153 : f32 to vector<8x128xf32>
    %499 = arith.addf %498, %497 : vector<8x128xf32>
    %500 = arith.divf %498, %499 : vector<8x128xf32>
    %501 = vector.extract_strided_slice %488 {offsets = [0, 256], sizes = [8, 128], strides = [1, 1]} : vector<8x512xf32> to vector<8x128xf32>
    %502 = math.tanh %501 : vector<8x128xf32>
    %503 = vector.extract_strided_slice %488 {offsets = [0, 384], sizes = [8, 128], strides = [1, 1]} : vector<8x512xf32> to vector<8x128xf32>
    %504 = arith.negf %503 : vector<8x128xf32>
    %505 = math.exp %504 : vector<8x128xf32>
    %cst_154 = arith.constant 1.000000e+00 : f32
    %506 = vector.broadcast %cst_154 : f32 to vector<8x128xf32>
    %507 = arith.addf %506, %505 : vector<8x128xf32>
    %508 = arith.divf %506, %507 : vector<8x128xf32>
    %509 = arith.mulf %500, %479 : vector<8x128xf32>
    %510 = arith.mulf %494, %502 : vector<8x128xf32>
    %511 = arith.addf %509, %510 : vector<8x128xf32>
    %512 = math.tanh %511 : vector<8x128xf32>
    %513 = arith.mulf %508, %512 : vector<8x128xf32>
    %c7_i32_155 = arith.constant 7 : i32
    %c8_i32_156 = arith.constant 8 : i32
    %514 = arith.muli %c7_i32_155, %c8_i32_156 : i32
    %515 = tpu.assume_multiple %514, 8 : i32
    %516 = arith.index_cast %515 : i32 to index
    %c0_157 = arith.constant 0 : index
    %517 = vector.load %arg10[%516, %c0_157] : memref<64x512xf32, #tpu.memory_space<vmem>>, vector<8x512xf32>
    %c0_158 = arith.constant 0 : index
    %c0_159 = arith.constant 0 : index
    %518 = vector.load %arg5[%c0_158, %c0_159] : memref<128x512xf32, #tpu.memory_space<vmem>>, vector<128x512xf32>
    %cst_160 = arith.constant dense<0.000000e+00> : vector<8x512xf32>
    %519 = tpu.matmul %513, %518, %cst_160 {dimension_numbers = #tpu.dot_dimension_numbers<[1], [0], [0], [1], [0, 0, 1, 1], [], []>} : vector<8x128xf32>, vector<128x512xf32>, vector<8x512xf32> -> vector<8x512xf32>
    %520 = arith.addf %517, %519 : vector<8x512xf32>
    %521 = vector.extract_strided_slice %520 {offsets = [0, 0], sizes = [8, 128], strides = [1, 1]} : vector<8x512xf32> to vector<8x128xf32>
    %522 = arith.negf %521 : vector<8x128xf32>
    %523 = math.exp %522 : vector<8x128xf32>
    %cst_161 = arith.constant 1.000000e+00 : f32
    %524 = vector.broadcast %cst_161 : f32 to vector<8x128xf32>
    %525 = arith.addf %524, %523 : vector<8x128xf32>
    %526 = arith.divf %524, %525 : vector<8x128xf32>
    %527 = vector.extract_strided_slice %520 {offsets = [0, 128], sizes = [8, 128], strides = [1, 1]} : vector<8x512xf32> to vector<8x128xf32>
    %528 = arith.negf %527 : vector<8x128xf32>
    %529 = math.exp %528 : vector<8x128xf32>
    %cst_162 = arith.constant 1.000000e+00 : f32
    %530 = vector.broadcast %cst_162 : f32 to vector<8x128xf32>
    %531 = arith.addf %530, %529 : vector<8x128xf32>
    %532 = arith.divf %530, %531 : vector<8x128xf32>
    %533 = vector.extract_strided_slice %520 {offsets = [0, 256], sizes = [8, 128], strides = [1, 1]} : vector<8x512xf32> to vector<8x128xf32>
    %534 = math.tanh %533 : vector<8x128xf32>
    %535 = vector.extract_strided_slice %520 {offsets = [0, 384], sizes = [8, 128], strides = [1, 1]} : vector<8x512xf32> to vector<8x128xf32>
    %536 = arith.negf %535 : vector<8x128xf32>
    %537 = math.exp %536 : vector<8x128xf32>
    %cst_163 = arith.constant 1.000000e+00 : f32
    %538 = vector.broadcast %cst_163 : f32 to vector<8x128xf32>
    %539 = arith.addf %538, %537 : vector<8x128xf32>
    %540 = arith.divf %538, %539 : vector<8x128xf32>
    %541 = arith.mulf %532, %511 : vector<8x128xf32>
    %542 = arith.mulf %526, %534 : vector<8x128xf32>
    %543 = arith.addf %541, %542 : vector<8x128xf32>
    %544 = math.tanh %543 : vector<8x128xf32>
    %545 = arith.mulf %540, %544 : vector<8x128xf32>
    %c8_i32_164 = arith.constant 8 : i32
    %c0_165 = arith.constant 0 : index
    %c0_166 = arith.constant 0 : index
    %546 = vector.load %arg7[%c0_165, %c0_166] : memref<1x128xf32, #tpu.memory_space<vmem>>, vector<1x128xf32>
    %547 = vector.broadcast %546 : vector<1x128xf32> to vector<8x128xf32>
    %548 = arith.mulf %545, %547 : vector<8x128xf32>
    %cst_167 = arith.constant dense<0.000000e+00> : vector<8xf32>
    %549 = vector.multi_reduction <add>, %548, %cst_167 [1] : vector<8x128xf32> to vector<8xf32>
    %550 = vector.shape_cast %549 : vector<8xf32> to vector<8x1xf32>
    %c0_168 = arith.constant 0 : index
    %c0_169 = arith.constant 0 : index
    %551 = vector.load %arg8[%c0_168, %c0_169] : memref<1x1xf32, #tpu.memory_space<vmem>>, vector<1x1xf32>
    %552 = vector.broadcast %551 : vector<1x1xf32> to vector<8x1xf32>
    %553 = arith.addf %550, %552 : vector<8x1xf32>
    %554 = vector.shape_cast %553 : vector<8x1xf32> to vector<8x1xf32>
    %555 = vector.broadcast %554 : vector<8x1xf32> to vector<8x128xf32>
    %c0_170 = arith.constant 0 : index
    %c0_171 = arith.constant 0 : index
    %556 = vector.load %arg9[%c0_170, %c0_171] : memref<8x128xf32, #tpu.memory_space<vmem>>, vector<8x128xf32>
    tpu.vector_store %arg9[%c0_170, %c0_171], %555 {strides = array<i32>} : memref<8x128xf32, #tpu.memory_space<vmem>>, vector<8x128xf32>,
    return
  }
}

</mosaic_0001>

<llo_original>
// kernel: day_model3_forward.1
$region0: #{day_model3_forward.1}
  #allocation0 [shape = 'u32[]', space=smem, size = 0x4, offset = 0x4, fixed_abs, tag = 'smem constant byte address 0x4 - core index']
  #allocation1 [shape = 'u32[144,128]{1,0:T(1,128)}', space=vmem, size = 0x12000, scoped, tag = 'internal scratch']
  #allocation2 [shape = 'f32[64,512]{1,0:T(8,128)}', space=vmem, size = 0x20000, scoped, tag = 'scratch operand']
  #allocation3 [shape = 'f32[64,128]{1,0:T(8,128)}', space=vmem, size = 0x8000, scoped, tag = 'scratch operand']
  #allocation4 [shape = 'f32[1,1]{1,0:T(1,128)S(1)}', space=vmem, size = 0x200, scoped, tag = 'scoped memory for day_model3_forward.1']
  %s0 = inlined_call_operand.vmem [shape: f32[64,128], index: 0, kind: input, shape index: {}]
  %s1 = inlined_call_operand.vmem [shape: f32[128,512], index: 1, kind: input, shape index: {}]
  %s2 = inlined_call_operand.vmem [shape: f32[128,512], index: 2, kind: input, shape index: {}]
  %s3 = inlined_call_operand.vmem [shape: f32[1,512], index: 3, kind: input, shape index: {}]
  %s4 = inlined_call_operand.vmem [shape: f32[128,512], index: 4, kind: input, shape index: {}]
  %s5 = inlined_call_operand.vmem [shape: f32[128,512], index: 5, kind: input, shape index: {}]
  %s6 = inlined_call_operand.vmem [shape: f32[1,512], index: 6, kind: input, shape index: {}]
  %s7 = inlined_call_operand.vmem [shape: f32[1,128], index: 7, kind: input, shape index: {}]
  %s8 = inlined_call_operand.<no memory space> [shape: f32[1,1], index: 8, kind: input, shape index: {}]
  %s9 = inlined_call_operand.vmem [shape: f32[8,128], index: 9, kind: output, shape index: {}]
  %s10 = sld [smem:[#allocation0]]
  $region46: #{day_model3_forward.1} parent=0
    _
  %s12 = ssub.s32 1, %s10
  %s13 = scalar_select 0, %s12, %s10
  %v14 = vstv %s8
  %15 = vst [vmem:[#allocation4] sm:$0x1] %v14
  // Predicated region
  $region2: #{day_model3_forward.1} parent=0 // pred_check
    _
  $region3: #{day_model3_forward.1} parent=0 // pred_check_branch
    %17 = sbr.rel (0) target = $region5
  $region4: #{day_model3_forward.1} parent=0 // pred_region
    _
  $region5: #{day_model3_forward.1} parent=0 // pred_fallthru
    _
  // Predicated region
  $region6: #{day_model3_forward.1} parent=0 // pred_check
    _
  $region7: #{day_model3_forward.1} parent=0 // pred_check_branch
    %19 = sbr.rel (0) target = $region9
  $region8: #{day_model3_forward.1} parent=0 // pred_region
    _
  $region9: #{day_model3_forward.1} parent=0 // pred_fallthru
    _
  // Predicated region
  $region10: #{day_model3_forward.1} parent=0 // pred_check
    _
  $region11: #{day_model3_forward.1} parent=0 // pred_check_branch
    %21 = sbr.rel (0) target = $region13
  $region12: #{day_model3_forward.1} parent=0 // pred_region
    _
  $region13: #{day_model3_forward.1} parent=0 // pred_fallthru
    _
  // Predicated region
  $region14: #{day_model3_forward.1} parent=0 // pred_check
    _
  $region15: #{day_model3_forward.1} parent=0 // pred_check_branch
    %23 = sbr.rel (0) target = $region17
  $region16: #{day_model3_forward.1} parent=0 // pred_region
    _
  $region17: #{day_model3_forward.1} parent=0 // pred_fallthru
    _
  // Predicated region
  $region18: #{day_model3_forward.1} parent=0 // pred_check
    _
  $region19: #{day_model3_forward.1} parent=0 // pred_check_branch
    %25 = sbr.rel (0) target = $region21
  $region20: #{day_model3_forward.1} parent=0 // pred_region
    _
  $region21: #{day_model3_forward.1} parent=0 // pred_fallthru
    _
  // Predicated region
  $region22: #{day_model3_forward.1} parent=0 // pred_check
    _
  $region23: #{day_model3_forward.1} parent=0 // pred_check_branch
    %27 = sbr.rel (0) target = $region25
  $region24: #{day_model3_forward.1} parent=0 // pred_region
    _
  $region25: #{day_model3_forward.1} parent=0 // pred_fallthru
    _
  // Predicated region
  $region26: #{day_model3_forward.1} parent=0 // pred_check
    _
  $region27: #{day_model3_forward.1} parent=0 // pred_check_branch
    %29 = sbr.rel (0) target = $region29
  $region28: #{day_model3_forward.1} parent=0 // pred_region
    _
  $region29: #{day_model3_forward.1} parent=0 // pred_fallthru
    _
  // Predicated region
  $region30: #{day_model3_forward.1} parent=0 // pred_check
    _
  $region31: #{day_model3_forward.1} parent=0 // pred_check_branch
    %31 = sbr.rel (0) target = $region33
  $region32: #{day_model3_forward.1} parent=0 // pred_region
    _
  $region33: #{day_model3_forward.1} parent=0 // pred_fallthru
    _
  // Predicated region
  $region34: #{day_model3_forward.1} parent=0 // pred_check
    _
  $region35: #{day_model3_forward.1} parent=0 // pred_check_branch
    %33 = sbr.rel (0) target = $region37
  $region36: #{day_model3_forward.1} parent=0 // pred_region
    _
  $region37: #{day_model3_forward.1} parent=0 // pred_fallthru
    _
  %v34 = vld [vmem:[%s0] sm:$0xff]
  %v35 = vld [vmem:[%s0 + $0x8] sm:$0xff]
  %v36 = vld [vmem:[%s0 + $0x10] sm:$0xff]
  %v37 = vld [vmem:[%s0 + $0x18] sm:$0xff]
  %v38 = vld [vmem:[%s0 + $0x20] sm:$0xff]
  %v39 = vld [vmem:[%s0 + $0x28] sm:$0xff]
  %v40 = vld [vmem:[%s0 + $0x30] sm:$0xff]
  %v41 = vld [vmem:[%s0 + $0x38] sm:$0xff]
  %v42 = vld [vmem:[%s1] sm:$0xff]
  %v43 = vld [vmem:[%s1 + $0x8] sm:$0xff]
  %v44 = vld [vmem:[%s1 + $0x10] sm:$0xff]
  %v45 = vld [vmem:[%s1 + $0x18] sm:$0xff]
  %v46 = vld [vmem:[%s1 + $0x20] sm:$0xff]
  %v47 = vld [vmem:[%s1 + $0x28] sm:$0xff]
  %v48 = vld [vmem:[%s1 + $0x30] sm:$0xff]
  %v49 = vld [vmem:[%s1 + $0x38] sm:$0xff]
  %v50 = vld [vmem:[%s1 + $0x40] sm:$0xff]
  %v51 = vld [vmem:[%s1 + $0x48] sm:$0xff]
  %v52 = vld [vmem:[%s1 + $0x50] sm:$0xff]
  %v53 = vld [vmem:[%s1 + $0x58] sm:$0xff]
  %v54 = vld [vmem:[%s1 + $0x60] sm:$0xff]
  %v55 = vld [vmem:[%s1 + $0x68] sm:$0xff]
  %v56 = vld [vmem:[%s1 + $0x70] sm:$0xff]
  %v57 = vld [vmem:[%s1 + $0x78] sm:$0xff]
  %v58 = vld [vmem:[%s1 + $0x80] sm:$0xff]
  %v59 = vld [vmem:[%s1 + $0x88] sm:$0xff]
  %v60 = vld [vmem:[%s1 + $0x90] sm:$0xff]
  %v61 = vld [vmem:[%s1 + $0x98] sm:$0xff]
  %v62 = vld [vmem:[%s1 + $0xa0] sm:$0xff]
  %v63 = vld [vmem:[%s1 + $0xa8] sm:$0xff]
  %v64 = vld [vmem:[%s1 + $0xb0] sm:$0xff]
  %v65 = vld [vmem:[%s1 + $0xb8] sm:$0xff]
  %v66 = vld [vmem:[%s1 + $0xc0] sm:$0xff]
  %v67 = vld [vmem:[%s1 + $0xc8] sm:$0xff]
  %v68 = vld [vmem:[%s1 + $0xd0] sm:$0xff]
  %v69 = vld [vmem:[%s1 + $0xd8] sm:$0xff]
  %v70 = vld [vmem:[%s1 + $0xe0] sm:$0xff]
  %v71 = vld [vmem:[%s1 + $0xe8] sm:$0xff]
  %v72 = vld [vmem:[%s1 + $0xf0] sm:$0xff]
  %v73 = vld [vmem:[%s1 + $0xf8] sm:$0xff]
  %v74 = vld [vmem:[%s1 + $0x100] sm:$0xff]
  %v75 = vld [vmem:[%s1 + $0x108] sm:$0xff]
  %v76 = vld [vmem:[%s1 + $0x110] sm:$0xff]
  %v77 = vld [vmem:[%s1 + $0x118] sm:$0xff]
  %v78 = vld [vmem:[%s1 + $0x120] sm:$0xff]
  %v79 = vld [vmem:[%s1 + $0x128] sm:$0xff]
  %v80 = vld [vmem:[%s1 + $0x130] sm:$0xff]
  %v81 = vld [vmem:[%s1 + $0x138] sm:$0xff]
  %v82 = vld [vmem:[%s1 + $0x140] sm:$0xff]
  %v83 = vld [vmem:[%s1 + $0x148] sm:$0xff]
  %v84 = vld [vmem:[%s1 + $0x150] sm:$0xff]
  %v85 = vld [vmem:[%s1 + $0x158] sm:$0xff]
  %v86 = vld [vmem:[%s1 + $0x160] sm:$0xff]
  %v87 = vld [vmem:[%s1 + $0x168] sm:$0xff]
  %v88 = vld [vmem:[%s1 + $0x170] sm:$0xff]
  %v89 = vld [vmem:[%s1 + $0x178] sm:$0xff]
  %v90 = vld [vmem:[%s1 + $0x180] sm:$0xff]
  %v91 = vld [vmem:[%s1 + $0x188] sm:$0xff]
  %v92 = vld [vmem:[%s1 + $0x190] sm:$0xff]
  %v93 = vld [vmem:[%s1 + $0x198] sm:$0xff]
  %v94 = vld [vmem:[%s1 + $0x1a0] sm:$0xff]
  %v95 = vld [vmem:[%s1 + $0x1a8] sm:$0xff]
  %v96 = vld [vmem:[%s1 + $0x1b0] sm:$0xff]
  %v97 = vld [vmem:[%s1 + $0x1b8] sm:$0xff]
  %v98 = vld [vmem:[%s1 + $0x1c0] sm:$0xff]
  %v99 = vld [vmem:[%s1 + $0x1c8] sm:$0xff]
  %v100 = vld [vmem:[%s1 + $0x1d0] sm:$0xff]
  %v101 = vld [vmem:[%s1 + $0x1d8] sm:$0xff]
  %v102 = vld [vmem:[%s1 + $0x1e0] sm:$0xff]
  %v103 = vld [vmem:[%s1 + $0x1e8] sm:$0xff]
  %v104 = vld [vmem:[%s1 + $0x1f0] sm:$0xff]
  %v105 = vld [vmem:[%s1 + $0x1f8] sm:$0xff]
  %v106 = vld [vmem:[%s3] sm:$0xf]
  %v108 = vlaneseq
  %v109 = vshrl.u32 %v108, 7
  %v110 = vsub.s32 0, %v109
  %v111 = vrot.slane %v106, %v110
  %v112 = vlaneseq
  %v113 = vshrl.u32 %v112, 7
  %v114 = vsub.s32 1, %v113
  %v115 = vrot.slane %v106, %v114
  %v116 = vlaneseq
  %v117 = vshrl.u32 %v116, 7
  %v118 = vsub.s32 2, %v117
  %v119 = vrot.slane %v106, %v118
  %v120 = vlaneseq
  %v121 = vshrl.u32 %v120, 7
  %v122 = vsub.s32 3, %v121
  %v123 = vrot.slane %v106, %v122
  %128 = vmatprep.subr.mxu0 %v43
  %129 = vmatpush1.msra.mxu0 %v42
  %130 = vmatprep.subr.mxu0 %v47
  %131 = vmatpush1.msra.mxu0 %v46
  %132 = vmatprep.subr.mxu0 %v51
  %133 = vmatpush1.msra.mxu0 %v50
  %134 = vmatprep.subr.mxu0 %v55
  %135 = vmatpush1.msra.mxu0 %v54
  %136 = vmatprep.subr.mxu0 %v59
  %137 = vmatpush1.msra.mxu0 %v58
  %138 = vmatprep.subr.mxu0 %v63
  %139 = vmatpush1.msra.mxu0 %v62
  %140 = vmatprep.subr.mxu0 %v67
  %141 = vmatpush1.msra.mxu0 %v66
  %142 = vmatprep.subr.mxu0 %v71
  %143 = vmatpush1.msra.mxu0 %v70
  %144 = vmatprep.subr.mxu0 %v75
  %145 = vmatpush1.msra.mxu0 %v74
  %146 = vmatprep.subr.mxu0 %v79
  %147 = vmatpush1.msra.mxu0 %v78
  %148 = vmatprep.subr.mxu0 %v83
  %149 = vmatpush1.msra.mxu0 %v82
  %150 = vmatprep.subr.mxu0 %v87
  %151 = vmatpush1.msra.mxu0 %v86
  %152 = vmatprep.subr.mxu0 %v91
  %153 = vmatpush1.msra.mxu0 %v90
  %154 = vmatprep.subr.mxu0 %v95
  %155 = vmatpush1.msra.mxu0 %v94
  %156 = vmatprep.subr.mxu0 %v99
  %157 = vmatpush1.msra.mxu0 %v98
  %158 = vmatprep.subr.mxu0 %v103
  %159 = vmatpush1.msra.mxu0 %v102
  %160 = vmatprep.subr.mxu0 0.0
  %161 = vmatpush1.msra.mxu0 0.0
  %162 = vmatprep.subr.mxu0 0.0
  %163 = vmatpush1.msra.mxu0 0.0
  %164 = vmatprep.subr.mxu0 0.0
  %165 = vmatpush1.msra.mxu0 0.0
  %166 = vmatprep.subr.mxu0 0.0
  %167 = vmatpush1.msra.mxu0 0.0
  %168 = vmatprep.subr.mxu0 0.0
  %169 = vmatpush1.msra.mxu0 0.0
  %170 = vmatprep.subr.mxu0 0.0
  %171 = vmatpush1.msra.mxu0 0.0
  %172 = vmatprep.subr.mxu0 0.0
  %173 = vmatpush1.msra.mxu0 0.0
  %174 = vmatprep.subr.mxu0 0.0
  %175 = vmatpush1.msra.mxu0 0.0
  %176 = vmatprep.subr.mxu0 0.0
  %177 = vmatpush1.msra.mxu0 0.0
  %178 = vmatprep.subr.mxu0 0.0
  %179 = vmatpush1.msra.mxu0 0.0
  %180 = vmatprep.subr.mxu0 0.0
  %181 = vmatpush1.msra.mxu0 0.0
  %182 = vmatprep.subr.mxu0 0.0
  %183 = vmatpush1.msra.mxu0 0.0
  %184 = vmatprep.subr.mxu0 0.0
  %185 = vmatpush1.msra.mxu0 0.0
  %186 = vmatprep.subr.mxu0 0.0
  %187 = vmatpush1.msra.mxu0 0.0
  %188 = vmatprep.subr.mxu0 0.0
  %189 = vmatpush1.msra.mxu0 0.0
  %190 = vmatprep.subr.mxu0 0.0
  %191 = vmatpush1.msra.mxu0 0.0
  %192 = vmatprep.mubr.f32.mxu0 0.0
  %193 = vmatmul.mubr.f32.gmra.mrb[0].mxu0 %v34
  %v194 = vpop.f32.mrb[0].mxu0
  %v195 = vadd.f32 %v111, %v194
  %v196 = vpop.f32.mrb[0].mxu0
  %v197 = vadd.f32 %v115, %v196
  %198 = vmatprep.mubr.f32.mxu0 0.0
  %199 = vmatmul.mubr.f32.gmra.mrb[0].mxu0 %v35
  %v200 = vpop.f32.mrb[0].mxu0
  %v201 = vadd.f32 %v111, %v200
  %v202 = vpop.f32.mrb[0].mxu0
  %v203 = vadd.f32 %v115, %v202
  %204 = vmatprep.mubr.f32.mxu0 0.0
  %205 = vmatmul.mubr.f32.gmra.mrb[0].mxu0 %v36
  %v206 = vpop.f32.mrb[0].mxu0
  %v207 = vadd.f32 %v111, %v206
  %v208 = vpop.f32.mrb[0].mxu0
  %v209 = vadd.f32 %v115, %v208
  %210 = vmatprep.mubr.f32.mxu0 0.0
  %211 = vmatmul.mubr.f32.gmra.mrb[0].mxu0 %v37
  %v212 = vpop.f32.mrb[0].mxu0
  %v213 = vadd.f32 %v111, %v212
  %v214 = vpop.f32.mrb[0].mxu0
  %v215 = vadd.f32 %v115, %v214
  %216 = vmatprep.mubr.f32.mxu0 0.0
  %217 = vmatmul.mubr.f32.gmra.mrb[0].mxu0 %v38
  %v218 = vpop.f32.mrb[0].mxu0
  %v219 = vadd.f32 %v111, %v218
  %v220 = vpop.f32.mrb[0].mxu0
  %v221 = vadd.f32 %v115, %v220
  %222 = vmatprep.mubr.f32.mxu0 0.0
  %223 = vmatmul.mubr.f32.gmra.mrb[0].mxu0 %v39
  %v224 = vpop.f32.mrb[0].mxu0
  %v225 = vadd.f32 %v111, %v224
  %v226 = vpop.f32.mrb[0].mxu0
  %v227 = vadd.f32 %v115, %v226
  %228 = vmatprep.mubr.f32.mxu0 0.0
  %229 = vmatmul.mubr.f32.gmra.mrb[0].mxu0 %v40
  %v230 = vpop.f32.mrb[0].mxu0
  %v231 = vadd.f32 %v111, %v230
  %v232 = vpop.f32.mrb[0].mxu0
  %v233 = vadd.f32 %v115, %v232
  %234 = vmatprep.mubr.f32.mxu0 0.0
  %235 = vmatmul.mubr.f32.gmra.mrb[0].mxu0 %v41
  %v236 = vpop.f32.mrb[0].mxu0
  %v237 = vadd.f32 %v111, %v236
  %v238 = vpop.f32.mrb[0].mxu0
  %v239 = vadd.f32 %v115, %v238
  %240 = vdwg.mxu0
  %241 = vmatprep.subr.mxu0 %v45
  %242 = vmatpush1.msra.mxu0 %v44
  %243 = vmatprep.subr.mxu0 %v49
  %244 = vmatpush1.msra.mxu0 %v48
  %245 = vmatprep.subr.mxu0 %v53
  %246 = vmatpush1.msra.mxu0 %v52
  %247 = vmatprep.subr.mxu0 %v57
  %248 = vmatpush1.msra.mxu0 %v56
  %249 = vmatprep.subr.mxu0 %v61
  %250 = vmatpush1.msra.mxu0 %v60
  %251 = vmatprep.subr.mxu0 %v65
  %252 = vmatpush1.msra.mxu0 %v64
  %253 = vmatprep.subr.mxu0 %v69
  %254 = vmatpush1.msra.mxu0 %v68
  %255 = vmatprep.subr.mxu0 %v73
  %256 = vmatpush1.msra.mxu0 %v72
  %257 = vmatprep.subr.mxu0 %v77
  %258 = vmatpush1.msra.mxu0 %v76
  %259 = vmatprep.subr.mxu0 %v81
  %260 = vmatpush1.msra.mxu0 %v80
  %261 = vmatprep.subr.mxu0 %v85
  %262 = vmatpush1.msra.mxu0 %v84
  %263 = vmatprep.subr.mxu0 %v89
  %264 = vmatpush1.msra.mxu0 %v88
  %265 = vmatprep.subr.mxu0 %v93
  %266 = vmatpush1.msra.mxu0 %v92
  %267 = vmatprep.subr.mxu0 %v97
  %268 = vmatpush1.msra.mxu0 %v96
  %269 = vmatprep.subr.mxu0 %v101
  %270 = vmatpush1.msra.mxu0 %v100
  %271 = vmatprep.subr.mxu0 %v105
  %272 = vmatpush1.msra.mxu0 %v104
  %273 = vmatprep.subr.mxu0 0.0
  %274 = vmatpush1.msra.mxu0 0.0
  %275 = vmatprep.subr.mxu0 0.0
  %276 = vmatpush1.msra.mxu0 0.0
  %277 = vmatprep.subr.mxu0 0.0
  %278 = vmatpush1.msra.mxu0 0.0
  %279 = vmatprep.subr.mxu0 0.0
  %280 = vmatpush1.msra.mxu0 0.0
  %281 = vmatprep.subr.mxu0 0.0
  %282 = vmatpush1.msra.mxu0 0.0
  %283 = vmatprep.subr.mxu0 0.0
  %284 = vmatpush1.msra.mxu0 0.0
  %285 = vmatprep.subr.mxu0 0.0
  %286 = vmatpush1.msra.mxu0 0.0
  %287 = vmatprep.subr.mxu0 0.0
  %288 = vmatpush1.msra.mxu0 0.0
  %289 = vmatprep.subr.mxu0 0.0
  %290 = vmatpush1.msra.mxu0 0.0
  %291 = vmatprep.subr.mxu0 0.0
  %292 = vmatpush1.msra.mxu0 0.0
  %293 = vmatprep.subr.mxu0 0.0
  %294 = vmatpush1.msra.mxu0 0.0
  %295 = vmatprep.subr.mxu0 0.0
  %296 = vmatpush1.msra.mxu0 0.0
  %297 = vmatprep.subr.mxu0 0.0
  %298 = vmatpush1.msra.mxu0 0.0
  %299 = vmatprep.subr.mxu0 0.0
  %300 = vmatpush1.msra.mxu0 0.0
  %301 = vmatprep.subr.mxu0 0.0
  %302 = vmatpush1.msra.mxu0 0.0
  %303 = vmatprep.subr.mxu0 0.0
  %304 = vmatpush1.msra.mxu0 0.0
  %305 = vmatprep.mubr.f32.mxu0 0.0
  %306 = vmatmul.mubr.f32.gmra.mrb[0].mxu0 %v34
  %v307 = vpop.f32.mrb[0].mxu0
  %v308 = vadd.f32 %v119, %v307
  %v309 = vpop.f32.mrb[0].mxu0
  %v310 = vadd.f32 %v123, %v309
  %311 = vmatprep.mubr.f32.mxu0 0.0
  %312 = vmatmul.mubr.f32.gmra.mrb[0].mxu0 %v35
  %v313 = vpop.f32.mrb[0].mxu0
  %v314 = vadd.f32 %v119, %v313
  %v315 = vpop.f32.mrb[0].mxu0
  %v316 = vadd.f32 %v123, %v315
  %317 = vmatprep.mubr.f32.mxu0 0.0
  %318 = vmatmul.mubr.f32.gmra.mrb[0].mxu0 %v36
  %v319 = vpop.f32.mrb[0].mxu0
  %v320 = vadd.f32 %v119, %v319
  %v321 = vpop.f32.mrb[0].mxu0
  %v322 = vadd.f32 %v123, %v321
  %323 = vmatprep.mubr.f32.mxu0 0.0
  %324 = vmatmul.mubr.f32.gmra.mrb[0].mxu0 %v37
  %v325 = vpop.f32.mrb[0].mxu0
  %v326 = vadd.f32 %v119, %v325
  %v327 = vpop.f32.mrb[0].mxu0
  %v328 = vadd.f32 %v123, %v327
  %329 = vmatprep.mubr.f32.mxu0 0.0
  %330 = vmatmul.mubr.f32.gmra.mrb[0].mxu0 %v38
  %v331 = vpop.f32.mrb[0].mxu0
  %v332 = vadd.f32 %v119, %v331
  %v333 = vpop.f32.mrb[0].mxu0
  %v334 = vadd.f32 %v123, %v333
  %335 = vmatprep.mubr.f32.mxu0 0.0
  %336 = vmatmul.mubr.f32.gmra.mrb[0].mxu0 %v39
  %v337 = vpop.f32.mrb[0].mxu0
  %v338 = vadd.f32 %v119, %v337
  %v339 = vpop.f32.mrb[0].mxu0
  %v340 = vadd.f32 %v123, %v339
  %341 = vmatprep.mubr.f32.mxu0 0.0
  %342 = vmatmul.mubr.f32.gmra.mrb[0].mxu0 %v40
  %v343 = vpop.f32.mrb[0].mxu0
  %v344 = vadd.f32 %v119, %v343
  %v345 = vpop.f32.mrb[0].mxu0
  %v346 = vadd.f32 %v123, %v345
  %347 = vmatprep.mubr.f32.mxu0 0.0
  %348 = vmatmul.mubr.f32.gmra.mrb[0].mxu0 %v41
  %v349 = vpop.f32.mrb[0].mxu0
  %v350 = vadd.f32 %v119, %v349
  %v351 = vpop.f32.mrb[0].mxu0
  %v352 = vadd.f32 %v123, %v351
  %353 = vdwg.mxu0
  %354 = vst [vmem:[#allocation2] sm:$0xff] %v195
  %355 = vst [vmem:[#allocation2 + $0x8] sm:$0xff] %v197
  %356 = vst [vmem:[#allocation2 + $0x10] sm:$0xff] %v308
  %357 = vst [vmem:[#allocation2 + $0x18] sm:$0xff] %v310
  %358 = vst [vmem:[#allocation2 + $0x20] sm:$0xff] %v201
  %359 = vst [vmem:[#allocation2 + $0x28] sm:$0xff] %v203
  %360 = vst [vmem:[#allocation2 + $0x30] sm:$0xff] %v314
  %361 = vst [vmem:[#allocation2 + $0x38] sm:$0xff] %v316
  %362 = vst [vmem:[#allocation2 + $0x40] sm:$0xff] %v207
  %363 = vst [vmem:[#allocation2 + $0x48] sm:$0xff] %v209
  %364 = vst [vmem:[#allocation2 + $0x50] sm:$0xff] %v320
  %365 = vst [vmem:[#allocation2 + $0x58] sm:$0xff] %v322
  %366 = vst [vmem:[#allocation2 + $0x60] sm:$0xff] %v213
  %367 = vst [vmem:[#allocation2 + $0x68] sm:$0xff] %v215
  %368 = vst [vmem:[#allocation2 + $0x70] sm:$0xff] %v326
  %369 = vst [vmem:[#allocation2 + $0x78] sm:$0xff] %v328
  %370 = vst [vmem:[#allocation2 + $0x80] sm:$0xff] %v219
  %371 = vst [vmem:[#allocation2 + $0x88] sm:$0xff] %v221
  %372 = vst [vmem:[#allocation2 + $0x90] sm:$0xff] %v332
  %373 = vst [vmem:[#allocation2 + $0x98] sm:$0xff] %v334
  %374 = vst [vmem:[#allocation2 + $0xa0] sm:$0xff] %v225
  %375 = vst [vmem:[#allocation2 + $0xa8] sm:$0xff] %v227
  %376 = vst [vmem:[#allocation2 + $0xb0] sm:$0xff] %v338
  %377 = vst [vmem:[#allocation2 + $0xb8] sm:$0xff] %v340
  %378 = vst [vmem:[#allocation2 + $0xc0] sm:$0xff] %v231
  %379 = vst [vmem:[#allocation2 + $0xc8] sm:$0xff] %v233
  %380 = vst [vmem:[#allocation2 + $0xd0] sm:$0xff] %v344
  %381 = vst [vmem:[#allocation2 + $0xd8] sm:$0xff] %v346
  %382 = vst [vmem:[#allocation2 + $0xe0] sm:$0xff] %v237
  %383 = vst [vmem:[#allocation2 + $0xe8] sm:$0xff] %v239
  %384 = vst [vmem:[#allocation2 + $0xf0] sm:$0xff] %v350
  %385 = vst [vmem:[#allocation2 + $0xf8] sm:$0xff] %v352
  %s386 = smul.u32 0, 4
  %s387 = smul.addr %s386, 8
  %s388 = scalar_lea.vmem [#allocation2], %s387
  %v389 = vld [vmem:[%s388] sm:$0xff]
  %v390 = vld [vmem:[%s388 + $0x8] sm:$0xff]
  %v391 = vld [vmem:[%s388 + $0x10] sm:$0xff]
  %v392 = vld [vmem:[%s388 + $0x18] sm:$0xff]
  %v393 = vld [vmem:[%s2] sm:$0xff]
  %v394 = vld [vmem:[%s2 + $0x8] sm:$0xff]
  %v395 = vld [vmem:[%s2 + $0x10] sm:$0xff]
  %v396 = vld [vmem:[%s2 + $0x18] sm:$0xff]
  %v397 = vld [vmem:[%s2 + $0x20] sm:$0xff]
  %v398 = vld [vmem:[%s2 + $0x28] sm:$0xff]
  %v399 = vld [vmem:[%s2 + $0x30] sm:$0xff]
  %v400 = vld [vmem:[%s2 + $0x38] sm:$0xff]
  %v401 = vld [vmem:[%s2 + $0x40] sm:$0xff]
  %v402 = vld [vmem:[%s2 + $0x48] sm:$0xff]
  %v403 = vld [vmem:[%s2 + $0x50] sm:$0xff]
  %v404 = vld [vmem:[%s2 + $0x58] sm:$0xff]
  %v405 = vld [vmem:[%s2 + $0x60] sm:$0xff]
  %v406 = vld [vmem:[%s2 + $0x68] sm:$0xff]
  %v407 = vld [vmem:[%s2 + $0x70] sm:$0xff]
  %v408 = vld [vmem:[%s2 + $0x78] sm:$0xff]
  %v409 = vld [vmem:[%s2 + $0x80] sm:$0xff]
  %v410 = vld [vmem:[%s2 + $0x88] sm:$0xff]
  %v411 = vld [vmem:[%s2 + $0x90] sm:$0xff]
  %v412 = vld [vmem:[%s2 + $0x98] sm:$0xff]
  %v413 = vld [vmem:[%s2 + $0xa0] sm:$0xff]
  %v414 = vld [vmem:[%s2 + $0xa8] sm:$0xff]
  %v415 = vld [vmem:[%s2 + $0xb0] sm:$0xff]
  %v416 = vld [vmem:[%s2 + $0xb8] sm:$0xff]
  %v417 = vld [vmem:[%s2 + $0xc0] sm:$0xff]
  %v418 = vld [vmem:[%s2 + $0xc8] sm:$0xff]
  %v419 = vld [vmem:[%s2 + $0xd0] sm:$0xff]
  %v420 = vld [vmem:[%s2 + $0xd8] sm:$0xff]
  %v421 = vld [vmem:[%s2 + $0xe0] sm:$0xff]
  %v422 = vld [vmem:[%s2 + $0xe8] sm:$0xff]
  %v423 = vld [vmem:[%s2 + $0xf0] sm:$0xff]
  %v424 = vld [vmem:[%s2 + $0xf8] sm:$0xff]
  %v425 = vld [vmem:[%s2 + $0x100] sm:$0xff]
  %v426 = vld [vmem:[%s2 + $0x108] sm:$0xff]
  %v427 = vld [vmem:[%s2 + $0x110] sm:$0xff]
  %v428 = vld [vmem:[%s2 + $0x118] sm:$0xff]
  %v429 = vld [vmem:[%s2 + $0x120] sm:$0xff]
  %v430 = vld [vmem:[%s2 + $0x128] sm:$0xff]
  %v431 = vld [vmem:[%s2 + $0x130] sm:$0xff]
  %v432 = vld [vmem:[%s2 + $0x138] sm:$0xff]
  %v433 = vld [vmem:[%s2 + $0x140] sm:$0xff]
  %v434 = vld [vmem:[%s2 + $0x148] sm:$0xff]
  %v435 = vld [vmem:[%s2 + $0x150] sm:$0xff]
  %v436 = vld [vmem:[%s2 + $0x158] sm:$0xff]
  %v437 = vld [vmem:[%s2 + $0x160] sm:$0xff]
  %v438 = vld [vmem:[%s2 + $0x168] sm:$0xff]
  %v439 = vld [vmem:[%s2 + $0x170] sm:$0xff]
  %v440 = vld [vmem:[%s2 + $0x178] sm:$0xff]
  %v441 = vld [vmem:[%s2 + $0x180] sm:$0xff]
  %v442 = vld [vmem:[%s2 + $0x188] sm:$0xff]
  %v443 = vld [vmem:[%s2 + $0x190] sm:$0xff]
  %v444 = vld [vmem:[%s2 + $0x198] sm:$0xff]
  %v445 = vld [vmem:[%s2 + $0x1a0] sm:$0xff]
  %v446 = vld [vmem:[%s2 + $0x1a8] sm:$0xff]
  %v447 = vld [vmem:[%s2 + $0x1b0] sm:$0xff]
  %v448 = vld [vmem:[%s2 + $0x1b8] sm:$0xff]
  %v449 = vld [vmem:[%s2 + $0x1c0] sm:$0xff]
  %v450 = vld [vmem:[%s2 + $0x1c8] sm:$0xff]
  %v451 = vld [vmem:[%s2 + $0x1d0] sm:$0xff]
  %v452 = vld [vmem:[%s2 + $0x1d8] sm:$0xff]
  %v453 = vld [vmem:[%s2 + $0x1e0] sm:$0xff]
  %v454 = vld [vmem:[%s2 + $0x1e8] sm:$0xff]
  %v455 = vld [vmem:[%s2 + $0x1f0] sm:$0xff]
  %v456 = vld [vmem:[%s2 + $0x1f8] sm:$0xff]
  %457 = vmatprep.subr.mxu0 %v394
  %458 = vmatpush1.msra.mxu0 %v393
  %459 = vmatprep.subr.mxu0 %v398
  %460 = vmatpush1.msra.mxu0 %v397
  %461 = vmatprep.subr.mxu0 %v402
  %462 = vmatpush1.msra.mxu0 %v401
  %463 = vmatprep.subr.mxu0 %v406
  %464 = vmatpush1.msra.mxu0 %v405
  %465 = vmatprep.subr.mxu0 %v410
  %466 = vmatpush1.msra.mxu0 %v409
  %467 = vmatprep.subr.mxu0 %v414
  %468 = vmatpush1.msra.mxu0 %v413
  %469 = vmatprep.subr.mxu0 %v418
  %470 = vmatpush1.msra.mxu0 %v417
  %471 = vmatprep.subr.mxu0 %v422
  %472 = vmatpush1.msra.mxu0 %v421
  %473 = vmatprep.subr.mxu0 %v426
  %474 = vmatpush1.msra.mxu0 %v425
  %475 = vmatprep.subr.mxu0 %v430
  %476 = vmatpush1.msra.mxu0 %v429
  %477 = vmatprep.subr.mxu0 %v434
  %478 = vmatpush1.msra.mxu0 %v433
  %479 = vmatprep.subr.mxu0 %v438
  %480 = vmatpush1.msra.mxu0 %v437
  %481 = vmatprep.subr.mxu0 %v442
  %482 = vmatpush1.msra.mxu0 %v441
  %483 = vmatprep.subr.mxu0 %v446
  %484 = vmatpush1.msra.mxu0 %v445
  %485 = vmatprep.subr.mxu0 %v450
  %486 = vmatpush1.msra.mxu0 %v449
  %487 = vmatprep.subr.mxu0 %v454
  %488 = vmatpush1.msra.mxu0 %v453
  %489 = vmatprep.subr.mxu0 0.0
  %490 = vmatpush1.msra.mxu0 0.0
  %491 = vmatprep.subr.mxu0 0.0
  %492 = vmatpush1.msra.mxu0 0.0
  %493 = vmatprep.subr.mxu0 0.0
  %494 = vmatpush1.msra.mxu0 0.0
  %495 = vmatprep.subr.mxu0 0.0
  %496 = vmatpush1.msra.mxu0 0.0
  %497 = vmatprep.subr.mxu0 0.0
  %498 = vmatpush1.msra.mxu0 0.0
  %499 = vmatprep.subr.mxu0 0.0
  %500 = vmatpush1.msra.mxu0 0.0
  %501 = vmatprep.subr.mxu0 0.0
  %502 = vmatpush1.msra.mxu0 0.0
  %503 = vmatprep.subr.mxu0 0.0
  %504 = vmatpush1.msra.mxu0 0.0
  %505 = vmatprep.subr.mxu0 0.0
  %506 = vmatpush1.msra.mxu0 0.0
  %507 = vmatprep.subr.mxu0 0.0
  %508 = vmatpush1.msra.mxu0 0.0
  %509 = vmatprep.subr.mxu0 0.0
  %510 = vmatpush1.msra.mxu0 0.0
  %511 = vmatprep.subr.mxu0 0.0
  %512 = vmatpush1.msra.mxu0 0.0
  %513 = vmatprep.subr.mxu0 0.0
  %514 = vmatpush1.msra.mxu0 0.0
  %515 = vmatprep.subr.mxu0 0.0
  %516 = vmatpush1.msra.mxu0 0.0
  %517 = vmatprep.subr.mxu0 0.0
  %518 = vmatpush1.msra.mxu0 0.0
  %519 = vmatprep.subr.mxu0 0.0
  %520 = vmatpush1.msra.mxu0 0.0
  %521 = vmatprep.mubr.f32.mxu0 0.0
  %522 = vmatmul.mubr.f32.gmra.mrb[0].mxu0 0.0
  %v523 = vpop.f32.mrb[0].mxu0
  %v524 = vadd.f32 0.0, %v523
  %v525 = vpop.f32.mrb[0].mxu0
  %v526 = vadd.f32 0.0, %v525
  %527 = vdwg.mxu0
  %528 = vmatprep.subr.mxu0 %v396
  %529 = vmatpush1.msra.mxu0 %v395
  %530 = vmatprep.subr.mxu0 %v400
  %531 = vmatpush1.msra.mxu0 %v399
  %532 = vmatprep.subr.mxu0 %v404
  %533 = vmatpush1.msra.mxu0 %v403
  %534 = vmatprep.subr.mxu0 %v408
  %535 = vmatpush1.msra.mxu0 %v407
  %536 = vmatprep.subr.mxu0 %v412
  %537 = vmatpush1.msra.mxu0 %v411
  %538 = vmatprep.subr.mxu0 %v416
  %539 = vmatpush1.msra.mxu0 %v415
  %540 = vmatprep.subr.mxu0 %v420
  %541 = vmatpush1.msra.mxu0 %v419
  %542 = vmatprep.subr.mxu0 %v424
  %543 = vmatpush1.msra.mxu0 %v423
  %544 = vmatprep.subr.mxu0 %v428
  %545 = vmatpush1.msra.mxu0 %v427
  %546 = vmatprep.subr.mxu0 %v432
  %547 = vmatpush1.msra.mxu0 %v431
  %548 = vmatprep.subr.mxu0 %v436
  %549 = vmatpush1.msra.mxu0 %v435
  %550 = vmatprep.subr.mxu0 %v440
  %551 = vmatpush1.msra.mxu0 %v439
  %552 = vmatprep.subr.mxu0 %v444
  %553 = vmatpush1.msra.mxu0 %v443
  %554 = vmatprep.subr.mxu0 %v448
  %555 = vmatpush1.msra.mxu0 %v447
  %556 = vmatprep.subr.mxu0 %v452
  %557 = vmatpush1.msra.mxu0 %v451
  %558 = vmatprep.subr.mxu0 %v456
  %559 = vmatpush1.msra.mxu0 %v455
  %560 = vmatprep.subr.mxu0 0.0
  %561 = vmatpush1.msra.mxu0 0.0
  %562 = vmatprep.subr.mxu0 0.0
  %563 = vmatpush1.msra.mxu0 0.0
  %564 = vmatprep.subr.mxu0 0.0
  %565 = vmatpush1.msra.mxu0 0.0
  %566 = vmatprep.subr.mxu0 0.0
  %567 = vmatpush1.msra.mxu0 0.0
  %568 = vmatprep.subr.mxu0 0.0
  %569 = vmatpush1.msra.mxu0 0.0
  %570 = vmatprep.subr.mxu0 0.0
  %571 = vmatpush1.msra.mxu0 0.0
  %572 = vmatprep.subr.mxu0 0.0
  %573 = vmatpush1.msra.mxu0 0.0
  %574 = vmatprep.subr.mxu0 0.0
  %575 = vmatpush1.msra.mxu0 0.0
  %576 = vmatprep.subr.mxu0 0.0
  %577 = vmatpush1.msra.mxu0 0.0
  %578 = vmatprep.subr.mxu0 0.0
  %579 = vmatpush1.msra.mxu0 0.0
  %580 = vmatprep.subr.mxu0 0.0
  %581 = vmatpush1.msra.mxu0 0.0
  %582 = vmatprep.subr.mxu0 0.0
  %583 = vmatpush1.msra.mxu0 0.0
  %584 = vmatprep.subr.mxu0 0.0
  %585 = vmatpush1.msra.mxu0 0.0
  %586 = vmatprep.subr.mxu0 0.0
  %587 = vmatpush1.msra.mxu0 0.0
  %588 = vmatprep.subr.mxu0 0.0
  %589 = vmatpush1.msra.mxu0 0.0
  %590 = vmatprep.subr.mxu0 0.0
  %591 = vmatpush1.msra.mxu0 0.0
  %592 = vmatprep.mubr.f32.mxu0 0.0
  %593 = vmatmul.mubr.f32.gmra.mrb[0].mxu0 0.0
  %v594 = vpop.f32.mrb[0].mxu0
  %v595 = vadd.f32 0.0, %v594
  %v596 = vpop.f32.mrb[0].mxu0
  %v597 = vadd.f32 0.0, %v596
  %598 = vdwg.mxu0
  %v599 = vadd.f32 %v389, %v524
  %v600 = vadd.f32 %v390, %v526
  %v601 = vadd.f32 %v391, %v595
  %v602 = vadd.f32 %v392, %v597
  %v603 = vxor.u32 %v599, 2147483648
  %v604 = vmul.f32 %v603, 1.442695
  %v605 = vpow.pop %v604
  %v606 = vadd.f32 %v605, 1.0
  %v607 = vrcp.pop %v606
  %v608 = vmul.f32 1.0, %v607
  %v609 = vxor.u32 %v600, 2147483648
  %v610 = vmul.f32 %v609, 1.442695
  %v611 = vpow.pop %v610
  %v612 = vadd.f32 %v611, 1.0
  %v613 = vrcp.pop %v612
  %v614 = vmul.f32 1.0, %v613
  %v615 = vtanh.pop %v601
  %v616 = vxor.u32 %v602, 2147483648
  %v617 = vmul.f32 %v616, 1.442695
  %v618 = vpow.pop %v617
  %v619 = vadd.f32 %v618, 1.0
  %v620 = vrcp.pop %v619
  %v621 = vmul.f32 1.0, %v620
  %v622 = vmul.f32 %v614, 0.0
  %v623 = vmul.f32 %v608, %v615
  %v624 = vadd.f32 %v622, %v623
  %v625 = vtanh.pop %v624
  %v626 = vmul.f32 %v621, %v625
  %627 = vst [vmem:[#allocation3] sm:$0xff] %v626
  %s628 = smul.u32 1, 4
  %s629 = smul.addr %s628, 8
  %s630 = scalar_lea.vmem [#allocation2], %s629
  %v631 = vld [vmem:[%s630] sm:$0xff]
  %v632 = vld [vmem:[%s630 + $0x8] sm:$0xff]
  %v633 = vld [vmem:[%s630 + $0x10] sm:$0xff]
  %v634 = vld [vmem:[%s630 + $0x18] sm:$0xff]
  %v635 = vld [vmem:[%s2] sm:$0xff]
  %v636 = vld [vmem:[%s2 + $0x8] sm:$0xff]
  %v637 = vld [vmem:[%s2 + $0x10] sm:$0xff]
  %v638 = vld [vmem:[%s2 + $0x18] sm:$0xff]
  %v639 = vld [vmem:[%s2 + $0x20] sm:$0xff]
  %v640 = vld [vmem:[%s2 + $0x28] sm:$0xff]
  %v641 = vld [vmem:[%s2 + $0x30] sm:$0xff]
  %v642 = vld [vmem:[%s2 + $0x38] sm:$0xff]
  %v643 = vld [vmem:[%s2 + $0x40] sm:$0xff]
  %v644 = vld [vmem:[%s2 + $0x48] sm:$0xff]
  %v645 = vld [vmem:[%s2 + $0x50] sm:$0xff]
  %v646 = vld [vmem:[%s2 + $0x58] sm:$0xff]
  %v647 = vld [vmem:[%s2 + $0x60] sm:$0xff]
  %v648 = vld [vmem:[%s2 + $0x68] sm:$0xff]
  %v649 = vld [vmem:[%s2 + $0x70] sm:$0xff]
  %v650 = vld [vmem:[%s2 + $0x78] sm:$0xff]
  %v651 = vld [vmem:[%s2 + $0x80] sm:$0xff]
  %v652 = vld [vmem:[%s2 + $0x88] sm:$0xff]
  %v653 = vld [vmem:[%s2 + $0x90] sm:$0xff]
  %v654 = vld [vmem:[%s2 + $0x98] sm:$0xff]
  %v655 = vld [vmem:[%s2 + $0xa0] sm:$0xff]
  %v656 = vld [vmem:[%s2 + $0xa8] sm:$0xff]
  %v657 = vld [vmem:[%s2 + $0xb0] sm:$0xff]
  %v658 = vld [vmem:[%s2 + $0xb8] sm:$0xff]
  %v659 = vld [vmem:[%s2 + $0xc0] sm:$0xff]
  %v660 = vld [vmem:[%s2 + $0xc8] sm:$0xff]
  %v661 = vld [vmem:[%s2 + $0xd0] sm:$0xff]
  %v662 = vld [vmem:[%s2 + $0xd8] sm:$0xff]
  %v663 = vld [vmem:[%s2 + $0xe0] sm:$0xff]
  %v664 = vld [vmem:[%s2 + $0xe8] sm:$0xff]
  %v665 = vld [vmem:[%s2 + $0xf0] sm:$0xff]
  %v666 = vld [vmem:[%s2 + $0xf8] sm:$0xff]
  %v667 = vld [vmem:[%s2 + $0x100] sm:$0xff]
  %v668 = vld [vmem:[%s2 + $0x108] sm:$0xff]
  %v669 = vld [vmem:[%s2 + $0x110] sm:$0xff]
  %v670 = vld [vmem:[%s2 + $0x118] sm:$0xff]
  %v671 = vld [vmem:[%s2 + $0x120] sm:$0xff]
  %v672 = vld [vmem:[%s2 + $0x128] sm:$0xff]
  %v673 = vld [vmem:[%s2 + $0x130] sm:$0xff]
  %v674 = vld [vmem:[%s2 + $0x138] sm:$0xff]
  %v675 = vld [vmem:[%s2 + $0x140] sm:$0xff]
  %v676 = vld [vmem:[%s2 + $0x148] sm:$0xff]
  %v677 = vld [vmem:[%s2 + $0x150] sm:$0xff]
  %v678 = vld [vmem:[%s2 + $0x158] sm:$0xff]
  %v679 = vld [vmem:[%s2 + $0x160] sm:$0xff]
  %v680 = vld [vmem:[%s2 + $0x168] sm:$0xff]
  %v681 = vld [vmem:[%s2 + $0x170] sm:$0xff]
  %v682 = vld [vmem:[%s2 + $0x178] sm:$0xff]
  %v683 = vld [vmem:[%s2 + $0x180] sm:$0xff]
  %v684 = vld [vmem:[%s2 + $0x188] sm:$0xff]
  %v685 = vld [vmem:[%s2 + $0x190] sm:$0xff]
  %v686 = vld [vmem:[%s2 + $0x198] sm:$0xff]
  %v687 = vld [vmem:[%s2 + $0x1a0] sm:$0xff]
  %v688 = vld [vmem:[%s2 + $0x1a8] sm:$0xff]
  %v689 = vld [vmem:[%s2 + $0x1b0] sm:$0xff]
  %v690 = vld [vmem:[%s2 + $0x1b8] sm:$0xff]
  %v691 = vld [vmem:[%s2 + $0x1c0] sm:$0xff]
  %v692 = vld [vmem:[%s2 + $0x1c8] sm:$0xff]
  %v693 = vld [vmem:[%s2 + $0x1d0] sm:$0xff]
  %v694 = vld [vmem:[%s2 + $0x1d8] sm:$0xff]
  %v695 = vld [vmem:[%s2 + $0x1e0] sm:$0xff]
  %v696 = vld [vmem:[%s2 + $0x1e8] sm:$0xff]
  %v697 = vld [vmem:[%s2 + $0x1f0] sm:$0xff]
  %v698 = vld [vmem:[%s2 + $0x1f8] sm:$0xff]
  %699 = vmatprep.subr.mxu0 %v636
  %700 = vmatpush1.msra.mxu0 %v635
  %701 = vmatprep.subr.mxu0 %v640
  %702 = vmatpush1.msra.mxu0 %v639
  %703 = vmatprep.subr.mxu0 %v644
  %704 = vmatpush1.msra.mxu0 %v643
  %705 = vmatprep.subr.mxu0 %v648
  %706 = vmatpush1.msra.mxu0 %v647
  %707 = vmatprep.subr.mxu0 %v652
  %708 = vmatpush1.msra.mxu0 %v651
  %709 = vmatprep.subr.mxu0 %v656
  %710 = vmatpush1.msra.mxu0 %v655
  %711 = vmatprep.subr.mxu0 %v660
  %712 = vmatpush1.msra.mxu0 %v659
  %713 = vmatprep.subr.mxu0 %v664
  %714 = vmatpush1.msra.mxu0 %v663
  %715 = vmatprep.subr.mxu0 %v668
  %716 = vmatpush1.msra.mxu0 %v667
  %717 = vmatprep.subr.mxu0 %v672
  %718 = vmatpush1.msra.mxu0 %v671
  %719 = vmatprep.subr.mxu0 %v676
  %720 = vmatpush1.msra.mxu0 %v675
  %721 = vmatprep.subr.mxu0 %v680
  %722 = vmatpush1.msra.mxu0 %v679
  %723 = vmatprep.subr.mxu0 %v684
  %724 = vmatpush1.msra.mxu0 %v683
  %725 = vmatprep.subr.mxu0 %v688
  %726 = vmatpush1.msra.mxu0 %v687
  %727 = vmatprep.subr.mxu0 %v692
  %728 = vmatpush1.msra.mxu0 %v691
  %729 = vmatprep.subr.mxu0 %v696
  %730 = vmatpush1.msra.mxu0 %v695
  %731 = vmatprep.subr.mxu0 0.0
  %732 = vmatpush1.msra.mxu0 0.0
  %733 = vmatprep.subr.mxu0 0.0
  %734 = vmatpush1.msra.mxu0 0.0
  %735 = vmatprep.subr.mxu0 0.0
  %736 = vmatpush1.msra.mxu0 0.0
  %737 = vmatprep.subr.mxu0 0.0
  %738 = vmatpush1.msra.mxu0 0.0
  %739 = vmatprep.subr.mxu0 0.0
  %740 = vmatpush1.msra.mxu0 0.0
  %741 = vmatprep.subr.mxu0 0.0
  %742 = vmatpush1.msra.mxu0 0.0
  %743 = vmatprep.subr.mxu0 0.0
  %744 = vmatpush1.msra.mxu0 0.0
  %745 = vmatprep.subr.mxu0 0.0
  %746 = vmatpush1.msra.mxu0 0.0
  %747 = vmatprep.subr.mxu0 0.0
  %748 = vmatpush1.msra.mxu0 0.0
  %749 = vmatprep.subr.mxu0 0.0
  %750 = vmatpush1.msra.mxu0 0.0
  %751 = vmatprep.subr.mxu0 0.0
  %752 = vmatpush1.msra.mxu0 0.0
  %753 = vmatprep.subr.mxu0 0.0
  %754 = vmatpush1.msra.mxu0 0.0
  %755 = vmatprep.subr.mxu0 0.0
  %756 = vmatpush1.msra.mxu0 0.0
  %757 = vmatprep.subr.mxu0 0.0
  %758 = vmatpush1.msra.mxu0 0.0
  %759 = vmatprep.subr.mxu0 0.0
  %760 = vmatpush1.msra.mxu0 0.0
  %761 = vmatprep.subr.mxu0 0.0
  %762 = vmatpush1.msra.mxu0 0.0
  %763 = vmatprep.mubr.f32.mxu0 0.0
  %764 = vmatmul.mubr.f32.gmra.mrb[0].mxu0 %v626
  %v765 = vpop.f32.mrb[0].mxu0
  %v766 = vadd.f32 0.0, %v765
  %v767 = vpop.f32.mrb[0].mxu0
  %v768 = vadd.f32 0.0, %v767
  %769 = vdwg.mxu0
  %770 = vmatprep.subr.mxu0 %v638
  %771 = vmatpush1.msra.mxu0 %v637
  %772 = vmatprep.subr.mxu0 %v642
  %773 = vmatpush1.msra.mxu0 %v641
  %774 = vmatprep.subr.mxu0 %v646
  %775 = vmatpush1.msra.mxu0 %v645
  %776 = vmatprep.subr.mxu0 %v650
  %777 = vmatpush1.msra.mxu0 %v649
  %778 = vmatprep.subr.mxu0 %v654
  %779 = vmatpush1.msra.mxu0 %v653
  %780 = vmatprep.subr.mxu0 %v658
  %781 = vmatpush1.msra.mxu0 %v657
  %782 = vmatprep.subr.mxu0 %v662
  %783 = vmatpush1.msra.mxu0 %v661
  %784 = vmatprep.subr.mxu0 %v666
  %785 = vmatpush1.msra.mxu0 %v665
  %786 = vmatprep.subr.mxu0 %v670
  %787 = vmatpush1.msra.mxu0 %v669
  %788 = vmatprep.subr.mxu0 %v674
  %789 = vmatpush1.msra.mxu0 %v673
  %790 = vmatprep.subr.mxu0 %v678
  %791 = vmatpush1.msra.mxu0 %v677
  %792 = vmatprep.subr.mxu0 %v682
  %793 = vmatpush1.msra.mxu0 %v681
  %794 = vmatprep.subr.mxu0 %v686
  %795 = vmatpush1.msra.mxu0 %v685
  %796 = vmatprep.subr.mxu0 %v690
  %797 = vmatpush1.msra.mxu0 %v689
  %798 = vmatprep.subr.mxu0 %v694
  %799 = vmatpush1.msra.mxu0 %v693
  %800 = vmatprep.subr.mxu0 %v698
  %801 = vmatpush1.msra.mxu0 %v697
  %802 = vmatprep.subr.mxu0 0.0
  %803 = vmatpush1.msra.mxu0 0.0
  %804 = vmatprep.subr.mxu0 0.0
  %805 = vmatpush1.msra.mxu0 0.0
  %806 = vmatprep.subr.mxu0 0.0
  %807 = vmatpush1.msra.mxu0 0.0
  %808 = vmatprep.subr.mxu0 0.0
  %809 = vmatpush1.msra.mxu0 0.0
  %810 = vmatprep.subr.mxu0 0.0
  %811 = vmatpush1.msra.mxu0 0.0
  %812 = vmatprep.subr.mxu0 0.0
  %813 = vmatpush1.msra.mxu0 0.0
  %814 = vmatprep.subr.mxu0 0.0
  %815 = vmatpush1.msra.mxu0 0.0
  %816 = vmatprep.subr.mxu0 0.0
  %817 = vmatpush1.msra.mxu0 0.0
  %818 = vmatprep.subr.mxu0 0.0
  %819 = vmatpush1.msra.mxu0 0.0
  %820 = vmatprep.subr.mxu0 0.0
  %821 = vmatpush1.msra.mxu0 0.0
  %822 = vmatprep.subr.mxu0 0.0
  %823 = vmatpush1.msra.mxu0 0.0
  %824 = vmatprep.subr.mxu0 0.0
  %825 = vmatpush1.msra.mxu0 0.0
  %826 = vmatprep.subr.mxu0 0.0
  %827 = vmatpush1.msra.mxu0 0.0
  %828 = vmatprep.subr.mxu0 0.0
  %829 = vmatpush1.msra.mxu0 0.0
  %830 = vmatprep.subr.mxu0 0.0
  %831 = vmatpush1.msra.mxu0 0.0
  %832 = vmatprep.subr.mxu0 0.0
  %833 = vmatpush1.msra.mxu0 0.0
  %834 = vmatprep.mubr.f32.mxu0 0.0
  %835 = vmatmul.mubr.f32.gmra.mrb[0].mxu0 %v626
  %v836 = vpop.f32.mrb[0].mxu0
  %v837 = vadd.f32 0.0, %v836
  %v838 = vpop.f32.mrb[0].mxu0
  %v839 = vadd.f32 0.0, %v838
  %840 = vdwg.mxu0
  %v841 = vadd.f32 %v631, %v766
  %v842 = vadd.f32 %v632, %v768
  %v843 = vadd.f32 %v633, %v837
  %v844 = vadd.f32 %v634, %v839
  %v845 = vxor.u32 %v841, 2147483648
  %v846 = vmul.f32 %v845, 1.442695
  %v847 = vpow.pop %v846
  %v848 = vadd.f32 %v847, 1.0
  %v849 = vrcp.pop %v848
  %v850 = vmul.f32 1.0, %v849
  %v851 = vxor.u32 %v842, 2147483648
  %v852 = vmul.f32 %v851, 1.442695
  %v853 = vpow.pop %v852
  %v854 = vadd.f32 %v853, 1.0
  %v855 = vrcp.pop %v854
  %v856 = vmul.f32 1.0, %v855
  %v857 = vtanh.pop %v843
  %v858 = vxor.u32 %v844, 2147483648
  %v859 = vmul.f32 %v858, 1.442695
  %v860 = vpow.pop %v859
  %v861 = vadd.f32 %v860, 1.0
  %v862 = vrcp.pop %v861
  %v863 = vmul.f32 1.0, %v862
  %v864 = vmul.f32 %v856, %v624
  %v865 = vmul.f32 %v850, %v857
  %v866 = vadd.f32 %v864, %v865
  %v867 = vtanh.pop %v866
  %v868 = vmul.f32 %v863, %v867
  %s869 = scalar_lea.vmem [#allocation3], 8
  %870 = vst [vmem:[%s869] sm:$0xff] %v868
  %s871 = smul.u32 2, 4
  %s872 = smul.addr %s871, 8
  %s873 = scalar_lea.vmem [#allocation2], %s872
  %v874 = vld [vmem:[%s873] sm:$0xff]
  %v875 = vld [vmem:[%s873 + $0x8] sm:$0xff]
  %v876 = vld [vmem:[%s873 + $0x10] sm:$0xff]
  %v877 = vld [vmem:[%s873 + $0x18] sm:$0xff]
  %v878 = vld [vmem:[%s2] sm:$0xff]
  %v879 = vld [vmem:[%s2 + $0x8] sm:$0xff]
  %v880 = vld [vmem:[%s2 + $0x10] sm:$0xff]
  %v881 = vld [vmem:[%s2 + $0x18] sm:$0xff]
  %v882 = vld [vmem:[%s2 + $0x20] sm:$0xff]
  %v883 = vld [vmem:[%s2 + $0x28] sm:$0xff]
  %v884 = vld [vmem:[%s2 + $0x30] sm:$0xff]
  %v885 = vld [vmem:[%s2 + $0x38] sm:$0xff]
  %v886 = vld [vmem:[%s2 + $0x40] sm:$0xff]
  %v887 = vld [vmem:[%s2 + $0x48] sm:$0xff]
  %v888 = vld [vmem:[%s2 + $0x50] sm:$0xff]
  %v889 = vld [vmem:[%s2 + $0x58] sm:$0xff]
  %v890 = vld [vmem:[%s2 + $0x60] sm:$0xff]
  %v891 = vld [vmem:[%s2 + $0x68] sm:$0xff]
  %v892 = vld [vmem:[%s2 + $0x70] sm:$0xff]
  %v893 = vld [vmem:[%s2 + $0x78] sm:$0xff]
  %v894 = vld [vmem:[%s2 + $0x80] sm:$0xff]
  %v895 = vld [vmem:[%s2 + $0x88] sm:$0xff]
  %v896 = vld [vmem:[%s2 + $0x90] sm:$0xff]
  %v897 = vld [vmem:[%s2 + $0x98] sm:$0xff]
  %v898 = vld [vmem:[%s2 + $0xa0] sm:$0xff]
  %v899 = vld [vmem:[%s2 + $0xa8] sm:$0xff]
  %v900 = vld [vmem:[%s2 + $0xb0] sm:$0xff]
  %v901 = vld [vmem:[%s2 + $0xb8] sm:$0xff]
  %v902 = vld [vmem:[%s2 + $0xc0] sm:$0xff]
  %v903 = vld [vmem:[%s2 + $0xc8] sm:$0xff]
  %v904 = vld [vmem:[%s2 + $0xd0] sm:$0xff]
  %v905 = vld [vmem:[%s2 + $0xd8] sm:$0xff]
  %v906 = vld [vmem:[%s2 + $0xe0] sm:$0xff]
  %v907 = vld [vmem:[%s2 + $0xe8] sm:$0xff]
  %v908 = vld [vmem:[%s2 + $0xf0] sm:$0xff]
  %v909 = vld [vmem:[%s2 + $0xf8] sm:$0xff]
  %v910 = vld [vmem:[%s2 + $0x100] sm:$0xff]
  %v911 = vld [vmem:[%s2 + $0x108] sm:$0xff]
  %v912 = vld [vmem:[%s2 + $0x110] sm:$0xff]
  %v913 = vld [vmem:[%s2 + $0x118] sm:$0xff]
  %v914 = vld [vmem:[%s2 + $0x120] sm:$0xff]
  %v915 = vld [vmem:[%s2 + $0x128] sm:$0xff]
  %v916 = vld [vmem:[%s2 + $0x130] sm:$0xff]
  %v917 = vld [vmem:[%s2 + $0x138] sm:$0xff]
  %v918 = vld [vmem:[%s2 + $0x140] sm:$0xff]
  %v919 = vld [vmem:[%s2 + $0x148] sm:$0xff]
  %v920 = vld [vmem:[%s2 + $0x150] sm:$0xff]
  %v921 = vld [vmem:[%s2 + $0x158] sm:$0xff]
  %v922 = vld [vmem:[%s2 + $0x160] sm:$0xff]
  %v923 = vld [vmem:[%s2 + $0x168] sm:$0xff]
  %v924 = vld [vmem:[%s2 + $0x170] sm:$0xff]
  %v925 = vld [vmem:[%s2 + $0x178] sm:$0xff]
  %v926 = vld [vmem:[%s2 + $0x180] sm:$0xff]
  %v927 = vld [vmem:[%s2 + $0x188] sm:$0xff]
  %v928 = vld [vmem:[%s2 + $0x190] sm:$0xff]
  %v929 = vld [vmem:[%s2 + $0x198] sm:$0xff]
  %v930 = vld [vmem:[%s2 + $0x1a0] sm:$0xff]
  %v931 = vld [vmem:[%s2 + $0x1a8] sm:$0xff]
  %v932 = vld [vmem:[%s2 + $0x1b0] sm:$0xff]
  %v933 = vld [vmem:[%s2 + $0x1b8] sm:$0xff]
  %v934 = vld [vmem:[%s2 + $0x1c0] sm:$0xff]
  %v935 = vld [vmem:[%s2 + $0x1c8] sm:$0xff]
  %v936 = vld [vmem:[%s2 + $0x1d0] sm:$0xff]
  %v937 = vld [vmem:[%s2 + $0x1d8] sm:$0xff]
  %v938 = vld [vmem:[%s2 + $0x1e0] sm:$0xff]
  %v939 = vld [vmem:[%s2 + $0x1e8] sm:$0xff]
  %v940 = vld [vmem:[%s2 + $0x1f0] sm:$0xff]
  %v941 = vld [vmem:[%s2 + $0x1f8] sm:$0xff]
  %942 = vmatprep.subr.mxu0 %v879
  %943 = vmatpush1.msra.mxu0 %v878
  %944 = vmatprep.subr.mxu0 %v883
  %945 = vmatpush1.msra.mxu0 %v882
  %946 = vmatprep.subr.mxu0 %v887
  %947 = vmatpush1.msra.mxu0 %v886
  %948 = vmatprep.subr.mxu0 %v891
  %949 = vmatpush1.msra.mxu0 %v890
  %950 = vmatprep.subr.mxu0 %v895
  %951 = vmatpush1.msra.mxu0 %v894
  %952 = vmatprep.subr.mxu0 %v899
  %953 = vmatpush1.msra.mxu0 %v898
  %954 = vmatprep.subr.mxu0 %v903
  %955 = vmatpush1.msra.mxu0 %v902
  %956 = vmatprep.subr.mxu0 %v907
  %957 = vmatpush1.msra.mxu0 %v906
  %958 = vmatprep.subr.mxu0 %v911
  %959 = vmatpush1.msra.mxu0 %v910
  %960 = vmatprep.subr.mxu0 %v915
  %961 = vmatpush1.msra.mxu0 %v914
  %962 = vmatprep.subr.mxu0 %v919
  %963 = vmatpush1.msra.mxu0 %v918
  %964 = vmatprep.subr.mxu0 %v923
  %965 = vmatpush1.msra.mxu0 %v922
  %966 = vmatprep.subr.mxu0 %v927
  %967 = vmatpush1.msra.mxu0 %v926
  %968 = vmatprep.subr.mxu0 %v931
  %969 = vmatpush1.msra.mxu0 %v930
  %970 = vmatprep.subr.mxu0 %v935
  %971 = vmatpush1.msra.mxu0 %v934
  %972 = vmatprep.subr.mxu0 %v939
  %973 = vmatpush1.msra.mxu0 %v938
  %974 = vmatprep.subr.mxu0 0.0
  %975 = vmatpush1.msra.mxu0 0.0
  %976 = vmatprep.subr.mxu0 0.0
  %977 = vmatpush1.msra.mxu0 0.0
  %978 = vmatprep.subr.mxu0 0.0
  %979 = vmatpush1.msra.mxu0 0.0
  %980 = vmatprep.subr.mxu0 0.0
  %981 = vmatpush1.msra.mxu0 0.0
  %982 = vmatprep.subr.mxu0 0.0
  %983 = vmatpush1.msra.mxu0 0.0
  %984 = vmatprep.subr.mxu0 0.0
  %985 = vmatpush1.msra.mxu0 0.0
  %986 = vmatprep.subr.mxu0 0.0
  %987 = vmatpush1.msra.mxu0 0.0
  %988 = vmatprep.subr.mxu0 0.0
  %989 = vmatpush1.msra.mxu0 0.0
  %990 = vmatprep.subr.mxu0 0.0
  %991 = vmatpush1.msra.mxu0 0.0
  %992 = vmatprep.subr.mxu0 0.0
  %993 = vmatpush1.msra.mxu0 0.0
  %994 = vmatprep.subr.mxu0 0.0
  %995 = vmatpush1.msra.mxu0 0.0
  %996 = vmatprep.subr.mxu0 0.0
  %997 = vmatpush1.msra.mxu0 0.0
  %998 = vmatprep.subr.mxu0 0.0
  %999 = vmatpush1.msra.mxu0 0.0
  %1000 = vmatprep.subr.mxu0 0.0
  %1001 = vmatpush1.msra.mxu0 0.0
  %1002 = vmatprep.subr.mxu0 0.0
  %1003 = vmatpush1.msra.mxu0 0.0
  %1004 = vmatprep.subr.mxu0 0.0
  %1005 = vmatpush1.msra.mxu0 0.0
  %1006 = vmatprep.mubr.f32.mxu0 0.0
  %1007 = vmatmul.mubr.f32.gmra.mrb[0].mxu0 %v868
  %v1008 = vpop.f32.mrb[0].mxu0
  %v1009 = vadd.f32 0.0, %v1008
  %v1010 = vpop.f32.mrb[0].mxu0
  %v1011 = vadd.f32 0.0, %v1010
  %1012 = vdwg.mxu0
  %1013 = vmatprep.subr.mxu0 %v881
  %1014 = vmatpush1.msra.mxu0 %v880
  %1015 = vmatprep.subr.mxu0 %v885
  %1016 = vmatpush1.msra.mxu0 %v884
  %1017 = vmatprep.subr.mxu0 %v889
  %1018 = vmatpush1.msra.mxu0 %v888
  %1019 = vmatprep.subr.mxu0 %v893
  %1020 = vmatpush1.msra.mxu0 %v892
  %1021 = vmatprep.subr.mxu0 %v897
  %1022 = vmatpush1.msra.mxu0 %v896
  %1023 = vmatprep.subr.mxu0 %v901
  %1024 = vmatpush1.msra.mxu0 %v900
  %1025 = vmatprep.subr.mxu0 %v905
  %1026 = vmatpush1.msra.mxu0 %v904
  %1027 = vmatprep.subr.mxu0 %v909
  %1028 = vmatpush1.msra.mxu0 %v908
  %1029 = vmatprep.subr.mxu0 %v913
  %1030 = vmatpush1.msra.mxu0 %v912
  %1031 = vmatprep.subr.mxu0 %v917
  %1032 = vmatpush1.msra.mxu0 %v916
  %1033 = vmatprep.subr.mxu0 %v921
  %1034 = vmatpush1.msra.mxu0 %v920
  %1035 = vmatprep.subr.mxu0 %v925
  %1036 = vmatpush1.msra.mxu0 %v924
  %1037 = vmatprep.subr.mxu0 %v929
  %1038 = vmatpush1.msra.mxu0 %v928
  %1039 = vmatprep.subr.mxu0 %v933
  %1040 = vmatpush1.msra.mxu0 %v932
  %1041 = vmatprep.subr.mxu0 %v937
  %1042 = vmatpush1.msra.mxu0 %v936
  %1043 = vmatprep.subr.mxu0 %v941
  %1044 = vmatpush1.msra.mxu0 %v940
  %1045 = vmatprep.subr.mxu0 0.0
  %1046 = vmatpush1.msra.mxu0 0.0
  %1047 = vmatprep.subr.mxu0 0.0
  %1048 = vmatpush1.msra.mxu0 0.0
  %1049 = vmatprep.subr.mxu0 0.0
  %1050 = vmatpush1.msra.mxu0 0.0
  %1051 = vmatprep.subr.mxu0 0.0
  %1052 = vmatpush1.msra.mxu0 0.0
  %1053 = vmatprep.subr.mxu0 0.0
  %1054 = vmatpush1.msra.mxu0 0.0
  %1055 = vmatprep.subr.mxu0 0.0
  %1056 = vmatpush1.msra.mxu0 0.0
  %1057 = vmatprep.subr.mxu0 0.0
  %1058 = vmatpush1.msra.mxu0 0.0
  %1059 = vmatprep.subr.mxu0 0.0
  %1060 = vmatpush1.msra.mxu0 0.0
  %1061 = vmatprep.subr.mxu0 0.0
  %1062 = vmatpush1.msra.mxu0 0.0
  %1063 = vmatprep.subr.mxu0 0.0
  %1064 = vmatpush1.msra.mxu0 0.0
  %1065 = vmatprep.subr.mxu0 0.0
  %1066 = vmatpush1.msra.mxu0 0.0
  %1067 = vmatprep.subr.mxu0 0.0
  %1068 = vmatpush1.msra.mxu0 0.0
  %1069 = vmatprep.subr.mxu0 0.0
  %1070 = vmatpush1.msra.mxu0 0.0
  %1071 = vmatprep.subr.mxu0 0.0
  %1072 = vmatpush1.msra.mxu0 0.0
  %1073 = vmatprep.subr.mxu0 0.0
  %1074 = vmatpush1.msra.mxu0 0.0
  %1075 = vmatprep.subr.mxu0 0.0
  %1076 = vmatpush1.msra.mxu0 0.0
  %1077 = vmatprep.mubr.f32.mxu0 0.0
  %1078 = vmatmul.mubr.f32.gmra.mrb[0].mxu0 %v868
  %v1079 = vpop.f32.mrb[0].mxu0
  %v1080 = vadd.f32 0.0, %v1079
  %v1081 = vpop.f32.mrb[0].mxu0
  %v1082 = vadd.f32 0.0, %v1081
  %1083 = vdwg.mxu0
  %v1084 = vadd.f32 %v874, %v1009
  %v1085 = vadd.f32 %v875, %v1011
  %v1086 = vadd.f32 %v876, %v1080
  %v1087 = vadd.f32 %v877, %v1082
  %v1088 = vxor.u32 %v1084, 2147483648
  %v1089 = vmul.f32 %v1088, 1.442695
  %v1090 = vpow.pop %v1089
  %v1091 = vadd.f32 %v1090, 1.0
  %v1092 = vrcp.pop %v1091
  %v1093 = vmul.f32 1.0, %v1092
  %v1094 = vxor.u32 %v1085, 2147483648
  %v1095 = vmul.f32 %v1094, 1.442695
  %v1096 = vpow.pop %v1095
  %v1097 = vadd.f32 %v1096, 1.0
  %v1098 = vrcp.pop %v1097
  %v1099 = vmul.f32 1.0, %v1098
  %v1100 = vtanh.pop %v1086
  %v1101 = vxor.u32 %v1087, 2147483648
  %v1102 = vmul.f32 %v1101, 1.442695
  %v1103 = vpow.pop %v1102
  %v1104 = vadd.f32 %v1103, 1.0
  %v1105 = vrcp.pop %v1104
  %v1106 = vmul.f32 1.0, %v1105
  %v1107 = vmul.f32 %v1099, %v866
  %v1108 = vmul.f32 %v1093, %v1100
  %v1109 = vadd.f32 %v1107, %v1108
  %v1110 = vtanh.pop %v1109
  %v1111 = vmul.f32 %v1106, %v1110
  %s1112 = scalar_lea.vmem [#allocation3], 16
  %1113 = vst [vmem:[%s1112] sm:$0xff] %v1111
  %s1114 = smul.u32 3, 4
  %s1115 = smul.addr %s1114, 8
  %s1116 = scalar_lea.vmem [#allocation2], %s1115
  %v1117 = vld [vmem:[%s1116] sm:$0xff]
  %v1118 = vld [vmem:[%s1116 + $0x8] sm:$0xff]
  %v1119 = vld [vmem:[%s1116 + $0x10] sm:$0xff]
  %v1120 = vld [vmem:[%s1116 + $0x18] sm:$0xff]
  %v1121 = vld [vmem:[%s2] sm:$0xff]
  %v1122 = vld [vmem:[%s2 + $0x8] sm:$0xff]
  %v1123 = vld [vmem:[%s2 + $0x10] sm:$0xff]
  %v1124 = vld [vmem:[%s2 + $0x18] sm:$0xff]
  %v1125 = vld [vmem:[%s2 + $0x20] sm:$0xff]
  %v1126 = vld [vmem:[%s2 + $0x28] sm:$0xff]
  %v1127 = vld [vmem:[%s2 + $0x30] sm:$0xff]
  %v1128 = vld [vmem:[%s2 + $0x38] sm:$0xff]
  %v1129 = vld [vmem:[%s2 + $0x40] sm:$0xff]
  %v1130 = vld [vmem:[%s2 + $0x48] sm:$0xff]
  %v1131 = vld [vmem:[%s2 + $0x50] sm:$0xff]
  %v1132 = vld [vmem:[%s2 + $0x58] sm:$0xff]
  %v1133 = vld [vmem:[%s2 + $0x60] sm:$0xff]
  %v1134 = vld [vmem:[%s2 + $0x68] sm:$0xff]
  %v1135 = vld [vmem:[%s2 + $0x70] sm:$0xff]
  %v1136 = vld [vmem:[%s2 + $0x78] sm:$0xff]
  %v1137 = vld [vmem:[%s2 + $0x80] sm:$0xff]
  %v1138 = vld [vmem:[%s2 + $0x88] sm:$0xff]
  %v1139 = vld [vmem:[%s2 + $0x90] sm:$0xff]
  %v1140 = vld [vmem:[%s2 + $0x98] sm:$0xff]
  %v1141 = vld [vmem:[%s2 + $0xa0] sm:$0xff]
  %v1142 = vld [vmem:[%s2 + $0xa8] sm:$0xff]
  %v1143 = vld [vmem:[%s2 + $0xb0] sm:$0xff]
  %v1144 = vld [vmem:[%s2 + $0xb8] sm:$0xff]
  %v1145 = vld [vmem:[%s2 + $0xc0] sm:$0xff]
  %v1146 = vld [vmem:[%s2 + $0xc8] sm:$0xff]
  %v1147 = vld [vmem:[%s2 + $0xd0] sm:$0xff]
  %v1148 = vld [vmem:[%s2 + $0xd8] sm:$0xff]
  %v1149 = vld [vmem:[%s2 + $0xe0] sm:$0xff]
  %v1150 = vld [vmem:[%s2 + $0xe8] sm:$0xff]
  %v1151 = vld [vmem:[%s2 + $0xf0] sm:$0xff]
  %v1152 = vld [vmem:[%s2 + $0xf8] sm:$0xff]
  %v1153 = vld [vmem:[%s2 + $0x100] sm:$0xff]
  %v1154 = vld [vmem:[%s2 + $0x108] sm:$0xff]
  %v1155 = vld [vmem:[%s2 + $0x110] sm:$0xff]
  %v1156 = vld [vmem:[%s2 + $0x118] sm:$0xff]
  %v1157 = vld [vmem:[%s2 + $0x120] sm:$0xff]
  %v1158 = vld [vmem:[%s2 + $0x128] sm:$0xff]
  %v1159 = vld [vmem:[%s2 + $0x130] sm:$0xff]
  %v1160 = vld [vmem:[%s2 + $0x138] sm:$0xff]
  %v1161 = vld [vmem:[%s2 + $0x140] sm:$0xff]
  %v1162 = vld [vmem:[%s2 + $0x148] sm:$0xff]
  %v1163 = vld [vmem:[%s2 + $0x150] sm:$0xff]
  %v1164 = vld [vmem:[%s2 + $0x158] sm:$0xff]
  %v1165 = vld [vmem:[%s2 + $0x160] sm:$0xff]
  %v1166 = vld [vmem:[%s2 + $0x168] sm:$0xff]
  %v1167 = vld [vmem:[%s2 + $0x170] sm:$0xff]
  %v1168 = vld [vmem:[%s2 + $0x178] sm:$0xff]
  %v1169 = vld [vmem:[%s2 + $0x180] sm:$0xff]
  %v1170 = vld [vmem:[%s2 + $0x188] sm:$0xff]
  %v1171 = vld [vmem:[%s2 + $0x190] sm:$0xff]
  %v1172 = vld [vmem:[%s2 + $0x198] sm:$0xff]
  %v1173 = vld [vmem:[%s2 + $0x1a0] sm:$0xff]
  %v1174 = vld [vmem:[%s2 + $0x1a8] sm:$0xff]
  %v1175 = vld [vmem:[%s2 + $0x1b0] sm:$0xff]
  %v1176 = vld [vmem:[%s2 + $0x1b8] sm:$0xff]
  %v1177 = vld [vmem:[%s2 + $0x1c0] sm:$0xff]
  %v1178 = vld [vmem:[%s2 + $0x1c8] sm:$0xff]
  %v1179 = vld [vmem:[%s2 + $0x1d0] sm:$0xff]
  %v1180 = vld [vmem:[%s2 + $0x1d8] sm:$0xff]
  %v1181 = vld [vmem:[%s2 + $0x1e0] sm:$0xff]
  %v1182 = vld [vmem:[%s2 + $0x1e8] sm:$0xff]
  %v1183 = vld [vmem:[%s2 + $0x1f0] sm:$0xff]
  %v1184 = vld [vmem:[%s2 + $0x1f8] sm:$0xff]
  %1185 = vmatprep.subr.mxu0 %v1122
  %1186 = vmatpush1.msra.mxu0 %v1121
  %1187 = vmatprep.subr.mxu0 %v1126
  %1188 = vmatpush1.msra.mxu0 %v1125
  %1189 = vmatprep.subr.mxu0 %v1130
  %1190 = vmatpush1.msra.mxu0 %v1129
  %1191 = vmatprep.subr.mxu0 %v1134
  %1192 = vmatpush1.msra.mxu0 %v1133
  %1193 = vmatprep.subr.mxu0 %v1138
  %1194 = vmatpush1.msra.mxu0 %v1137
  %1195 = vmatprep.subr.mxu0 %v1142
  %1196 = vmatpush1.msra.mxu0 %v1141
  %1197 = vmatprep.subr.mxu0 %v1146
  %1198 = vmatpush1.msra.mxu0 %v1145
  %1199 = vmatprep.subr.mxu0 %v1150
  %1200 = vmatpush1.msra.mxu0 %v1149
  %1201 = vmatprep.subr.mxu0 %v1154
  %1202 = vmatpush1.msra.mxu0 %v1153
  %1203 = vmatprep.subr.mxu0 %v1158
  %1204 = vmatpush1.msra.mxu0 %v1157
  %1205 = vmatprep.subr.mxu0 %v1162
  %1206 = vmatpush1.msra.mxu0 %v1161
  %1207 = vmatprep.subr.mxu0 %v1166
  %1208 = vmatpush1.msra.mxu0 %v1165
  %1209 = vmatprep.subr.mxu0 %v1170
  %1210 = vmatpush1.msra.mxu0 %v1169
  %1211 = vmatprep.subr.mxu0 %v1174
  %1212 = vmatpush1.msra.mxu0 %v1173
  %1213 = vmatprep.subr.mxu0 %v1178
  %1214 = vmatpush1.msra.mxu0 %v1177
  %1215 = vmatprep.subr.mxu0 %v1182
  %1216 = vmatpush1.msra.mxu0 %v1181
  %1217 = vmatprep.subr.mxu0 0.0
  %1218 = vmatpush1.msra.mxu0 0.0
  %1219 = vmatprep.subr.mxu0 0.0
  %1220 = vmatpush1.msra.mxu0 0.0
  %1221 = vmatprep.subr.mxu0 0.0
  %1222 = vmatpush1.msra.mxu0 0.0
  %1223 = vmatprep.subr.mxu0 0.0
  %1224 = vmatpush1.msra.mxu0 0.0
  %1225 = vmatprep.subr.mxu0 0.0
  %1226 = vmatpush1.msra.mxu0 0.0
  %1227 = vmatprep.subr.mxu0 0.0
  %1228 = vmatpush1.msra.mxu0 0.0
  %1229 = vmatprep.subr.mxu0 0.0
  %1230 = vmatpush1.msra.mxu0 0.0
  %1231 = vmatprep.subr.mxu0 0.0
  %1232 = vmatpush1.msra.mxu0 0.0
  %1233 = vmatprep.subr.mxu0 0.0
  %1234 = vmatpush1.msra.mxu0 0.0
  %1235 = vmatprep.subr.mxu0 0.0
  %1236 = vmatpush1.msra.mxu0 0.0
  %1237 = vmatprep.subr.mxu0 0.0
  %1238 = vmatpush1.msra.mxu0 0.0
  %1239 = vmatprep.subr.mxu0 0.0
  %1240 = vmatpush1.msra.mxu0 0.0
  %1241 = vmatprep.subr.mxu0 0.0
  %1242 = vmatpush1.msra.mxu0 0.0
  %1243 = vmatprep.subr.mxu0 0.0
  %1244 = vmatpush1.msra.mxu0 0.0
  %1245 = vmatprep.subr.mxu0 0.0
  %1246 = vmatpush1.msra.mxu0 0.0
  %1247 = vmatprep.subr.mxu0 0.0
  %1248 = vmatpush1.msra.mxu0 0.0
  %1249 = vmatprep.mubr.f32.mxu0 0.0
  %1250 = vmatmul.mubr.f32.gmra.mrb[0].mxu0 %v1111
  %v1251 = vpop.f32.mrb[0].mxu0
  %v1252 = vadd.f32 0.0, %v1251
  %v1253 = vpop.f32.mrb[0].mxu0
  %v1254 = vadd.f32 0.0, %v1253
  %1255 = vdwg.mxu0
  %1256 = vmatprep.subr.mxu0 %v1124
  %1257 = vmatpush1.msra.mxu0 %v1123
  %1258 = vmatprep.subr.mxu0 %v1128
  %1259 = vmatpush1.msra.mxu0 %v1127
  %1260 = vmatprep.subr.mxu0 %v1132
  %1261 = vmatpush1.msra.mxu0 %v1131
  %1262 = vmatprep.subr.mxu0 %v1136
  %1263 = vmatpush1.msra.mxu0 %v1135
  %1264 = vmatprep.subr.mxu0 %v1140
  %1265 = vmatpush1.msra.mxu0 %v1139
  %1266 = vmatprep.subr.mxu0 %v1144
  %1267 = vmatpush1.msra.mxu0 %v1143
  %1268 = vmatprep.subr.mxu0 %v1148
  %1269 = vmatpush1.msra.mxu0 %v1147
  %1270 = vmatprep.subr.mxu0 %v1152
  %1271 = vmatpush1.msra.mxu0 %v1151
  %1272 = vmatprep.subr.mxu0 %v1156
  %1273 = vmatpush1.msra.mxu0 %v1155
  %1274 = vmatprep.subr.mxu0 %v1160
  %1275 = vmatpush1.msra.mxu0 %v1159
  %1276 = vmatprep.subr.mxu0 %v1164
  %1277 = vmatpush1.msra.mxu0 %v1163
  %1278 = vmatprep.subr.mxu0 %v1168
  %1279 = vmatpush1.msra.mxu0 %v1167
  %1280 = vmatprep.subr.mxu0 %v1172
  %1281 = vmatpush1.msra.mxu0 %v1171
  %1282 = vmatprep.subr.mxu0 %v1176
  %1283 = vmatpush1.msra.mxu0 %v1175
  %1284 = vmatprep.subr.mxu0 %v1180
  %1285 = vmatpush1.msra.mxu0 %v1179
  %1286 = vmatprep.subr.mxu0 %v1184
  %1287 = vmatpush1.msra.mxu0 %v1183
  %1288 = vmatprep.subr.mxu0 0.0
  %1289 = vmatpush1.msra.mxu0 0.0
  %1290 = vmatprep.subr.mxu0 0.0
  %1291 = vmatpush1.msra.mxu0 0.0
  %1292 = vmatprep.subr.mxu0 0.0
  %1293 = vmatpush1.msra.mxu0 0.0
  %1294 = vmatprep.subr.mxu0 0.0
  %1295 = vmatpush1.msra.mxu0 0.0
  %1296 = vmatprep.subr.mxu0 0.0
  %1297 = vmatpush1.msra.mxu0 0.0
  %1298 = vmatprep.subr.mxu0 0.0
  %1299 = vmatpush1.msra.mxu0 0.0
  %1300 = vmatprep.subr.mxu0 0.0
  %1301 = vmatpush1.msra.mxu0 0.0
  %1302 = vmatprep.subr.mxu0 0.0
  %1303 = vmatpush1.msra.mxu0 0.0
  %1304 = vmatprep.subr.mxu0 0.0
  %1305 = vmatpush1.msra.mxu0 0.0
  %1306 = vmatprep.subr.mxu0 0.0
  %1307 = vmatpush1.msra.mxu0 0.0
  %1308 = vmatprep.subr.mxu0 0.0
  %1309 = vmatpush1.msra.mxu0 0.0
  %1310 = vmatprep.subr.mxu0 0.0
  %1311 = vmatpush1.msra.mxu0 0.0
  %1312 = vmatprep.subr.mxu0 0.0
  %1313 = vmatpush1.msra.mxu0 0.0
  %1314 = vmatprep.subr.mxu0 0.0
  %1315 = vmatpush1.msra.mxu0 0.0
  %1316 = vmatprep.subr.mxu0 0.0
  %1317 = vmatpush1.msra.mxu0 0.0
  %1318 = vmatprep.subr.mxu0 0.0
  %1319 = vmatpush1.msra.mxu0 0.0
  %1320 = vmatprep.mubr.f32.mxu0 0.0
  %1321 = vmatmul.mubr.f32.gmra.mrb[0].mxu0 %v1111
  %v1322 = vpop.f32.mrb[0].mxu0
  %v1323 = vadd.f32 0.0, %v1322
  %v1324 = vpop.f32.mrb[0].mxu0
  %v1325 = vadd.f32 0.0, %v1324
  %1326 = vdwg.mxu0
  %v1327 = vadd.f32 %v1117, %v1252
  %v1328 = vadd.f32 %v1118, %v1254
  %v1329 = vadd.f32 %v1119, %v1323
  %v1330 = vadd.f32 %v1120, %v1325
  %v1331 = vxor.u32 %v1327, 2147483648
  %v1332 = vmul.f32 %v1331, 1.442695
  %v1333 = vpow.pop %v1332
  %v1334 = vadd.f32 %v1333, 1.0
  %v1335 = vrcp.pop %v1334
  %v1336 = vmul.f32 1.0, %v1335
  %v1337 = vxor.u32 %v1328, 2147483648
  %v1338 = vmul.f32 %v1337, 1.442695
  %v1339 = vpow.pop %v1338
  %v1340 = vadd.f32 %v1339, 1.0
  %v1341 = vrcp.pop %v1340
  %v1342 = vmul.f32 1.0, %v1341
  %v1343 = vtanh.pop %v1329
  %v1344 = vxor.u32 %v1330, 2147483648
  %v1345 = vmul.f32 %v1344, 1.442695
  %v1346 = vpow.pop %v1345
  %v1347 = vadd.f32 %v1346, 1.0
  %v1348 = vrcp.pop %v1347
  %v1349 = vmul.f32 1.0, %v1348
  %v1350 = vmul.f32 %v1342, %v1109
  %v1351 = vmul.f32 %v1336, %v1343
  %v1352 = vadd.f32 %v1350, %v1351
  %v1353 = vtanh.pop %v1352
  %v1354 = vmul.f32 %v1349, %v1353
  %s1355 = scalar_lea.vmem [#allocation3], 24
  %1356 = vst [vmem:[%s1355] sm:$0xff] %v1354
  %s1357 = smul.u32 4, 4
  %s1358 = smul.addr %s1357, 8
  %s1359 = scalar_lea.vmem [#allocation2], %s1358
  %v1360 = vld [vmem:[%s1359] sm:$0xff]
  %v1361 = vld [vmem:[%s1359 + $0x8] sm:$0xff]
  %v1362 = vld [vmem:[%s1359 + $0x10] sm:$0xff]
  %v1363 = vld [vmem:[%s1359 + $0x18] sm:$0xff]
  %v1364 = vld [vmem:[%s2] sm:$0xff]
  %v1365 = vld [vmem:[%s2 + $0x8] sm:$0xff]
  %v1366 = vld [vmem:[%s2 + $0x10] sm:$0xff]
  %v1367 = vld [vmem:[%s2 + $0x18] sm:$0xff]
  %v1368 = vld [vmem:[%s2 + $0x20] sm:$0xff]
  %v1369 = vld [vmem:[%s2 + $0x28] sm:$0xff]
  %v1370 = vld [vmem:[%s2 + $0x30] sm:$0xff]
  %v1371 = vld [vmem:[%s2 + $0x38] sm:$0xff]
  %v1372 = vld [vmem:[%s2 + $0x40] sm:$0xff]
  %v1373 = vld [vmem:[%s2 + $0x48] sm:$0xff]
  %v1374 = vld [vmem:[%s2 + $0x50] sm:$0xff]
  %v1375 = vld [vmem:[%s2 + $0x58] sm:$0xff]
  %v1376 = vld [vmem:[%s2 + $0x60] sm:$0xff]
  %v1377 = vld [vmem:[%s2 + $0x68] sm:$0xff]
  %v1378 = vld [vmem:[%s2 + $0x70] sm:$0xff]
  %v1379 = vld [vmem:[%s2 + $0x78] sm:$0xff]
  %v1380 = vld [vmem:[%s2 + $0x80] sm:$0xff]
  %v1381 = vld [vmem:[%s2 + $0x88] sm:$0xff]
  %v1382 = vld [vmem:[%s2 + $0x90] sm:$0xff]
  %v1383 = vld [vmem:[%s2 + $0x98] sm:$0xff]
  %v1384 = vld [vmem:[%s2 + $0xa0] sm:$0xff]
  %v1385 = vld [vmem:[%s2 + $0xa8] sm:$0xff]
  %v1386 = vld [vmem:[%s2 + $0xb0] sm:$0xff]
  %v1387 = vld [vmem:[%s2 + $0xb8] sm:$0xff]
  %v1388 = vld [vmem:[%s2 + $0xc0] sm:$0xff]
  %v1389 = vld [vmem:[%s2 + $0xc8] sm:$0xff]
  %v1390 = vld [vmem:[%s2 + $0xd0] sm:$0xff]
  %v1391 = vld [vmem:[%s2 + $0xd8] sm:$0xff]
  %v1392 = vld [vmem:[%s2 + $0xe0] sm:$0xff]
  %v1393 = vld [vmem:[%s2 + $0xe8] sm:$0xff]
  %v1394 = vld [vmem:[%s2 + $0xf0] sm:$0xff]
  %v1395 = vld [vmem:[%s2 + $0xf8] sm:$0xff]
  %v1396 = vld [vmem:[%s2 + $0x100] sm:$0xff]
  %v1397 = vld [vmem:[%s2 + $0x108] sm:$0xff]
  %v1398 = vld [vmem:[%s2 + $0x110] sm:$0xff]
  %v1399 = vld [vmem:[%s2 + $0x118] sm:$0xff]
  %v1400 = vld [vmem:[%s2 + $0x120] sm:$0xff]
  %v1401 = vld [vmem:[%s2 + $0x128] sm:$0xff]
  %v1402 = vld [vmem:[%s2 + $0x130] sm:$0xff]
  %v1403 = vld [vmem:[%s2 + $0x138] sm:$0xff]
  %v1404 = vld [vmem:[%s2 + $0x140] sm:$0xff]
  %v1405 = vld [vmem:[%s2 + $0x148] sm:$0xff]
  %v1406 = vld [vmem:[%s2 + $0x150] sm:$0xff]
  %v1407 = vld [vmem:[%s2 + $0x158] sm:$0xff]
  %v1408 = vld [vmem:[%s2 + $0x160] sm:$0xff]
  %v1409 = vld [vmem:[%s2 + $0x168] sm:$0xff]
  %v1410 = vld [vmem:[%s2 + $0x170] sm:$0xff]
  %v1411 = vld [vmem:[%s2 + $0x178] sm:$0xff]
  %v1412 = vld [vmem:[%s2 + $0x180] sm:$0xff]
  %v1413 = vld [vmem:[%s2 + $0x188] sm:$0xff]
  %v1414 = vld [vmem:[%s2 + $0x190] sm:$0xff]
  %v1415 = vld [vmem:[%s2 + $0x198] sm:$0xff]
  %v1416 = vld [vmem:[%s2 + $0x1a0] sm:$0xff]
  %v1417 = vld [vmem:[%s2 + $0x1a8] sm:$0xff]
  %v1418 = vld [vmem:[%s2 + $0x1b0] sm:$0xff]
  %v1419 = vld [vmem:[%s2 + $0x1b8] sm:$0xff]
  %v1420 = vld [vmem:[%s2 + $0x1c0] sm:$0xff]
  %v1421 = vld [vmem:[%s2 + $0x1c8] sm:$0xff]
  %v1422 = vld [vmem:[%s2 + $0x1d0] sm:$0xff]
  %v1423 = vld [vmem:[%s2 + $0x1d8] sm:$0xff]
  %v1424 = vld [vmem:[%s2 + $0x1e0] sm:$0xff]
  %v1425 = vld [vmem:[%s2 + $0x1e8] sm:$0xff]
  %v1426 = vld [vmem:[%s2 + $0x1f0] sm:$0xff]
  %v1427 = vld [vmem:[%s2 + $0x1f8] sm:$0xff]
  %1428 = vmatprep.subr.mxu0 %v1365
  %1429 = vmatpush1.msra.mxu0 %v1364
  %1430 = vmatprep.subr.mxu0 %v1369
  %1431 = vmatpush1.msra.mxu0 %v1368
  %1432 = vmatprep.subr.mxu0 %v1373
  %1433 = vmatpush1.msra.mxu0 %v1372
  %1434 = vmatprep.subr.mxu0 %v1377
  %1435 = vmatpush1.msra.mxu0 %v1376
  %1436 = vmatprep.subr.mxu0 %v1381
  %1437 = vmatpush1.msra.mxu0 %v1380
  %1438 = vmatprep.subr.mxu0 %v1385
  %1439 = vmatpush1.msra.mxu0 %v1384
  %1440 = vmatprep.subr.mxu0 %v1389
  %1441 = vmatpush1.msra.mxu0 %v1388
  %1442 = vmatprep.subr.mxu0 %v1393
  %1443 = vmatpush1.msra.mxu0 %v1392
  %1444 = vmatprep.subr.mxu0 %v1397
  %1445 = vmatpush1.msra.mxu0 %v1396
  %1446 = vmatprep.subr.mxu0 %v1401
  %1447 = vmatpush1.msra.mxu0 %v1400
  %1448 = vmatprep.subr.mxu0 %v1405
  %1449 = vmatpush1.msra.mxu0 %v1404
  %1450 = vmatprep.subr.mxu0 %v1409
  %1451 = vmatpush1.msra.mxu0 %v1408
  %1452 = vmatprep.subr.mxu0 %v1413
  %1453 = vmatpush1.msra.mxu0 %v1412
  %1454 = vmatprep.subr.mxu0 %v1417
  %1455 = vmatpush1.msra.mxu0 %v1416
  %1456 = vmatprep.subr.mxu0 %v1421
  %1457 = vmatpush1.msra.mxu0 %v1420
  %1458 = vmatprep.subr.mxu0 %v1425
  %1459 = vmatpush1.msra.mxu0 %v1424
  %1460 = vmatprep.subr.mxu0 0.0
  %1461 = vmatpush1.msra.mxu0 0.0
  %1462 = vmatprep.subr.mxu0 0.0
  %1463 = vmatpush1.msra.mxu0 0.0
  %1464 = vmatprep.subr.mxu0 0.0
  %1465 = vmatpush1.msra.mxu0 0.0
  %1466 = vmatprep.subr.mxu0 0.0
  %1467 = vmatpush1.msra.mxu0 0.0
  %1468 = vmatprep.subr.mxu0 0.0
  %1469 = vmatpush1.msra.mxu0 0.0
  %1470 = vmatprep.subr.mxu0 0.0
  %1471 = vmatpush1.msra.mxu0 0.0
  %1472 = vmatprep.subr.mxu0 0.0
  %1473 = vmatpush1.msra.mxu0 0.0
  %1474 = vmatprep.subr.mxu0 0.0
  %1475 = vmatpush1.msra.mxu0 0.0
  %1476 = vmatprep.subr.mxu0 0.0
  %1477 = vmatpush1.msra.mxu0 0.0
  %1478 = vmatprep.subr.mxu0 0.0
  %1479 = vmatpush1.msra.mxu0 0.0
  %1480 = vmatprep.subr.mxu0 0.0
  %1481 = vmatpush1.msra.mxu0 0.0
  %1482 = vmatprep.subr.mxu0 0.0
  %1483 = vmatpush1.msra.mxu0 0.0
  %1484 = vmatprep.subr.mxu0 0.0
  %1485 = vmatpush1.msra.mxu0 0.0
  %1486 = vmatprep.subr.mxu0 0.0
  %1487 = vmatpush1.msra.mxu0 0.0
  %1488 = vmatprep.subr.mxu0 0.0
  %1489 = vmatpush1.msra.mxu0 0.0
  %1490 = vmatprep.subr.mxu0 0.0
  %1491 = vmatpush1.msra.mxu0 0.0
  %1492 = vmatprep.mubr.f32.mxu0 0.0
  %1493 = vmatmul.mubr.f32.gmra.mrb[0].mxu0 %v1354
  %v1494 = vpop.f32.mrb[0].mxu0
  %v1495 = vadd.f32 0.0, %v1494
  %v1496 = vpop.f32.mrb[0].mxu0
  %v1497 = vadd.f32 0.0, %v1496
  %1498 = vdwg.mxu0
  %1499 = vmatprep.subr.mxu0 %v1367
  %1500 = vmatpush1.msra.mxu0 %v1366
  %1501 = vmatprep.subr.mxu0 %v1371
  %1502 = vmatpush1.msra.mxu0 %v1370
  %1503 = vmatprep.subr.mxu0 %v1375
  %1504 = vmatpush1.msra.mxu0 %v1374
  %1505 = vmatprep.subr.mxu0 %v1379
  %1506 = vmatpush1.msra.mxu0 %v1378
  %1507 = vmatprep.subr.mxu0 %v1383
  %1508 = vmatpush1.msra.mxu0 %v1382
  %1509 = vmatprep.subr.mxu0 %v1387
  %1510 = vmatpush1.msra.mxu0 %v1386
  %1511 = vmatprep.subr.mxu0 %v1391
  %1512 = vmatpush1.msra.mxu0 %v1390
  %1513 = vmatprep.subr.mxu0 %v1395
  %1514 = vmatpush1.msra.mxu0 %v1394
  %1515 = vmatprep.subr.mxu0 %v1399
  %1516 = vmatpush1.msra.mxu0 %v1398
  %1517 = vmatprep.subr.mxu0 %v1403
  %1518 = vmatpush1.msra.mxu0 %v1402
  %1519 = vmatprep.subr.mxu0 %v1407
  %1520 = vmatpush1.msra.mxu0 %v1406
  %1521 = vmatprep.subr.mxu0 %v1411
  %1522 = vmatpush1.msra.mxu0 %v1410
  %1523 = vmatprep.subr.mxu0 %v1415
  %1524 = vmatpush1.msra.mxu0 %v1414
  %1525 = vmatprep.subr.mxu0 %v1419
  %1526 = vmatpush1.msra.mxu0 %v1418
  %1527 = vmatprep.subr.mxu0 %v1423
  %1528 = vmatpush1.msra.mxu0 %v1422
  %1529 = vmatprep.subr.mxu0 %v1427
  %1530 = vmatpush1.msra.mxu0 %v1426
  %1531 = vmatprep.subr.mxu0 0.0
  %1532 = vmatpush1.msra.mxu0 0.0
  %1533 = vmatprep.subr.mxu0 0.0
  %1534 = vmatpush1.msra.mxu0 0.0
  %1535 = vmatprep.subr.mxu0 0.0
  %1536 = vmatpush1.msra.mxu0 0.0
  %1537 = vmatprep.subr.mxu0 0.0
  %1538 = vmatpush1.msra.mxu0 0.0
  %1539 = vmatprep.subr.mxu0 0.0
  %1540 = vmatpush1.msra.mxu0 0.0
  %1541 = vmatprep.subr.mxu0 0.0
  %1542 = vmatpush1.msra.mxu0 0.0
  %1543 = vmatprep.subr.mxu0 0.0
  %1544 = vmatpush1.msra.mxu0 0.0
  %1545 = vmatprep.subr.mxu0 0.0
  %1546 = vmatpush1.msra.mxu0 0.0
  %1547 = vmatprep.subr.mxu0 0.0
  %1548 = vmatpush1.msra.mxu0 0.0
  %1549 = vmatprep.subr.mxu0 0.0
  %1550 = vmatpush1.msra.mxu0 0.0
  %1551 = vmatprep.subr.mxu0 0.0
  %1552 = vmatpush1.msra.mxu0 0.0
  %1553 = vmatprep.subr.mxu0 0.0
  %1554 = vmatpush1.msra.mxu0 0.0
  %1555 = vmatprep.subr.mxu0 0.0
  %1556 = vmatpush1.msra.mxu0 0.0
  %1557 = vmatprep.subr.mxu0 0.0
  %1558 = vmatpush1.msra.mxu0 0.0
  %1559 = vmatprep.subr.mxu0 0.0
  %1560 = vmatpush1.msra.mxu0 0.0
  %1561 = vmatprep.subr.mxu0 0.0
  %1562 = vmatpush1.msra.mxu0 0.0
  %1563 = vmatprep.mubr.f32.mxu0 0.0
  %1564 = vmatmul.mubr.f32.gmra.mrb[0].mxu0 %v1354
  %v1565 = vpop.f32.mrb[0].mxu0
  %v1566 = vadd.f32 0.0, %v1565
  %v1567 = vpop.f32.mrb[0].mxu0
  %v1568 = vadd.f32 0.0, %v1567
  %1569 = vdwg.mxu0
  %v1570 = vadd.f32 %v1360, %v1495
  %v1571 = vadd.f32 %v1361, %v1497
  %v1572 = vadd.f32 %v1362, %v1566
  %v1573 = vadd.f32 %v1363, %v1568
  %v1574 = vxor.u32 %v1570, 2147483648
  %v1575 = vmul.f32 %v1574, 1.442695
  %v1576 = vpow.pop %v1575
  %v1577 = vadd.f32 %v1576, 1.0
  %v1578 = vrcp.pop %v1577
  %v1579 = vmul.f32 1.0, %v1578
  %v1580 = vxor.u32 %v1571, 2147483648
  %v1581 = vmul.f32 %v1580, 1.442695
  %v1582 = vpow.pop %v1581
  %v1583 = vadd.f32 %v1582, 1.0
  %v1584 = vrcp.pop %v1583
  %v1585 = vmul.f32 1.0, %v1584
  %v1586 = vtanh.pop %v1572
  %v1587 = vxor.u32 %v1573, 2147483648
  %v1588 = vmul.f32 %v1587, 1.442695
  %v1589 = vpow.pop %v1588
  %v1590 = vadd.f32 %v1589, 1.0
  %v1591 = vrcp.pop %v1590
  %v1592 = vmul.f32 1.0, %v1591
  %v1593 = vmul.f32 %v1585, %v1352
  %v1594 = vmul.f32 %v1579, %v1586
  %v1595 = vadd.f32 %v1593, %v1594
  %v1596 = vtanh.pop %v1595
  %v1597 = vmul.f32 %v1592, %v1596
  %s1598 = scalar_lea.vmem [#allocation3], 32
  %1599 = vst [vmem:[%s1598] sm:$0xff] %v1597
  %s1600 = smul.u32 5, 4
  %s1601 = smul.addr %s1600, 8
  %s1602 = scalar_lea.vmem [#allocation2], %s1601
  %v1603 = vld [vmem:[%s1602] sm:$0xff]
  %v1604 = vld [vmem:[%s1602 + $0x8] sm:$0xff]
  %v1605 = vld [vmem:[%s1602 + $0x10] sm:$0xff]
  %v1606 = vld [vmem:[%s1602 + $0x18] sm:$0xff]
  %v1607 = vld [vmem:[%s2] sm:$0xff]
  %v1608 = vld [vmem:[%s2 + $0x8] sm:$0xff]
  %v1609 = vld [vmem:[%s2 + $0x10] sm:$0xff]
  %v1610 = vld [vmem:[%s2 + $0x18] sm:$0xff]
  %v1611 = vld [vmem:[%s2 + $0x20] sm:$0xff]
  %v1612 = vld [vmem:[%s2 + $0x28] sm:$0xff]
  %v1613 = vld [vmem:[%s2 + $0x30] sm:$0xff]
  %v1614 = vld [vmem:[%s2 + $0x38] sm:$0xff]
  %v1615 = vld [vmem:[%s2 + $0x40] sm:$0xff]
  %v1616 = vld [vmem:[%s2 + $0x48] sm:$0xff]
  %v1617 = vld [vmem:[%s2 + $0x50] sm:$0xff]
  %v1618 = vld [vmem:[%s2 + $0x58] sm:$0xff]
  %v1619 = vld [vmem:[%s2 + $0x60] sm:$0xff]
  %v1620 = vld [vmem:[%s2 + $0x68] sm:$0xff]
  %v1621 = vld [vmem:[%s2 + $0x70] sm:$0xff]
  %v1622 = vld [vmem:[%s2 + $0x78] sm:$0xff]
  %v1623 = vld [vmem:[%s2 + $0x80] sm:$0xff]
  %v1624 = vld [vmem:[%s2 + $0x88] sm:$0xff]
  %v1625 = vld [vmem:[%s2 + $0x90] sm:$0xff]
  %v1626 = vld [vmem:[%s2 + $0x98] sm:$0xff]
  %v1627 = vld [vmem:[%s2 + $0xa0] sm:$0xff]
  %v1628 = vld [vmem:[%s2 + $0xa8] sm:$0xff]
  %v1629 = vld [vmem:[%s2 + $0xb0] sm:$0xff]
  %v1630 = vld [vmem:[%s2 + $0xb8] sm:$0xff]
  %v1631 = vld [vmem:[%s2 + $0xc0] sm:$0xff]
  %v1632 = vld [vmem:[%s2 + $0xc8] sm:$0xff]
  %v1633 = vld [vmem:[%s2 + $0xd0] sm:$0xff]
  %v1634 = vld [vmem:[%s2 + $0xd8] sm:$0xff]
  %v1635 = vld [vmem:[%s2 + $0xe0] sm:$0xff]
  %v1636 = vld [vmem:[%s2 + $0xe8] sm:$0xff]
  %v1637 = vld [vmem:[%s2 + $0xf0] sm:$0xff]
  %v1638 = vld [vmem:[%s2 + $0xf8] sm:$0xff]
  %v1639 = vld [vmem:[%s2 + $0x100] sm:$0xff]
  %v1640 = vld [vmem:[%s2 + $0x108] sm:$0xff]
  %v1641 = vld [vmem:[%s2 + $0x110] sm:$0xff]
  %v1642 = vld [vmem:[%s2 + $0x118] sm:$0xff]
  %v1643 = vld [vmem:[%s2 + $0x120] sm:$0xff]
  %v1644 = vld [vmem:[%s2 + $0x128] sm:$0xff]
  %v1645 = vld [vmem:[%s2 + $0x130] sm:$0xff]
  %v1646 = vld [vmem:[%s2 + $0x138] sm:$0xff]
  %v1647 = vld [vmem:[%s2 + $0x140] sm:$0xff]
  %v1648 = vld [vmem:[%s2 + $0x148] sm:$0xff]
  %v1649 = vld [vmem:[%s2 + $0x150] sm:$0xff]
  %v1650 = vld [vmem:[%s2 + $0x158] sm:$0xff]
  %v1651 = vld [vmem:[%s2 + $0x160] sm:$0xff]
  %v1652 = vld [vmem:[%s2 + $0x168] sm:$0xff]
  %v1653 = vld [vmem:[%s2 + $0x170] sm:$0xff]
  %v1654 = vld [vmem:[%s2 + $0x178] sm:$0xff]
  %v1655 = vld [vmem:[%s2 + $0x180] sm:$0xff]
  %v1656 = vld [vmem:[%s2 + $0x188] sm:$0xff]
  %v1657 = vld [vmem:[%s2 + $0x190] sm:$0xff]
  %v1658 = vld [vmem:[%s2 + $0x198] sm:$0xff]
  %v1659 = vld [vmem:[%s2 + $0x1a0] sm:$0xff]
  %v1660 = vld [vmem:[%s2 + $0x1a8] sm:$0xff]
  %v1661 = vld [vmem:[%s2 + $0x1b0] sm:$0xff]
  %v1662 = vld [vmem:[%s2 + $0x1b8] sm:$0xff]
  %v1663 = vld [vmem:[%s2 + $0x1c0] sm:$0xff]
  %v1664 = vld [vmem:[%s2 + $0x1c8] sm:$0xff]
  %v1665 = vld [vmem:[%s2 + $0x1d0] sm:$0xff]
  %v1666 = vld [vmem:[%s2 + $0x1d8] sm:$0xff]
  %v1667 = vld [vmem:[%s2 + $0x1e0] sm:$0xff]
  %v1668 = vld [vmem:[%s2 + $0x1e8] sm:$0xff]
  %v1669 = vld [vmem:[%s2 + $0x1f0] sm:$0xff]
  %v1670 = vld [vmem:[%s2 + $0x1f8] sm:$0xff]
  %1671 = vmatprep.subr.mxu0 %v1608
  %1672 = vmatpush1.msra.mxu0 %v1607
  %1673 = vmatprep.subr.mxu0 %v1612
  %1674 = vmatpush1.msra.mxu0 %v1611
  %1675 = vmatprep.subr.mxu0 %v1616
  %1676 = vmatpush1.msra.mxu0 %v1615
  %1677 = vmatprep.subr.mxu0 %v1620
  %1678 = vmatpush1.msra.mxu0 %v1619
  %1679 = vmatprep.subr.mxu0 %v1624
  %1680 = vmatpush1.msra.mxu0 %v1623
  %1681 = vmatprep.subr.mxu0 %v1628
  %1682 = vmatpush1.msra.mxu0 %v1627
  %1683 = vmatprep.subr.mxu0 %v1632
  %1684 = vmatpush1.msra.mxu0 %v1631
  %1685 = vmatprep.subr.mxu0 %v1636
  %1686 = vmatpush1.msra.mxu0 %v1635
  %1687 = vmatprep.subr.mxu0 %v1640
  %1688 = vmatpush1.msra.mxu0 %v1639
  %1689 = vmatprep.subr.mxu0 %v1644
  %1690 = vmatpush1.msra.mxu0 %v1643
  %1691 = vmatprep.subr.mxu0 %v1648
  %1692 = vmatpush1.msra.mxu0 %v1647
  %1693 = vmatprep.subr.mxu0 %v1652
  %1694 = vmatpush1.msra.mxu0 %v1651
  %1695 = vmatprep.subr.mxu0 %v1656
  %1696 = vmatpush1.msra.mxu0 %v1655
  %1697 = vmatprep.subr.mxu0 %v1660
  %1698 = vmatpush1.msra.mxu0 %v1659
  %1699 = vmatprep.subr.mxu0 %v1664
  %1700 = vmatpush1.msra.mxu0 %v1663
  %1701 = vmatprep.subr.mxu0 %v1668
  %1702 = vmatpush1.msra.mxu0 %v1667
  %1703 = vmatprep.subr.mxu0 0.0
  %1704 = vmatpush1.msra.mxu0 0.0
  %1705 = vmatprep.subr.mxu0 0.0
  %1706 = vmatpush1.msra.mxu0 0.0
  %1707 = vmatprep.subr.mxu0 0.0
  %1708 = vmatpush1.msra.mxu0 0.0
  %1709 = vmatprep.subr.mxu0 0.0
  %1710 = vmatpush1.msra.mxu0 0.0
  %1711 = vmatprep.subr.mxu0 0.0
  %1712 = vmatpush1.msra.mxu0 0.0
  %1713 = vmatprep.subr.mxu0 0.0
  %1714 = vmatpush1.msra.mxu0 0.0
  %1715 = vmatprep.subr.mxu0 0.0
  %1716 = vmatpush1.msra.mxu0 0.0
  %1717 = vmatprep.subr.mxu0 0.0
  %1718 = vmatpush1.msra.mxu0 0.0
  %1719 = vmatprep.subr.mxu0 0.0
  %1720 = vmatpush1.msra.mxu0 0.0
  %1721 = vmatprep.subr.mxu0 0.0
  %1722 = vmatpush1.msra.mxu0 0.0
  %1723 = vmatprep.subr.mxu0 0.0
  %1724 = vmatpush1.msra.mxu0 0.0
  %1725 = vmatprep.subr.mxu0 0.0
  %1726 = vmatpush1.msra.mxu0 0.0
  %1727 = vmatprep.subr.mxu0 0.0
  %1728 = vmatpush1.msra.mxu0 0.0
  %1729 = vmatprep.subr.mxu0 0.0
  %1730 = vmatpush1.msra.mxu0 0.0
  %1731 = vmatprep.subr.mxu0 0.0
  %1732 = vmatpush1.msra.mxu0 0.0
  %1733 = vmatprep.subr.mxu0 0.0
  %1734 = vmatpush1.msra.mxu0 0.0
  %1735 = vmatprep.mubr.f32.mxu0 0.0
  %1736 = vmatmul.mubr.f32.gmra.mrb[0].mxu0 %v1597
  %v1737 = vpop.f32.mrb[0].mxu0
  %v1738 = vadd.f32 0.0, %v1737
  %v1739 = vpop.f32.mrb[0].mxu0
  %v1740 = vadd.f32 0.0, %v1739
  %1741 = vdwg.mxu0
  %1742 = vmatprep.subr.mxu0 %v1610
  %1743 = vmatpush1.msra.mxu0 %v1609
  %1744 = vmatprep.subr.mxu0 %v1614
  %1745 = vmatpush1.msra.mxu0 %v1613
  %1746 = vmatprep.subr.mxu0 %v1618
  %1747 = vmatpush1.msra.mxu0 %v1617
  %1748 = vmatprep.subr.mxu0 %v1622
  %1749 = vmatpush1.msra.mxu0 %v1621
  %1750 = vmatprep.subr.mxu0 %v1626
  %1751 = vmatpush1.msra.mxu0 %v1625
  %1752 = vmatprep.subr.mxu0 %v1630
  %1753 = vmatpush1.msra.mxu0 %v1629
  %1754 = vmatprep.subr.mxu0 %v1634
  %1755 = vmatpush1.msra.mxu0 %v1633
  %1756 = vmatprep.subr.mxu0 %v1638
  %1757 = vmatpush1.msra.mxu0 %v1637
  %1758 = vmatprep.subr.mxu0 %v1642
  %1759 = vmatpush1.msra.mxu0 %v1641
  %1760 = vmatprep.subr.mxu0 %v1646
  %1761 = vmatpush1.msra.mxu0 %v1645
  %1762 = vmatprep.subr.mxu0 %v1650
  %1763 = vmatpush1.msra.mxu0 %v1649
  %1764 = vmatprep.subr.mxu0 %v1654
  %1765 = vmatpush1.msra.mxu0 %v1653
  %1766 = vmatprep.subr.mxu0 %v1658
  %1767 = vmatpush1.msra.mxu0 %v1657
  %1768 = vmatprep.subr.mxu0 %v1662
  %1769 = vmatpush1.msra.mxu0 %v1661
  %1770 = vmatprep.subr.mxu0 %v1666
  %1771 = vmatpush1.msra.mxu0 %v1665
  %1772 = vmatprep.subr.mxu0 %v1670
  %1773 = vmatpush1.msra.mxu0 %v1669
  %1774 = vmatprep.subr.mxu0 0.0
  %1775 = vmatpush1.msra.mxu0 0.0
  %1776 = vmatprep.subr.mxu0 0.0
  %1777 = vmatpush1.msra.mxu0 0.0
  %1778 = vmatprep.subr.mxu0 0.0
  %1779 = vmatpush1.msra.mxu0 0.0
  %1780 = vmatprep.subr.mxu0 0.0
  %1781 = vmatpush1.msra.mxu0 0.0
  %1782 = vmatprep.subr.mxu0 0.0
  %1783 = vmatpush1.msra.mxu0 0.0
  %1784 = vmatprep.subr.mxu0 0.0
  %1785 = vmatpush1.msra.mxu0 0.0
  %1786 = vmatprep.subr.mxu0 0.0
  %1787 = vmatpush1.msra.mxu0 0.0
  %1788 = vmatprep.subr.mxu0 0.0
  %1789 = vmatpush1.msra.mxu0 0.0
  %1790 = vmatprep.subr.mxu0 0.0
  %1791 = vmatpush1.msra.mxu0 0.0
  %1792 = vmatprep.subr.mxu0 0.0
  %1793 = vmatpush1.msra.mxu0 0.0
  %1794 = vmatprep.subr.mxu0 0.0
  %1795 = vmatpush1.msra.mxu0 0.0
  %1796 = vmatprep.subr.mxu0 0.0
  %1797 = vmatpush1.msra.mxu0 0.0
  %1798 = vmatprep.subr.mxu0 0.0
  %1799 = vmatpush1.msra.mxu0 0.0
  %1800 = vmatprep.subr.mxu0 0.0
  %1801 = vmatpush1.msra.mxu0 0.0
  %1802 = vmatprep.subr.mxu0 0.0
  %1803 = vmatpush1.msra.mxu0 0.0
  %1804 = vmatprep.subr.mxu0 0.0
  %1805 = vmatpush1.msra.mxu0 0.0
  %1806 = vmatprep.mubr.f32.mxu0 0.0
  %1807 = vmatmul.mubr.f32.gmra.mrb[0].mxu0 %v1597
  %v1808 = vpop.f32.mrb[0].mxu0
  %v1809 = vadd.f32 0.0, %v1808
  %v1810 = vpop.f32.mrb[0].mxu0
  %v1811 = vadd.f32 0.0, %v1810
  %1812 = vdwg.mxu0
  %v1813 = vadd.f32 %v1603, %v1738
  %v1814 = vadd.f32 %v1604, %v1740
  %v1815 = vadd.f32 %v1605, %v1809
  %v1816 = vadd.f32 %v1606, %v1811
  %v1817 = vxor.u32 %v1813, 2147483648
  %v1818 = vmul.f32 %v1817, 1.442695
  %v1819 = vpow.pop %v1818
  %v1820 = vadd.f32 %v1819, 1.0
  %v1821 = vrcp.pop %v1820
  %v1822 = vmul.f32 1.0, %v1821
  %v1823 = vxor.u32 %v1814, 2147483648
  %v1824 = vmul.f32 %v1823, 1.442695
  %v1825 = vpow.pop %v1824
  %v1826 = vadd.f32 %v1825, 1.0
  %v1827 = vrcp.pop %v1826
  %v1828 = vmul.f32 1.0, %v1827
  %v1829 = vtanh.pop %v1815
  %v1830 = vxor.u32 %v1816, 2147483648
  %v1831 = vmul.f32 %v1830, 1.442695
  %v1832 = vpow.pop %v1831
  %v1833 = vadd.f32 %v1832, 1.0
  %v1834 = vrcp.pop %v1833
  %v1835 = vmul.f32 1.0, %v1834
  %v1836 = vmul.f32 %v1828, %v1595
  %v1837 = vmul.f32 %v1822, %v1829
  %v1838 = vadd.f32 %v1836, %v1837
  %v1839 = vtanh.pop %v1838
  %v1840 = vmul.f32 %v1835, %v1839
  %s1841 = scalar_lea.vmem [#allocation3], 40
  %1842 = vst [vmem:[%s1841] sm:$0xff] %v1840
  %s1843 = smul.u32 6, 4
  %s1844 = smul.addr %s1843, 8
  %s1845 = scalar_lea.vmem [#allocation2], %s1844
  %v1846 = vld [vmem:[%s1845] sm:$0xff]
  %v1847 = vld [vmem:[%s1845 + $0x8] sm:$0xff]
  %v1848 = vld [vmem:[%s1845 + $0x10] sm:$0xff]
  %v1849 = vld [vmem:[%s1845 + $0x18] sm:$0xff]
  %v1850 = vld [vmem:[%s2] sm:$0xff]
  %v1851 = vld [vmem:[%s2 + $0x8] sm:$0xff]
  %v1852 = vld [vmem:[%s2 + $0x10] sm:$0xff]
  %v1853 = vld [vmem:[%s2 + $0x18] sm:$0xff]
  %v1854 = vld [vmem:[%s2 + $0x20] sm:$0xff]
  %v1855 = vld [vmem:[%s2 + $0x28] sm:$0xff]
  %v1856 = vld [vmem:[%s2 + $0x30] sm:$0xff]
  %v1857 = vld [vmem:[%s2 + $0x38] sm:$0xff]
  %v1858 = vld [vmem:[%s2 + $0x40] sm:$0xff]
  %v1859 = vld [vmem:[%s2 + $0x48] sm:$0xff]
  %v1860 = vld [vmem:[%s2 + $0x50] sm:$0xff]
  %v1861 = vld [vmem:[%s2 + $0x58] sm:$0xff]
  %v1862 = vld [vmem:[%s2 + $0x60] sm:$0xff]
  %v1863 = vld [vmem:[%s2 + $0x68] sm:$0xff]
  %v1864 = vld [vmem:[%s2 + $0x70] sm:$0xff]
  %v1865 = vld [vmem:[%s2 + $0x78] sm:$0xff]
  %v1866 = vld [vmem:[%s2 + $0x80] sm:$0xff]
  %v1867 = vld [vmem:[%s2 + $0x88] sm:$0xff]
  %v1868 = vld [vmem:[%s2 + $0x90] sm:$0xff]
  %v1869 = vld [vmem:[%s2 + $0x98] sm:$0xff]
  %v1870 = vld [vmem:[%s2 + $0xa0] sm:$0xff]
  %v1871 = vld [vmem:[%s2 + $0xa8] sm:$0xff]
  %v1872 = vld [vmem:[%s2 + $0xb0] sm:$0xff]
  %v1873 = vld [vmem:[%s2 + $0xb8] sm:$0xff]
  %v1874 = vld [vmem:[%s2 + $0xc0] sm:$0xff]
  %v1875 = vld [vmem:[%s2 + $0xc8] sm:$0xff]
  %v1876 = vld [vmem:[%s2 + $0xd0] sm:$0xff]
  %v1877 = vld [vmem:[%s2 + $0xd8] sm:$0xff]
  %v1878 = vld [vmem:[%s2 + $0xe0] sm:$0xff]
  %v1879 = vld [vmem:[%s2 + $0xe8] sm:$0xff]
  %v1880 = vld [vmem:[%s2 + $0xf0] sm:$0xff]
  %v1881 = vld [vmem:[%s2 + $0xf8] sm:$0xff]
  %v1882 = vld [vmem:[%s2 + $0x100] sm:$0xff]
  %v1883 = vld [vmem:[%s2 + $0x108] sm:$0xff]
  %v1884 = vld [vmem:[%s2 + $0x110] sm:$0xff]
  %v1885 = vld [vmem:[%s2 + $0x118] sm:$0xff]
  %v1886 = vld [vmem:[%s2 + $0x120] sm:$0xff]
  %v1887 = vld [vmem:[%s2 + $0x128] sm:$0xff]
  %v1888 = vld [vmem:[%s2 + $0x130] sm:$0xff]
  %v1889 = vld [vmem:[%s2 + $0x138] sm:$0xff]
  %v1890 = vld [vmem:[%s2 + $0x140] sm:$0xff]
  %v1891 = vld [vmem:[%s2 + $0x148] sm:$0xff]
  %v1892 = vld [vmem:[%s2 + $0x150] sm:$0xff]
  %v1893 = vld [vmem:[%s2 + $0x158] sm:$0xff]
  %v1894 = vld [vmem:[%s2 + $0x160] sm:$0xff]
  %v1895 = vld [vmem:[%s2 + $0x168] sm:$0xff]
  %v1896 = vld [vmem:[%s2 + $0x170] sm:$0xff]
  %v1897 = vld [vmem:[%s2 + $0x178] sm:$0xff]
  %v1898 = vld [vmem:[%s2 + $0x180] sm:$0xff]
  %v1899 = vld [vmem:[%s2 + $0x188] sm:$0xff]
  %v1900 = vld [vmem:[%s2 + $0x190] sm:$0xff]
  %v1901 = vld [vmem:[%s2 + $0x198] sm:$0xff]
  %v1902 = vld [vmem:[%s2 + $0x1a0] sm:$0xff]
  %v1903 = vld [vmem:[%s2 + $0x1a8] sm:$0xff]
  %v1904 = vld [vmem:[%s2 + $0x1b0] sm:$0xff]
  %v1905 = vld [vmem:[%s2 + $0x1b8] sm:$0xff]
  %v1906 = vld [vmem:[%s2 + $0x1c0] sm:$0xff]
  %v1907 = vld [vmem:[%s2 + $0x1c8] sm:$0xff]
  %v1908 = vld [vmem:[%s2 + $0x1d0] sm:$0xff]
  %v1909 = vld [vmem:[%s2 + $0x1d8] sm:$0xff]
  %v1910 = vld [vmem:[%s2 + $0x1e0] sm:$0xff]
  %v1911 = vld [vmem:[%s2 + $0x1e8] sm:$0xff]
  %v1912 = vld [vmem:[%s2 + $0x1f0] sm:$0xff]
  %v1913 = vld [vmem:[%s2 + $0x1f8] sm:$0xff]
  %1914 = vmatprep.subr.mxu0 %v1851
  %1915 = vmatpush1.msra.mxu0 %v1850
  %1916 = vmatprep.subr.mxu0 %v1855
  %1917 = vmatpush1.msra.mxu0 %v1854
  %1918 = vmatprep.subr.mxu0 %v1859
  %1919 = vmatpush1.msra.mxu0 %v1858
  %1920 = vmatprep.subr.mxu0 %v1863
  %1921 = vmatpush1.msra.mxu0 %v1862
  %1922 = vmatprep.subr.mxu0 %v1867
  %1923 = vmatpush1.msra.mxu0 %v1866
  %1924 = vmatprep.subr.mxu0 %v1871
  %1925 = vmatpush1.msra.mxu0 %v1870
  %1926 = vmatprep.subr.mxu0 %v1875
  %1927 = vmatpush1.msra.mxu0 %v1874
  %1928 = vmatprep.subr.mxu0 %v1879
  %1929 = vmatpush1.msra.mxu0 %v1878
  %1930 = vmatprep.subr.mxu0 %v1883
  %1931 = vmatpush1.msra.mxu0 %v1882
  %1932 = vmatprep.subr.mxu0 %v1887
  %1933 = vmatpush1.msra.mxu0 %v1886
  %1934 = vmatprep.subr.mxu0 %v1891
  %1935 = vmatpush1.msra.mxu0 %v1890
  %1936 = vmatprep.subr.mxu0 %v1895
  %1937 = vmatpush1.msra.mxu0 %v1894
  %1938 = vmatprep.subr.mxu0 %v1899
  %1939 = vmatpush1.msra.mxu0 %v1898
  %1940 = vmatprep.subr.mxu0 %v1903
  %1941 = vmatpush1.msra.mxu0 %v1902
  %1942 = vmatprep.subr.mxu0 %v1907
  %1943 = vmatpush1.msra.mxu0 %v1906
  %1944 = vmatprep.subr.mxu0 %v1911
  %1945 = vmatpush1.msra.mxu0 %v1910
  %1946 = vmatprep.subr.mxu0 0.0
  %1947 = vmatpush1.msra.mxu0 0.0
  %1948 = vmatprep.subr.mxu0 0.0
  %1949 = vmatpush1.msra.mxu0 0.0
  %1950 = vmatprep.subr.mxu0 0.0
  %1951 = vmatpush1.msra.mxu0 0.0
  %1952 = vmatprep.subr.mxu0 0.0
  %1953 = vmatpush1.msra.mxu0 0.0
  %1954 = vmatprep.subr.mxu0 0.0
  %1955 = vmatpush1.msra.mxu0 0.0
  %1956 = vmatprep.subr.mxu0 0.0
  %1957 = vmatpush1.msra.mxu0 0.0
  %1958 = vmatprep.subr.mxu0 0.0
  %1959 = vmatpush1.msra.mxu0 0.0
  %1960 = vmatprep.subr.mxu0 0.0
  %1961 = vmatpush1.msra.mxu0 0.0
  %1962 = vmatprep.subr.mxu0 0.0
  %1963 = vmatpush1.msra.mxu0 0.0
  %1964 = vmatprep.subr.mxu0 0.0
  %1965 = vmatpush1.msra.mxu0 0.0
  %1966 = vmatprep.subr.mxu0 0.0
  %1967 = vmatpush1.msra.mxu0 0.0
  %1968 = vmatprep.subr.mxu0 0.0
  %1969 = vmatpush1.msra.mxu0 0.0
  %1970 = vmatprep.subr.mxu0 0.0
  %1971 = vmatpush1.msra.mxu0 0.0
  %1972 = vmatprep.subr.mxu0 0.0
  %1973 = vmatpush1.msra.mxu0 0.0
  %1974 = vmatprep.subr.mxu0 0.0
  %1975 = vmatpush1.msra.mxu0 0.0
  %1976 = vmatprep.subr.mxu0 0.0
  %1977 = vmatpush1.msra.mxu0 0.0
  %1978 = vmatprep.mubr.f32.mxu0 0.0
  %1979 = vmatmul.mubr.f32.gmra.mrb[0].mxu0 %v1840
  %v1980 = vpop.f32.mrb[0].mxu0
  %v1981 = vadd.f32 0.0, %v1980
  %v1982 = vpop.f32.mrb[0].mxu0
  %v1983 = vadd.f32 0.0, %v1982
  %1984 = vdwg.mxu0
  %1985 = vmatprep.subr.mxu0 %v1853
  %1986 = vmatpush1.msra.mxu0 %v1852
  %1987 = vmatprep.subr.mxu0 %v1857
  %1988 = vmatpush1.msra.mxu0 %v1856
  %1989 = vmatprep.subr.mxu0 %v1861
  %1990 = vmatpush1.msra.mxu0 %v1860
  %1991 = vmatprep.subr.mxu0 %v1865
  %1992 = vmatpush1.msra.mxu0 %v1864
  %1993 = vmatprep.subr.mxu0 %v1869
  %1994 = vmatpush1.msra.mxu0 %v1868
  %1995 = vmatprep.subr.mxu0 %v1873
  %1996 = vmatpush1.msra.mxu0 %v1872
  %1997 = vmatprep.subr.mxu0 %v1877
  %1998 = vmatpush1.msra.mxu0 %v1876
  %1999 = vmatprep.subr.mxu0 %v1881
  %2000 = vmatpush1.msra.mxu0 %v1880
  %2001 = vmatprep.subr.mxu0 %v1885
  %2002 = vmatpush1.msra.mxu0 %v1884
  %2003 = vmatprep.subr.mxu0 %v1889
  %2004 = vmatpush1.msra.mxu0 %v1888
  %2005 = vmatprep.subr.mxu0 %v1893
  %2006 = vmatpush1.msra.mxu0 %v1892
  %2007 = vmatprep.subr.mxu0 %v1897
  %2008 = vmatpush1.msra.mxu0 %v1896
  %2009 = vmatprep.subr.mxu0 %v1901
  %2010 = vmatpush1.msra.mxu0 %v1900
  %2011 = vmatprep.subr.mxu0 %v1905
  %2012 = vmatpush1.msra.mxu0 %v1904
  %2013 = vmatprep.subr.mxu0 %v1909
  %2014 = vmatpush1.msra.mxu0 %v1908
  %2015 = vmatprep.subr.mxu0 %v1913
  %2016 = vmatpush1.msra.mxu0 %v1912
  %2017 = vmatprep.subr.mxu0 0.0
  %2018 = vmatpush1.msra.mxu0 0.0
  %2019 = vmatprep.subr.mxu0 0.0
  %2020 = vmatpush1.msra.mxu0 0.0
  %2021 = vmatprep.subr.mxu0 0.0
  %2022 = vmatpush1.msra.mxu0 0.0
  %2023 = vmatprep.subr.mxu0 0.0
  %2024 = vmatpush1.msra.mxu0 0.0
  %2025 = vmatprep.subr.mxu0 0.0
  %2026 = vmatpush1.msra.mxu0 0.0
  %2027 = vmatprep.subr.mxu0 0.0
  %2028 = vmatpush1.msra.mxu0 0.0
  %2029 = vmatprep.subr.mxu0 0.0
  %2030 = vmatpush1.msra.mxu0 0.0
  %2031 = vmatprep.subr.mxu0 0.0
  %2032 = vmatpush1.msra.mxu0 0.0
  %2033 = vmatprep.subr.mxu0 0.0
  %2034 = vmatpush1.msra.mxu0 0.0
  %2035 = vmatprep.subr.mxu0 0.0
  %2036 = vmatpush1.msra.mxu0 0.0
  %2037 = vmatprep.subr.mxu0 0.0
  %2038 = vmatpush1.msra.mxu0 0.0
  %2039 = vmatprep.subr.mxu0 0.0
  %2040 = vmatpush1.msra.mxu0 0.0
  %2041 = vmatprep.subr.mxu0 0.0
  %2042 = vmatpush1.msra.mxu0 0.0
  %2043 = vmatprep.subr.mxu0 0.0
  %2044 = vmatpush1.msra.mxu0 0.0
  %2045 = vmatprep.subr.mxu0 0.0
  %2046 = vmatpush1.msra.mxu0 0.0
  %2047 = vmatprep.subr.mxu0 0.0
  %2048 = vmatpush1.msra.mxu0 0.0
  %2049 = vmatprep.mubr.f32.mxu0 0.0
  %2050 = vmatmul.mubr.f32.gmra.mrb[0].mxu0 %v1840
  %v2051 = vpop.f32.mrb[0].mxu0
  %v2052 = vadd.f32 0.0, %v2051
  %v2053 = vpop.f32.mrb[0].mxu0
  %v2054 = vadd.f32 0.0, %v2053
  %2055 = vdwg.mxu0
  %v2056 = vadd.f32 %v1846, %v1981
  %v2057 = vadd.f32 %v1847, %v1983
  %v2058 = vadd.f32 %v1848, %v2052
  %v2059 = vadd.f32 %v1849, %v2054
  %v2060 = vxor.u32 %v2056, 2147483648
  %v2061 = vmul.f32 %v2060, 1.442695
  %v2062 = vpow.pop %v2061
  %v2063 = vadd.f32 %v2062, 1.0
  %v2064 = vrcp.pop %v2063
  %v2065 = vmul.f32 1.0, %v2064
  %v2066 = vxor.u32 %v2057, 2147483648
  %v2067 = vmul.f32 %v2066, 1.442695
  %v2068 = vpow.pop %v2067
  %v2069 = vadd.f32 %v2068, 1.0
  %v2070 = vrcp.pop %v2069
  %v2071 = vmul.f32 1.0, %v2070
  %v2072 = vtanh.pop %v2058
  %v2073 = vxor.u32 %v2059, 2147483648
  %v2074 = vmul.f32 %v2073, 1.442695
  %v2075 = vpow.pop %v2074
  %v2076 = vadd.f32 %v2075, 1.0
  %v2077 = vrcp.pop %v2076
  %v2078 = vmul.f32 1.0, %v2077
  %v2079 = vmul.f32 %v2071, %v1838
  %v2080 = vmul.f32 %v2065, %v2072
  %v2081 = vadd.f32 %v2079, %v2080
  %v2082 = vtanh.pop %v2081
  %v2083 = vmul.f32 %v2078, %v2082
  %s2084 = scalar_lea.vmem [#allocation3], 48
  %2085 = vst [vmem:[%s2084] sm:$0xff] %v2083
  %s2086 = smul.u32 7, 4
  %s2087 = smul.addr %s2086, 8
  %s2088 = scalar_lea.vmem [#allocation2], %s2087
  %v2089 = vld [vmem:[%s2088] sm:$0xff]
  %v2090 = vld [vmem:[%s2088 + $0x8] sm:$0xff]
  %v2091 = vld [vmem:[%s2088 + $0x10] sm:$0xff]
  %v2092 = vld [vmem:[%s2088 + $0x18] sm:$0xff]
  %v2093 = vld [vmem:[%s2] sm:$0xff]
  %v2094 = vld [vmem:[%s2 + $0x8] sm:$0xff]
  %v2095 = vld [vmem:[%s2 + $0x10] sm:$0xff]
  %v2096 = vld [vmem:[%s2 + $0x18] sm:$0xff]
  %v2097 = vld [vmem:[%s2 + $0x20] sm:$0xff]
  %v2098 = vld [vmem:[%s2 + $0x28] sm:$0xff]
  %v2099 = vld [vmem:[%s2 + $0x30] sm:$0xff]
  %v2100 = vld [vmem:[%s2 + $0x38] sm:$0xff]
  %v2101 = vld [vmem:[%s2 + $0x40] sm:$0xff]
  %v2102 = vld [vmem:[%s2 + $0x48] sm:$0xff]
  %v2103 = vld [vmem:[%s2 + $0x50] sm:$0xff]
  %v2104 = vld [vmem:[%s2 + $0x58] sm:$0xff]
  %v2105 = vld [vmem:[%s2 + $0x60] sm:$0xff]
  %v2106 = vld [vmem:[%s2 + $0x68] sm:$0xff]
  %v2107 = vld [vmem:[%s2 + $0x70] sm:$0xff]
  %v2108 = vld [vmem:[%s2 + $0x78] sm:$0xff]
  %v2109 = vld [vmem:[%s2 + $0x80] sm:$0xff]
  %v2110 = vld [vmem:[%s2 + $0x88] sm:$0xff]
  %v2111 = vld [vmem:[%s2 + $0x90] sm:$0xff]
  %v2112 = vld [vmem:[%s2 + $0x98] sm:$0xff]
  %v2113 = vld [vmem:[%s2 + $0xa0] sm:$0xff]
  %v2114 = vld [vmem:[%s2 + $0xa8] sm:$0xff]
  %v2115 = vld [vmem:[%s2 + $0xb0] sm:$0xff]
  %v2116 = vld [vmem:[%s2 + $0xb8] sm:$0xff]
  %v2117 = vld [vmem:[%s2 + $0xc0] sm:$0xff]
  %v2118 = vld [vmem:[%s2 + $0xc8] sm:$0xff]
  %v2119 = vld [vmem:[%s2 + $0xd0] sm:$0xff]
  %v2120 = vld [vmem:[%s2 + $0xd8] sm:$0xff]
  %v2121 = vld [vmem:[%s2 + $0xe0] sm:$0xff]
  %v2122 = vld [vmem:[%s2 + $0xe8] sm:$0xff]
  %v2123 = vld [vmem:[%s2 + $0xf0] sm:$0xff]
  %v2124 = vld [vmem:[%s2 + $0xf8] sm:$0xff]
  %v2125 = vld [vmem:[%s2 + $0x100] sm:$0xff]
  %v2126 = vld [vmem:[%s2 + $0x108] sm:$0xff]
  %v2127 = vld [vmem:[%s2 + $0x110] sm:$0xff]
  %v2128 = vld [vmem:[%s2 + $0x118] sm:$0xff]
  %v2129 = vld [vmem:[%s2 + $0x120] sm:$0xff]
  %v2130 = vld [vmem:[%s2 + $0x128] sm:$0xff]
  %v2131 = vld [vmem:[%s2 + $0x130] sm:$0xff]
  %v2132 = vld [vmem:[%s2 + $0x138] sm:$0xff]
  %v2133 = vld [vmem:[%s2 + $0x140] sm:$0xff]
  %v2134 = vld [vmem:[%s2 + $0x148] sm:$0xff]
  %v2135 = vld [vmem:[%s2 + $0x150] sm:$0xff]
  %v2136 = vld [vmem:[%s2 + $0x158] sm:$0xff]
  %v2137 = vld [vmem:[%s2 + $0x160] sm:$0xff]
  %v2138 = vld [vmem:[%s2 + $0x168] sm:$0xff]
  %v2139 = vld [vmem:[%s2 + $0x170] sm:$0xff]
  %v2140 = vld [vmem:[%s2 + $0x178] sm:$0xff]
  %v2141 = vld [vmem:[%s2 + $0x180] sm:$0xff]
  %v2142 = vld [vmem:[%s2 + $0x188] sm:$0xff]
  %v2143 = vld [vmem:[%s2 + $0x190] sm:$0xff]
  %v2144 = vld [vmem:[%s2 + $0x198] sm:$0xff]
  %v2145 = vld [vmem:[%s2 + $0x1a0] sm:$0xff]
  %v2146 = vld [vmem:[%s2 + $0x1a8] sm:$0xff]
  %v2147 = vld [vmem:[%s2 + $0x1b0] sm:$0xff]
  %v2148 = vld [vmem:[%s2 + $0x1b8] sm:$0xff]
  %v2149 = vld [vmem:[%s2 + $0x1c0] sm:$0xff]
  %v2150 = vld [vmem:[%s2 + $0x1c8] sm:$0xff]
  %v2151 = vld [vmem:[%s2 + $0x1d0] sm:$0xff]
  %v2152 = vld [vmem:[%s2 + $0x1d8] sm:$0xff]
  %v2153 = vld [vmem:[%s2 + $0x1e0] sm:$0xff]
  %v2154 = vld [vmem:[%s2 + $0x1e8] sm:$0xff]
  %v2155 = vld [vmem:[%s2 + $0x1f0] sm:$0xff]
  %v2156 = vld [vmem:[%s2 + $0x1f8] sm:$0xff]
  %2157 = vmatprep.subr.mxu0 %v2094
  %2158 = vmatpush1.msra.mxu0 %v2093
  %2159 = vmatprep.subr.mxu0 %v2098
  %2160 = vmatpush1.msra.mxu0 %v2097
  %2161 = vmatprep.subr.mxu0 %v2102
  %2162 = vmatpush1.msra.mxu0 %v2101
  %2163 = vmatprep.subr.mxu0 %v2106
  %2164 = vmatpush1.msra.mxu0 %v2105
  %2165 = vmatprep.subr.mxu0 %v2110
  %2166 = vmatpush1.msra.mxu0 %v2109
  %2167 = vmatprep.subr.mxu0 %v2114
  %2168 = vmatpush1.msra.mxu0 %v2113
  %2169 = vmatprep.subr.mxu0 %v2118
  %2170 = vmatpush1.msra.mxu0 %v2117
  %2171 = vmatprep.subr.mxu0 %v2122
  %2172 = vmatpush1.msra.mxu0 %v2121
  %2173 = vmatprep.subr.mxu0 %v2126
  %2174 = vmatpush1.msra.mxu0 %v2125
  %2175 = vmatprep.subr.mxu0 %v2130
  %2176 = vmatpush1.msra.mxu0 %v2129
  %2177 = vmatprep.subr.mxu0 %v2134
  %2178 = vmatpush1.msra.mxu0 %v2133
  %2179 = vmatprep.subr.mxu0 %v2138
  %2180 = vmatpush1.msra.mxu0 %v2137
  %2181 = vmatprep.subr.mxu0 %v2142
  %2182 = vmatpush1.msra.mxu0 %v2141
  %2183 = vmatprep.subr.mxu0 %v2146
  %2184 = vmatpush1.msra.mxu0 %v2145
  %2185 = vmatprep.subr.mxu0 %v2150
  %2186 = vmatpush1.msra.mxu0 %v2149
  %2187 = vmatprep.subr.mxu0 %v2154
  %2188 = vmatpush1.msra.mxu0 %v2153
  %2189 = vmatprep.subr.mxu0 0.0
  %2190 = vmatpush1.msra.mxu0 0.0
  %2191 = vmatprep.subr.mxu0 0.0
  %2192 = vmatpush1.msra.mxu0 0.0
  %2193 = vmatprep.subr.mxu0 0.0
  %2194 = vmatpush1.msra.mxu0 0.0
  %2195 = vmatprep.subr.mxu0 0.0
  %2196 = vmatpush1.msra.mxu0 0.0
  %2197 = vmatprep.subr.mxu0 0.0
  %2198 = vmatpush1.msra.mxu0 0.0
  %2199 = vmatprep.subr.mxu0 0.0
  %2200 = vmatpush1.msra.mxu0 0.0
  %2201 = vmatprep.subr.mxu0 0.0
  %2202 = vmatpush1.msra.mxu0 0.0
  %2203 = vmatprep.subr.mxu0 0.0
  %2204 = vmatpush1.msra.mxu0 0.0
  %2205 = vmatprep.subr.mxu0 0.0
  %2206 = vmatpush1.msra.mxu0 0.0
  %2207 = vmatprep.subr.mxu0 0.0
  %2208 = vmatpush1.msra.mxu0 0.0
  %2209 = vmatprep.subr.mxu0 0.0
  %2210 = vmatpush1.msra.mxu0 0.0
  %2211 = vmatprep.subr.mxu0 0.0
  %2212 = vmatpush1.msra.mxu0 0.0
  %2213 = vmatprep.subr.mxu0 0.0
  %2214 = vmatpush1.msra.mxu0 0.0
  %2215 = vmatprep.subr.mxu0 0.0
  %2216 = vmatpush1.msra.mxu0 0.0
  %2217 = vmatprep.subr.mxu0 0.0
  %2218 = vmatpush1.msra.mxu0 0.0
  %2219 = vmatprep.subr.mxu0 0.0
  %2220 = vmatpush1.msra.mxu0 0.0
  %2221 = vmatprep.mubr.f32.mxu0 0.0
  %2222 = vmatmul.mubr.f32.gmra.mrb[0].mxu0 %v2083
  %v2223 = vpop.f32.mrb[0].mxu0
  %v2224 = vadd.f32 0.0, %v2223
  %v2225 = vpop.f32.mrb[0].mxu0
  %v2226 = vadd.f32 0.0, %v2225
  %2227 = vdwg.mxu0
  %2228 = vmatprep.subr.mxu0 %v2096
  %2229 = vmatpush1.msra.mxu0 %v2095
  %2230 = vmatprep.subr.mxu0 %v2100
  %2231 = vmatpush1.msra.mxu0 %v2099
  %2232 = vmatprep.subr.mxu0 %v2104
  %2233 = vmatpush1.msra.mxu0 %v2103
  %2234 = vmatprep.subr.mxu0 %v2108
  %2235 = vmatpush1.msra.mxu0 %v2107
  %2236 = vmatprep.subr.mxu0 %v2112
  %2237 = vmatpush1.msra.mxu0 %v2111
  %2238 = vmatprep.subr.mxu0 %v2116
  %2239 = vmatpush1.msra.mxu0 %v2115
  %2240 = vmatprep.subr.mxu0 %v2120
  %2241 = vmatpush1.msra.mxu0 %v2119
  %2242 = vmatprep.subr.mxu0 %v2124
  %2243 = vmatpush1.msra.mxu0 %v2123
  %2244 = vmatprep.subr.mxu0 %v2128
  %2245 = vmatpush1.msra.mxu0 %v2127
  %2246 = vmatprep.subr.mxu0 %v2132
  %2247 = vmatpush1.msra.mxu0 %v2131
  %2248 = vmatprep.subr.mxu0 %v2136
  %2249 = vmatpush1.msra.mxu0 %v2135
  %2250 = vmatprep.subr.mxu0 %v2140
  %2251 = vmatpush1.msra.mxu0 %v2139
  %2252 = vmatprep.subr.mxu0 %v2144
  %2253 = vmatpush1.msra.mxu0 %v2143
  %2254 = vmatprep.subr.mxu0 %v2148
  %2255 = vmatpush1.msra.mxu0 %v2147
  %2256 = vmatprep.subr.mxu0 %v2152
  %2257 = vmatpush1.msra.mxu0 %v2151
  %2258 = vmatprep.subr.mxu0 %v2156
  %2259 = vmatpush1.msra.mxu0 %v2155
  %2260 = vmatprep.subr.mxu0 0.0
  %2261 = vmatpush1.msra.mxu0 0.0
  %2262 = vmatprep.subr.mxu0 0.0
  %2263 = vmatpush1.msra.mxu0 0.0
  %2264 = vmatprep.subr.mxu0 0.0
  %2265 = vmatpush1.msra.mxu0 0.0
  %2266 = vmatprep.subr.mxu0 0.0
  %2267 = vmatpush1.msra.mxu0 0.0
  %2268 = vmatprep.subr.mxu0 0.0
  %2269 = vmatpush1.msra.mxu0 0.0
  %2270 = vmatprep.subr.mxu0 0.0
  %2271 = vmatpush1.msra.mxu0 0.0
  %2272 = vmatprep.subr.mxu0 0.0
  %2273 = vmatpush1.msra.mxu0 0.0
  %2274 = vmatprep.subr.mxu0 0.0
  %2275 = vmatpush1.msra.mxu0 0.0
  %2276 = vmatprep.subr.mxu0 0.0
  %2277 = vmatpush1.msra.mxu0 0.0
  %2278 = vmatprep.subr.mxu0 0.0
  %2279 = vmatpush1.msra.mxu0 0.0
  %2280 = vmatprep.subr.mxu0 0.0
  %2281 = vmatpush1.msra.mxu0 0.0
  %2282 = vmatprep.subr.mxu0 0.0
  %2283 = vmatpush1.msra.mxu0 0.0
  %2284 = vmatprep.subr.mxu0 0.0
  %2285 = vmatpush1.msra.mxu0 0.0
  %2286 = vmatprep.subr.mxu0 0.0
  %2287 = vmatpush1.msra.mxu0 0.0
  %2288 = vmatprep.subr.mxu0 0.0
  %2289 = vmatpush1.msra.mxu0 0.0
  %2290 = vmatprep.subr.mxu0 0.0
  %2291 = vmatpush1.msra.mxu0 0.0
  %2292 = vmatprep.mubr.f32.mxu0 0.0
  %2293 = vmatmul.mubr.f32.gmra.mrb[0].mxu0 %v2083
  %v2294 = vpop.f32.mrb[0].mxu0
  %v2295 = vadd.f32 0.0, %v2294
  %v2296 = vpop.f32.mrb[0].mxu0
  %v2297 = vadd.f32 0.0, %v2296
  %2298 = vdwg.mxu0
  %v2299 = vadd.f32 %v2089, %v2224
  %v2300 = vadd.f32 %v2090, %v2226
  %v2301 = vadd.f32 %v2091, %v2295
  %v2302 = vadd.f32 %v2092, %v2297
  %v2303 = vxor.u32 %v2299, 2147483648
  %v2304 = vmul.f32 %v2303, 1.442695
  %v2305 = vpow.pop %v2304
  %v2306 = vadd.f32 %v2305, 1.0
  %v2307 = vrcp.pop %v2306
  %v2308 = vmul.f32 1.0, %v2307
  %v2309 = vxor.u32 %v2300, 2147483648
  %v2310 = vmul.f32 %v2309, 1.442695
  %v2311 = vpow.pop %v2310
  %v2312 = vadd.f32 %v2311, 1.0
  %v2313 = vrcp.pop %v2312
  %v2314 = vmul.f32 1.0, %v2313
  %v2315 = vtanh.pop %v2301
  %v2316 = vxor.u32 %v2302, 2147483648
  %v2317 = vmul.f32 %v2316, 1.442695
  %v2318 = vpow.pop %v2317
  %v2319 = vadd.f32 %v2318, 1.0
  %v2320 = vrcp.pop %v2319
  %v2321 = vmul.f32 1.0, %v2320
  %v2322 = vmul.f32 %v2314, %v2081
  %v2323 = vmul.f32 %v2308, %v2315
  %v2324 = vadd.f32 %v2322, %v2323
  %v2325 = vtanh.pop %v2324
  %v2326 = vmul.f32 %v2321, %v2325
  %s2327 = scalar_lea.vmem [#allocation3], 56
  %2328 = vst [vmem:[%s2327] sm:$0xff] %v2326
  %v2329 = vld [vmem:[#allocation3] sm:$0xff]
  %v2330 = vld [vmem:[#allocation3 + $0x8] sm:$0xff]
  %v2331 = vld [vmem:[#allocation3 + $0x10] sm:$0xff]
  %v2332 = vld [vmem:[#allocation3 + $0x18] sm:$0xff]
  %v2333 = vld [vmem:[#allocation3 + $0x20] sm:$0xff]
  %v2334 = vld [vmem:[#allocation3 + $0x28] sm:$0xff]
  %v2335 = vld [vmem:[#allocation3 + $0x30] sm:$0xff]
  %v2336 = vld [vmem:[#allocation3 + $0x38] sm:$0xff]
  %v2337 = vld [vmem:[%s4] sm:$0xff]
  %v2338 = vld [vmem:[%s4 + $0x8] sm:$0xff]
  %v2339 = vld [vmem:[%s4 + $0x10] sm:$0xff]
  %v2340 = vld [vmem:[%s4 + $0x18] sm:$0xff]
  %v2341 = vld [vmem:[%s4 + $0x20] sm:$0xff]
  %v2342 = vld [vmem:[%s4 + $0x28] sm:$0xff]
  %v2343 = vld [vmem:[%s4 + $0x30] sm:$0xff]
  %v2344 = vld [vmem:[%s4 + $0x38] sm:$0xff]
  %v2345 = vld [vmem:[%s4 + $0x40] sm:$0xff]
  %v2346 = vld [vmem:[%s4 + $0x48] sm:$0xff]
  %v2347 = vld [vmem:[%s4 + $0x50] sm:$0xff]
  %v2348 = vld [vmem:[%s4 + $0x58] sm:$0xff]
  %v2349 = vld [vmem:[%s4 + $0x60] sm:$0xff]
  %v2350 = vld [vmem:[%s4 + $0x68] sm:$0xff]
  %v2351 = vld [vmem:[%s4 + $0x70] sm:$0xff]
  %v2352 = vld [vmem:[%s4 + $0x78] sm:$0xff]
  %v2353 = vld [vmem:[%s4 + $0x80] sm:$0xff]
  %v2354 = vld [vmem:[%s4 + $0x88] sm:$0xff]
  %v2355 = vld [vmem:[%s4 + $0x90] sm:$0xff]
  %v2356 = vld [vmem:[%s4 + $0x98] sm:$0xff]
  %v2357 = vld [vmem:[%s4 + $0xa0] sm:$0xff]
  %v2358 = vld [vmem:[%s4 + $0xa8] sm:$0xff]
  %v2359 = vld [vmem:[%s4 + $0xb0] sm:$0xff]
  %v2360 = vld [vmem:[%s4 + $0xb8] sm:$0xff]
  %v2361 = vld [vmem:[%s4 + $0xc0] sm:$0xff]
  %v2362 = vld [vmem:[%s4 + $0xc8] sm:$0xff]
  %v2363 = vld [vmem:[%s4 + $0xd0] sm:$0xff]
  %v2364 = vld [vmem:[%s4 + $0xd8] sm:$0xff]
  %v2365 = vld [vmem:[%s4 + $0xe0] sm:$0xff]
  %v2366 = vld [vmem:[%s4 + $0xe8] sm:$0xff]
  %v2367 = vld [vmem:[%s4 + $0xf0] sm:$0xff]
  %v2368 = vld [vmem:[%s4 + $0xf8] sm:$0xff]
  %v2369 = vld [vmem:[%s4 + $0x100] sm:$0xff]
  %v2370 = vld [vmem:[%s4 + $0x108] sm:$0xff]
  %v2371 = vld [vmem:[%s4 + $0x110] sm:$0xff]
  %v2372 = vld [vmem:[%s4 + $0x118] sm:$0xff]
  %v2373 = vld [vmem:[%s4 + $0x120] sm:$0xff]
  %v2374 = vld [vmem:[%s4 + $0x128] sm:$0xff]
  %v2375 = vld [vmem:[%s4 + $0x130] sm:$0xff]
  %v2376 = vld [vmem:[%s4 + $0x138] sm:$0xff]
  %v2377 = vld [vmem:[%s4 + $0x140] sm:$0xff]
  %v2378 = vld [vmem:[%s4 + $0x148] sm:$0xff]
  %v2379 = vld [vmem:[%s4 + $0x150] sm:$0xff]
  %v2380 = vld [vmem:[%s4 + $0x158] sm:$0xff]
  %v2381 = vld [vmem:[%s4 + $0x160] sm:$0xff]
  %v2382 = vld [vmem:[%s4 + $0x168] sm:$0xff]
  %v2383 = vld [vmem:[%s4 + $0x170] sm:$0xff]
  %v2384 = vld [vmem:[%s4 + $0x178] sm:$0xff]
  %v2385 = vld [vmem:[%s4 + $0x180] sm:$0xff]
  %v2386 = vld [vmem:[%s4 + $0x188] sm:$0xff]
  %v2387 = vld [vmem:[%s4 + $0x190] sm:$0xff]
  %v2388 = vld [vmem:[%s4 + $0x198] sm:$0xff]
  %v2389 = vld [vmem:[%s4 + $0x1a0] sm:$0xff]
  %v2390 = vld [vmem:[%s4 + $0x1a8] sm:$0xff]
  %v2391 = vld [vmem:[%s4 + $0x1b0] sm:$0xff]
  %v2392 = vld [vmem:[%s4 + $0x1b8] sm:$0xff]
  %v2393 = vld [vmem:[%s4 + $0x1c0] sm:$0xff]
  %v2394 = vld [vmem:[%s4 + $0x1c8] sm:$0xff]
  %v2395 = vld [vmem:[%s4 + $0x1d0] sm:$0xff]
  %v2396 = vld [vmem:[%s4 + $0x1d8] sm:$0xff]
  %v2397 = vld [vmem:[%s4 + $0x1e0] sm:$0xff]
  %v2398 = vld [vmem:[%s4 + $0x1e8] sm:$0xff]
  %v2399 = vld [vmem:[%s4 + $0x1f0] sm:$0xff]
  %v2400 = vld [vmem:[%s4 + $0x1f8] sm:$0xff]
  %v2401 = vld [vmem:[%s6] sm:$0xf]
  %v2403 = vlaneseq
  %v2404 = vshrl.u32 %v2403, 7
  %v2405 = vsub.s32 0, %v2404
  %v2406 = vrot.slane %v2401, %v2405
  %v2407 = vlaneseq
  %v2408 = vshrl.u32 %v2407, 7
  %v2409 = vsub.s32 1, %v2408
  %v2410 = vrot.slane %v2401, %v2409
  %v2411 = vlaneseq
  %v2412 = vshrl.u32 %v2411, 7
  %v2413 = vsub.s32 2, %v2412
  %v2414 = vrot.slane %v2401, %v2413
  %v2415 = vlaneseq
  %v2416 = vshrl.u32 %v2415, 7
  %v2417 = vsub.s32 3, %v2416
  %v2418 = vrot.slane %v2401, %v2417
  %2423 = vmatprep.subr.mxu0 %v2338
  %2424 = vmatpush1.msra.mxu0 %v2337
  %2425 = vmatprep.subr.mxu0 %v2342
  %2426 = vmatpush1.msra.mxu0 %v2341
  %2427 = vmatprep.subr.mxu0 %v2346
  %2428 = vmatpush1.msra.mxu0 %v2345
  %2429 = vmatprep.subr.mxu0 %v2350
  %2430 = vmatpush1.msra.mxu0 %v2349
  %2431 = vmatprep.subr.mxu0 %v2354
  %2432 = vmatpush1.msra.mxu0 %v2353
  %2433 = vmatprep.subr.mxu0 %v2358
  %2434 = vmatpush1.msra.mxu0 %v2357
  %2435 = vmatprep.subr.mxu0 %v2362
  %2436 = vmatpush1.msra.mxu0 %v2361
  %2437 = vmatprep.subr.mxu0 %v2366
  %2438 = vmatpush1.msra.mxu0 %v2365
  %2439 = vmatprep.subr.mxu0 %v2370
  %2440 = vmatpush1.msra.mxu0 %v2369
  %2441 = vmatprep.subr.mxu0 %v2374
  %2442 = vmatpush1.msra.mxu0 %v2373
  %2443 = vmatprep.subr.mxu0 %v2378
  %2444 = vmatpush1.msra.mxu0 %v2377
  %2445 = vmatprep.subr.mxu0 %v2382
  %2446 = vmatpush1.msra.mxu0 %v2381
  %2447 = vmatprep.subr.mxu0 %v2386
  %2448 = vmatpush1.msra.mxu0 %v2385
  %2449 = vmatprep.subr.mxu0 %v2390
  %2450 = vmatpush1.msra.mxu0 %v2389
  %2451 = vmatprep.subr.mxu0 %v2394
  %2452 = vmatpush1.msra.mxu0 %v2393
  %2453 = vmatprep.subr.mxu0 %v2398
  %2454 = vmatpush1.msra.mxu0 %v2397
  %2455 = vmatprep.subr.mxu0 0.0
  %2456 = vmatpush1.msra.mxu0 0.0
  %2457 = vmatprep.subr.mxu0 0.0
  %2458 = vmatpush1.msra.mxu0 0.0
  %2459 = vmatprep.subr.mxu0 0.0
  %2460 = vmatpush1.msra.mxu0 0.0
  %2461 = vmatprep.subr.mxu0 0.0
  %2462 = vmatpush1.msra.mxu0 0.0
  %2463 = vmatprep.subr.mxu0 0.0
  %2464 = vmatpush1.msra.mxu0 0.0
  %2465 = vmatprep.subr.mxu0 0.0
  %2466 = vmatpush1.msra.mxu0 0.0
  %2467 = vmatprep.subr.mxu0 0.0
  %2468 = vmatpush1.msra.mxu0 0.0
  %2469 = vmatprep.subr.mxu0 0.0
  %2470 = vmatpush1.msra.mxu0 0.0
  %2471 = vmatprep.subr.mxu0 0.0
  %2472 = vmatpush1.msra.mxu0 0.0
  %2473 = vmatprep.subr.mxu0 0.0
  %2474 = vmatpush1.msra.mxu0 0.0
  %2475 = vmatprep.subr.mxu0 0.0
  %2476 = vmatpush1.msra.mxu0 0.0
  %2477 = vmatprep.subr.mxu0 0.0
  %2478 = vmatpush1.msra.mxu0 0.0
  %2479 = vmatprep.subr.mxu0 0.0
  %2480 = vmatpush1.msra.mxu0 0.0
  %2481 = vmatprep.subr.mxu0 0.0
  %2482 = vmatpush1.msra.mxu0 0.0
  %2483 = vmatprep.subr.mxu0 0.0
  %2484 = vmatpush1.msra.mxu0 0.0
  %2485 = vmatprep.subr.mxu0 0.0
  %2486 = vmatpush1.msra.mxu0 0.0
  %2487 = vmatprep.mubr.f32.mxu0 0.0
  %2488 = vmatmul.mubr.f32.gmra.mrb[0].mxu0 %v2329
  %v2489 = vpop.f32.mrb[0].mxu0
  %v2490 = vadd.f32 %v2406, %v2489
  %v2491 = vpop.f32.mrb[0].mxu0
  %v2492 = vadd.f32 %v2410, %v2491
  %2493 = vmatprep.mubr.f32.mxu0 0.0
  %2494 = vmatmul.mubr.f32.gmra.mrb[0].mxu0 %v2330
  %v2495 = vpop.f32.mrb[0].mxu0
  %v2496 = vadd.f32 %v2406, %v2495
  %v2497 = vpop.f32.mrb[0].mxu0
  %v2498 = vadd.f32 %v2410, %v2497
  %2499 = vmatprep.mubr.f32.mxu0 0.0
  %2500 = vmatmul.mubr.f32.gmra.mrb[0].mxu0 %v2331
  %v2501 = vpop.f32.mrb[0].mxu0
  %v2502 = vadd.f32 %v2406, %v2501
  %v2503 = vpop.f32.mrb[0].mxu0
  %v2504 = vadd.f32 %v2410, %v2503
  %2505 = vmatprep.mubr.f32.mxu0 0.0
  %2506 = vmatmul.mubr.f32.gmra.mrb[0].mxu0 %v2332
  %v2507 = vpop.f32.mrb[0].mxu0
  %v2508 = vadd.f32 %v2406, %v2507
  %v2509 = vpop.f32.mrb[0].mxu0
  %v2510 = vadd.f32 %v2410, %v2509
  %2511 = vmatprep.mubr.f32.mxu0 0.0
  %2512 = vmatmul.mubr.f32.gmra.mrb[0].mxu0 %v2333
  %v2513 = vpop.f32.mrb[0].mxu0
  %v2514 = vadd.f32 %v2406, %v2513
  %v2515 = vpop.f32.mrb[0].mxu0
  %v2516 = vadd.f32 %v2410, %v2515
  %2517 = vmatprep.mubr.f32.mxu0 0.0
  %2518 = vmatmul.mubr.f32.gmra.mrb[0].mxu0 %v2334
  %v2519 = vpop.f32.mrb[0].mxu0
  %v2520 = vadd.f32 %v2406, %v2519
  %v2521 = vpop.f32.mrb[0].mxu0
  %v2522 = vadd.f32 %v2410, %v2521
  %2523 = vmatprep.mubr.f32.mxu0 0.0
  %2524 = vmatmul.mubr.f32.gmra.mrb[0].mxu0 %v2335
  %v2525 = vpop.f32.mrb[0].mxu0
  %v2526 = vadd.f32 %v2406, %v2525
  %v2527 = vpop.f32.mrb[0].mxu0
  %v2528 = vadd.f32 %v2410, %v2527
  %2529 = vmatprep.mubr.f32.mxu0 0.0
  %2530 = vmatmul.mubr.f32.gmra.mrb[0].mxu0 %v2336
  %v2531 = vpop.f32.mrb[0].mxu0
  %v2532 = vadd.f32 %v2406, %v2531
  %v2533 = vpop.f32.mrb[0].mxu0
  %v2534 = vadd.f32 %v2410, %v2533
  %2535 = vdwg.mxu0
  %2536 = vmatprep.subr.mxu0 %v2340
  %2537 = vmatpush1.msra.mxu0 %v2339
  %2538 = vmatprep.subr.mxu0 %v2344
  %2539 = vmatpush1.msra.mxu0 %v2343
  %2540 = vmatprep.subr.mxu0 %v2348
  %2541 = vmatpush1.msra.mxu0 %v2347
  %2542 = vmatprep.subr.mxu0 %v2352
  %2543 = vmatpush1.msra.mxu0 %v2351
  %2544 = vmatprep.subr.mxu0 %v2356
  %2545 = vmatpush1.msra.mxu0 %v2355
  %2546 = vmatprep.subr.mxu0 %v2360
  %2547 = vmatpush1.msra.mxu0 %v2359
  %2548 = vmatprep.subr.mxu0 %v2364
  %2549 = vmatpush1.msra.mxu0 %v2363
  %2550 = vmatprep.subr.mxu0 %v2368
  %2551 = vmatpush1.msra.mxu0 %v2367
  %2552 = vmatprep.subr.mxu0 %v2372
  %2553 = vmatpush1.msra.mxu0 %v2371
  %2554 = vmatprep.subr.mxu0 %v2376
  %2555 = vmatpush1.msra.mxu0 %v2375
  %2556 = vmatprep.subr.mxu0 %v2380
  %2557 = vmatpush1.msra.mxu0 %v2379
  %2558 = vmatprep.subr.mxu0 %v2384
  %2559 = vmatpush1.msra.mxu0 %v2383
  %2560 = vmatprep.subr.mxu0 %v2388
  %2561 = vmatpush1.msra.mxu0 %v2387
  %2562 = vmatprep.subr.mxu0 %v2392
  %2563 = vmatpush1.msra.mxu0 %v2391
  %2564 = vmatprep.subr.mxu0 %v2396
  %2565 = vmatpush1.msra.mxu0 %v2395
  %2566 = vmatprep.subr.mxu0 %v2400
  %2567 = vmatpush1.msra.mxu0 %v2399
  %2568 = vmatprep.subr.mxu0 0.0
  %2569 = vmatpush1.msra.mxu0 0.0
  %2570 = vmatprep.subr.mxu0 0.0
  %2571 = vmatpush1.msra.mxu0 0.0
  %2572 = vmatprep.subr.mxu0 0.0
  %2573 = vmatpush1.msra.mxu0 0.0
  %2574 = vmatprep.subr.mxu0 0.0
  %2575 = vmatpush1.msra.mxu0 0.0
  %2576 = vmatprep.subr.mxu0 0.0
  %2577 = vmatpush1.msra.mxu0 0.0
  %2578 = vmatprep.subr.mxu0 0.0
  %2579 = vmatpush1.msra.mxu0 0.0
  %2580 = vmatprep.subr.mxu0 0.0
  %2581 = vmatpush1.msra.mxu0 0.0
  %2582 = vmatprep.subr.mxu0 0.0
  %2583 = vmatpush1.msra.mxu0 0.0
  %2584 = vmatprep.subr.mxu0 0.0
  %2585 = vmatpush1.msra.mxu0 0.0
  %2586 = vmatprep.subr.mxu0 0.0
  %2587 = vmatpush1.msra.mxu0 0.0
  %2588 = vmatprep.subr.mxu0 0.0
  %2589 = vmatpush1.msra.mxu0 0.0
  %2590 = vmatprep.subr.mxu0 0.0
  %2591 = vmatpush1.msra.mxu0 0.0
  %2592 = vmatprep.subr.mxu0 0.0
  %2593 = vmatpush1.msra.mxu0 0.0
  %2594 = vmatprep.subr.mxu0 0.0
  %2595 = vmatpush1.msra.mxu0 0.0
  %2596 = vmatprep.subr.mxu0 0.0
  %2597 = vmatpush1.msra.mxu0 0.0
  %2598 = vmatprep.subr.mxu0 0.0
  %2599 = vmatpush1.msra.mxu0 0.0
  %2600 = vmatprep.mubr.f32.mxu0 0.0
  %2601 = vmatmul.mubr.f32.gmra.mrb[0].mxu0 %v2329
  %v2602 = vpop.f32.mrb[0].mxu0
  %v2603 = vadd.f32 %v2414, %v2602
  %v2604 = vpop.f32.mrb[0].mxu0
  %v2605 = vadd.f32 %v2418, %v2604
  %2606 = vmatprep.mubr.f32.mxu0 0.0
  %2607 = vmatmul.mubr.f32.gmra.mrb[0].mxu0 %v2330
  %v2608 = vpop.f32.mrb[0].mxu0
  %v2609 = vadd.f32 %v2414, %v2608
  %v2610 = vpop.f32.mrb[0].mxu0
  %v2611 = vadd.f32 %v2418, %v2610
  %2612 = vmatprep.mubr.f32.mxu0 0.0
  %2613 = vmatmul.mubr.f32.gmra.mrb[0].mxu0 %v2331
  %v2614 = vpop.f32.mrb[0].mxu0
  %v2615 = vadd.f32 %v2414, %v2614
  %v2616 = vpop.f32.mrb[0].mxu0
  %v2617 = vadd.f32 %v2418, %v2616
  %2618 = vmatprep.mubr.f32.mxu0 0.0
  %2619 = vmatmul.mubr.f32.gmra.mrb[0].mxu0 %v2332
  %v2620 = vpop.f32.mrb[0].mxu0
  %v2621 = vadd.f32 %v2414, %v2620
  %v2622 = vpop.f32.mrb[0].mxu0
  %v2623 = vadd.f32 %v2418, %v2622
  %2624 = vmatprep.mubr.f32.mxu0 0.0
  %2625 = vmatmul.mubr.f32.gmra.mrb[0].mxu0 %v2333
  %v2626 = vpop.f32.mrb[0].mxu0
  %v2627 = vadd.f32 %v2414, %v2626
  %v2628 = vpop.f32.mrb[0].mxu0
  %v2629 = vadd.f32 %v2418, %v2628
  %2630 = vmatprep.mubr.f32.mxu0 0.0
  %2631 = vmatmul.mubr.f32.gmra.mrb[0].mxu0 %v2334
  %v2632 = vpop.f32.mrb[0].mxu0
  %v2633 = vadd.f32 %v2414, %v2632
  %v2634 = vpop.f32.mrb[0].mxu0
  %v2635 = vadd.f32 %v2418, %v2634
  %2636 = vmatprep.mubr.f32.mxu0 0.0
  %2637 = vmatmul.mubr.f32.gmra.mrb[0].mxu0 %v2335
  %v2638 = vpop.f32.mrb[0].mxu0
  %v2639 = vadd.f32 %v2414, %v2638
  %v2640 = vpop.f32.mrb[0].mxu0
  %v2641 = vadd.f32 %v2418, %v2640
  %2642 = vmatprep.mubr.f32.mxu0 0.0
  %2643 = vmatmul.mubr.f32.gmra.mrb[0].mxu0 %v2336
  %v2644 = vpop.f32.mrb[0].mxu0
  %v2645 = vadd.f32 %v2414, %v2644
  %v2646 = vpop.f32.mrb[0].mxu0
  %v2647 = vadd.f32 %v2418, %v2646
  %2648 = vdwg.mxu0
  %2649 = vst [vmem:[#allocation2] sm:$0xff] %v2490
  %2650 = vst [vmem:[#allocation2 + $0x8] sm:$0xff] %v2492
  %2651 = vst [vmem:[#allocation2 + $0x10] sm:$0xff] %v2603
  %2652 = vst [vmem:[#allocation2 + $0x18] sm:$0xff] %v2605
  %2653 = vst [vmem:[#allocation2 + $0x20] sm:$0xff] %v2496
  %2654 = vst [vmem:[#allocation2 + $0x28] sm:$0xff] %v2498
  %2655 = vst [vmem:[#allocation2 + $0x30] sm:$0xff] %v2609
  %2656 = vst [vmem:[#allocation2 + $0x38] sm:$0xff] %v2611
  %2657 = vst [vmem:[#allocation2 + $0x40] sm:$0xff] %v2502
  %2658 = vst [vmem:[#allocation2 + $0x48] sm:$0xff] %v2504
  %2659 = vst [vmem:[#allocation2 + $0x50] sm:$0xff] %v2615
  %2660 = vst [vmem:[#allocation2 + $0x58] sm:$0xff] %v2617
  %2661 = vst [vmem:[#allocation2 + $0x60] sm:$0xff] %v2508
  %2662 = vst [vmem:[#allocation2 + $0x68] sm:$0xff] %v2510
  %2663 = vst [vmem:[#allocation2 + $0x70] sm:$0xff] %v2621
  %2664 = vst [vmem:[#allocation2 + $0x78] sm:$0xff] %v2623
  %2665 = vst [vmem:[#allocation2 + $0x80] sm:$0xff] %v2514
  %2666 = vst [vmem:[#allocation2 + $0x88] sm:$0xff] %v2516
  %2667 = vst [vmem:[#allocation2 + $0x90] sm:$0xff] %v2627
  %2668 = vst [vmem:[#allocation2 + $0x98] sm:$0xff] %v2629
  %2669 = vst [vmem:[#allocation2 + $0xa0] sm:$0xff] %v2520
  %2670 = vst [vmem:[#allocation2 + $0xa8] sm:$0xff] %v2522
  %2671 = vst [vmem:[#allocation2 + $0xb0] sm:$0xff] %v2633
  %2672 = vst [vmem:[#allocation2 + $0xb8] sm:$0xff] %v2635
  %2673 = vst [vmem:[#allocation2 + $0xc0] sm:$0xff] %v2526
  %2674 = vst [vmem:[#allocation2 + $0xc8] sm:$0xff] %v2528
  %2675 = vst [vmem:[#allocation2 + $0xd0] sm:$0xff] %v2639
  %2676 = vst [vmem:[#allocation2 + $0xd8] sm:$0xff] %v2641
  %2677 = vst [vmem:[#allocation2 + $0xe0] sm:$0xff] %v2532
  %2678 = vst [vmem:[#allocation2 + $0xe8] sm:$0xff] %v2534
  %2679 = vst [vmem:[#allocation2 + $0xf0] sm:$0xff] %v2645
  %2680 = vst [vmem:[#allocation2 + $0xf8] sm:$0xff] %v2647
  %v2681 = vld [vmem:[%s388] sm:$0xff]
  %v2682 = vld [vmem:[%s388 + $0x8] sm:$0xff]
  %v2683 = vld [vmem:[%s388 + $0x10] sm:$0xff]
  %v2684 = vld [vmem:[%s388 + $0x18] sm:$0xff]
  %v2685 = vld [vmem:[%s5] sm:$0xff]
  %v2686 = vld [vmem:[%s5 + $0x8] sm:$0xff]
  %v2687 = vld [vmem:[%s5 + $0x10] sm:$0xff]
  %v2688 = vld [vmem:[%s5 + $0x18] sm:$0xff]
  %v2689 = vld [vmem:[%s5 + $0x20] sm:$0xff]
  %v2690 = vld [vmem:[%s5 + $0x28] sm:$0xff]
  %v2691 = vld [vmem:[%s5 + $0x30] sm:$0xff]
  %v2692 = vld [vmem:[%s5 + $0x38] sm:$0xff]
  %v2693 = vld [vmem:[%s5 + $0x40] sm:$0xff]
  %v2694 = vld [vmem:[%s5 + $0x48] sm:$0xff]
  %v2695 = vld [vmem:[%s5 + $0x50] sm:$0xff]
  %v2696 = vld [vmem:[%s5 + $0x58] sm:$0xff]
  %v2697 = vld [vmem:[%s5 + $0x60] sm:$0xff]
  %v2698 = vld [vmem:[%s5 + $0x68] sm:$0xff]
  %v2699 = vld [vmem:[%s5 + $0x70] sm:$0xff]
  %v2700 = vld [vmem:[%s5 + $0x78] sm:$0xff]
  %v2701 = vld [vmem:[%s5 + $0x80] sm:$0xff]
  %v2702 = vld [vmem:[%s5 + $0x88] sm:$0xff]
  %v2703 = vld [vmem:[%s5 + $0x90] sm:$0xff]
  %v2704 = vld [vmem:[%s5 + $0x98] sm:$0xff]
  %v2705 = vld [vmem:[%s5 + $0xa0] sm:$0xff]
  %v2706 = vld [vmem:[%s5 + $0xa8] sm:$0xff]
  %v2707 = vld [vmem:[%s5 + $0xb0] sm:$0xff]
  %v2708 = vld [vmem:[%s5 + $0xb8] sm:$0xff]
  %v2709 = vld [vmem:[%s5 + $0xc0] sm:$0xff]
  %v2710 = vld [vmem:[%s5 + $0xc8] sm:$0xff]
  %v2711 = vld [vmem:[%s5 + $0xd0] sm:$0xff]
  %v2712 = vld [vmem:[%s5 + $0xd8] sm:$0xff]
  %v2713 = vld [vmem:[%s5 + $0xe0] sm:$0xff]
  %v2714 = vld [vmem:[%s5 + $0xe8] sm:$0xff]
  %v2715 = vld [vmem:[%s5 + $0xf0] sm:$0xff]
  %v2716 = vld [vmem:[%s5 + $0xf8] sm:$0xff]
  %v2717 = vld [vmem:[%s5 + $0x100] sm:$0xff]
  %v2718 = vld [vmem:[%s5 + $0x108] sm:$0xff]
  %v2719 = vld [vmem:[%s5 + $0x110] sm:$0xff]
  %v2720 = vld [vmem:[%s5 + $0x118] sm:$0xff]
  %v2721 = vld [vmem:[%s5 + $0x120] sm:$0xff]
  %v2722 = vld [vmem:[%s5 + $0x128] sm:$0xff]
  %v2723 = vld [vmem:[%s5 + $0x130] sm:$0xff]
  %v2724 = vld [vmem:[%s5 + $0x138] sm:$0xff]
  %v2725 = vld [vmem:[%s5 + $0x140] sm:$0xff]
  %v2726 = vld [vmem:[%s5 + $0x148] sm:$0xff]
  %v2727 = vld [vmem:[%s5 + $0x150] sm:$0xff]
  %v2728 = vld [vmem:[%s5 + $0x158] sm:$0xff]
  %v2729 = vld [vmem:[%s5 + $0x160] sm:$0xff]
  %v2730 = vld [vmem:[%s5 + $0x168] sm:$0xff]
  %v2731 = vld [vmem:[%s5 + $0x170] sm:$0xff]
  %v2732 = vld [vmem:[%s5 + $0x178] sm:$0xff]
  %v2733 = vld [vmem:[%s5 + $0x180] sm:$0xff]
  %v2734 = vld [vmem:[%s5 + $0x188] sm:$0xff]
  %v2735 = vld [vmem:[%s5 + $0x190] sm:$0xff]
  %v2736 = vld [vmem:[%s5 + $0x198] sm:$0xff]
  %v2737 = vld [vmem:[%s5 + $0x1a0] sm:$0xff]
  %v2738 = vld [vmem:[%s5 + $0x1a8] sm:$0xff]
  %v2739 = vld [vmem:[%s5 + $0x1b0] sm:$0xff]
  %v2740 = vld [vmem:[%s5 + $0x1b8] sm:$0xff]
  %v2741 = vld [vmem:[%s5 + $0x1c0] sm:$0xff]
  %v2742 = vld [vmem:[%s5 + $0x1c8] sm:$0xff]
  %v2743 = vld [vmem:[%s5 + $0x1d0] sm:$0xff]
  %v2744 = vld [vmem:[%s5 + $0x1d8] sm:$0xff]
  %v2745 = vld [vmem:[%s5 + $0x1e0] sm:$0xff]
  %v2746 = vld [vmem:[%s5 + $0x1e8] sm:$0xff]
  %v2747 = vld [vmem:[%s5 + $0x1f0] sm:$0xff]
  %v2748 = vld [vmem:[%s5 + $0x1f8] sm:$0xff]
  %2749 = vmatprep.subr.mxu0 %v2686
  %2750 = vmatpush1.msra.mxu0 %v2685
  %2751 = vmatprep.subr.mxu0 %v2690
  %2752 = vmatpush1.msra.mxu0 %v2689
  %2753 = vmatprep.subr.mxu0 %v2694
  %2754 = vmatpush1.msra.mxu0 %v2693
  %2755 = vmatprep.subr.mxu0 %v2698
  %2756 = vmatpush1.msra.mxu0 %v2697
  %2757 = vmatprep.subr.mxu0 %v2702
  %2758 = vmatpush1.msra.mxu0 %v2701
  %2759 = vmatprep.subr.mxu0 %v2706
  %2760 = vmatpush1.msra.mxu0 %v2705
  %2761 = vmatprep.subr.mxu0 %v2710
  %2762 = vmatpush1.msra.mxu0 %v2709
  %2763 = vmatprep.subr.mxu0 %v2714
  %2764 = vmatpush1.msra.mxu0 %v2713
  %2765 = vmatprep.subr.mxu0 %v2718
  %2766 = vmatpush1.msra.mxu0 %v2717
  %2767 = vmatprep.subr.mxu0 %v2722
  %2768 = vmatpush1.msra.mxu0 %v2721
  %2769 = vmatprep.subr.mxu0 %v2726
  %2770 = vmatpush1.msra.mxu0 %v2725
  %2771 = vmatprep.subr.mxu0 %v2730
  %2772 = vmatpush1.msra.mxu0 %v2729
  %2773 = vmatprep.subr.mxu0 %v2734
  %2774 = vmatpush1.msra.mxu0 %v2733
  %2775 = vmatprep.subr.mxu0 %v2738
  %2776 = vmatpush1.msra.mxu0 %v2737
  %2777 = vmatprep.subr.mxu0 %v2742
  %2778 = vmatpush1.msra.mxu0 %v2741
  %2779 = vmatprep.subr.mxu0 %v2746
  %2780 = vmatpush1.msra.mxu0 %v2745
  %2781 = vmatprep.subr.mxu0 0.0
  %2782 = vmatpush1.msra.mxu0 0.0
  %2783 = vmatprep.subr.mxu0 0.0
  %2784 = vmatpush1.msra.mxu0 0.0
  %2785 = vmatprep.subr.mxu0 0.0
  %2786 = vmatpush1.msra.mxu0 0.0
  %2787 = vmatprep.subr.mxu0 0.0
  %2788 = vmatpush1.msra.mxu0 0.0
  %2789 = vmatprep.subr.mxu0 0.0
  %2790 = vmatpush1.msra.mxu0 0.0
  %2791 = vmatprep.subr.mxu0 0.0
  %2792 = vmatpush1.msra.mxu0 0.0
  %2793 = vmatprep.subr.mxu0 0.0
  %2794 = vmatpush1.msra.mxu0 0.0
  %2795 = vmatprep.subr.mxu0 0.0
  %2796 = vmatpush1.msra.mxu0 0.0
  %2797 = vmatprep.subr.mxu0 0.0
  %2798 = vmatpush1.msra.mxu0 0.0
  %2799 = vmatprep.subr.mxu0 0.0
  %2800 = vmatpush1.msra.mxu0 0.0
  %2801 = vmatprep.subr.mxu0 0.0
  %2802 = vmatpush1.msra.mxu0 0.0
  %2803 = vmatprep.subr.mxu0 0.0
  %2804 = vmatpush1.msra.mxu0 0.0
  %2805 = vmatprep.subr.mxu0 0.0
  %2806 = vmatpush1.msra.mxu0 0.0
  %2807 = vmatprep.subr.mxu0 0.0
  %2808 = vmatpush1.msra.mxu0 0.0
  %2809 = vmatprep.subr.mxu0 0.0
  %2810 = vmatpush1.msra.mxu0 0.0
  %2811 = vmatprep.subr.mxu0 0.0
  %2812 = vmatpush1.msra.mxu0 0.0
  %2813 = vmatprep.mubr.f32.mxu0 0.0
  %2814 = vmatmul.mubr.f32.gmra.mrb[0].mxu0 0.0
  %v2815 = vpop.f32.mrb[0].mxu0
  %v2816 = vadd.f32 0.0, %v2815
  %v2817 = vpop.f32.mrb[0].mxu0
  %v2818 = vadd.f32 0.0, %v2817
  %2819 = vdwg.mxu0
  %2820 = vmatprep.subr.mxu0 %v2688
  %2821 = vmatpush1.msra.mxu0 %v2687
  %2822 = vmatprep.subr.mxu0 %v2692
  %2823 = vmatpush1.msra.mxu0 %v2691
  %2824 = vmatprep.subr.mxu0 %v2696
  %2825 = vmatpush1.msra.mxu0 %v2695
  %2826 = vmatprep.subr.mxu0 %v2700
  %2827 = vmatpush1.msra.mxu0 %v2699
  %2828 = vmatprep.subr.mxu0 %v2704
  %2829 = vmatpush1.msra.mxu0 %v2703
  %2830 = vmatprep.subr.mxu0 %v2708
  %2831 = vmatpush1.msra.mxu0 %v2707
  %2832 = vmatprep.subr.mxu0 %v2712
  %2833 = vmatpush1.msra.mxu0 %v2711
  %2834 = vmatprep.subr.mxu0 %v2716
  %2835 = vmatpush1.msra.mxu0 %v2715
  %2836 = vmatprep.subr.mxu0 %v2720
  %2837 = vmatpush1.msra.mxu0 %v2719
  %2838 = vmatprep.subr.mxu0 %v2724
  %2839 = vmatpush1.msra.mxu0 %v2723
  %2840 = vmatprep.subr.mxu0 %v2728
  %2841 = vmatpush1.msra.mxu0 %v2727
  %2842 = vmatprep.subr.mxu0 %v2732
  %2843 = vmatpush1.msra.mxu0 %v2731
  %2844 = vmatprep.subr.mxu0 %v2736
  %2845 = vmatpush1.msra.mxu0 %v2735
  %2846 = vmatprep.subr.mxu0 %v2740
  %2847 = vmatpush1.msra.mxu0 %v2739
  %2848 = vmatprep.subr.mxu0 %v2744
  %2849 = vmatpush1.msra.mxu0 %v2743
  %2850 = vmatprep.subr.mxu0 %v2748
  %2851 = vmatpush1.msra.mxu0 %v2747
  %2852 = vmatprep.subr.mxu0 0.0
  %2853 = vmatpush1.msra.mxu0 0.0
  %2854 = vmatprep.subr.mxu0 0.0
  %2855 = vmatpush1.msra.mxu0 0.0
  %2856 = vmatprep.subr.mxu0 0.0
  %2857 = vmatpush1.msra.mxu0 0.0
  %2858 = vmatprep.subr.mxu0 0.0
  %2859 = vmatpush1.msra.mxu0 0.0
  %2860 = vmatprep.subr.mxu0 0.0
  %2861 = vmatpush1.msra.mxu0 0.0
  %2862 = vmatprep.subr.mxu0 0.0
  %2863 = vmatpush1.msra.mxu0 0.0
  %2864 = vmatprep.subr.mxu0 0.0
  %2865 = vmatpush1.msra.mxu0 0.0
  %2866 = vmatprep.subr.mxu0 0.0
  %2867 = vmatpush1.msra.mxu0 0.0
  %2868 = vmatprep.subr.mxu0 0.0
  %2869 = vmatpush1.msra.mxu0 0.0
  %2870 = vmatprep.subr.mxu0 0.0
  %2871 = vmatpush1.msra.mxu0 0.0
  %2872 = vmatprep.subr.mxu0 0.0
  %2873 = vmatpush1.msra.mxu0 0.0
  %2874 = vmatprep.subr.mxu0 0.0
  %2875 = vmatpush1.msra.mxu0 0.0
  %2876 = vmatprep.subr.mxu0 0.0
  %2877 = vmatpush1.msra.mxu0 0.0
  %2878 = vmatprep.subr.mxu0 0.0
  %2879 = vmatpush1.msra.mxu0 0.0
  %2880 = vmatprep.subr.mxu0 0.0
  %2881 = vmatpush1.msra.mxu0 0.0
  %2882 = vmatprep.subr.mxu0 0.0
  %2883 = vmatpush1.msra.mxu0 0.0
  %2884 = vmatprep.mubr.f32.mxu0 0.0
  %2885 = vmatmul.mubr.f32.gmra.mrb[0].mxu0 0.0
  %v2886 = vpop.f32.mrb[0].mxu0
  %v2887 = vadd.f32 0.0, %v2886
  %v2888 = vpop.f32.mrb[0].mxu0
  %v2889 = vadd.f32 0.0, %v2888
  %2890 = vdwg.mxu0
  %v2891 = vadd.f32 %v2681, %v2816
  %v2892 = vadd.f32 %v2682, %v2818
  %v2893 = vadd.f32 %v2683, %v2887
  %v2894 = vadd.f32 %v2684, %v2889
  %v2895 = vxor.u32 %v2891, 2147483648
  %v2896 = vmul.f32 %v2895, 1.442695
  %v2897 = vpow.pop %v2896
  %v2898 = vadd.f32 %v2897, 1.0
  %v2899 = vrcp.pop %v2898
  %v2900 = vmul.f32 1.0, %v2899
  %v2901 = vxor.u32 %v2892, 2147483648
  %v2902 = vmul.f32 %v2901, 1.442695
  %v2903 = vpow.pop %v2902
  %v2904 = vadd.f32 %v2903, 1.0
  %v2905 = vrcp.pop %v2904
  %v2906 = vmul.f32 1.0, %v2905
  %v2907 = vtanh.pop %v2893
  %v2908 = vxor.u32 %v2894, 2147483648
  %v2909 = vmul.f32 %v2908, 1.442695
  %v2910 = vpow.pop %v2909
  %v2911 = vadd.f32 %v2910, 1.0
  %v2912 = vrcp.pop %v2911
  %v2913 = vmul.f32 1.0, %v2912
  %v2914 = vmul.f32 %v2906, 0.0
  %v2915 = vmul.f32 %v2900, %v2907
  %v2916 = vadd.f32 %v2914, %v2915
  %v2917 = vtanh.pop %v2916
  %v2918 = vmul.f32 %v2913, %v2917
  %v2919 = vld [vmem:[%s630] sm:$0xff]
  %v2920 = vld [vmem:[%s630 + $0x8] sm:$0xff]
  %v2921 = vld [vmem:[%s630 + $0x10] sm:$0xff]
  %v2922 = vld [vmem:[%s630 + $0x18] sm:$0xff]
  %2923 = vmatprep.subr.mxu0 %v2686
  %2924 = vmatpush1.msra.mxu0 %v2685
  %2925 = vmatprep.subr.mxu0 %v2690
  %2926 = vmatpush1.msra.mxu0 %v2689
  %2927 = vmatprep.subr.mxu0 %v2694
  %2928 = vmatpush1.msra.mxu0 %v2693
  %2929 = vmatprep.subr.mxu0 %v2698
  %2930 = vmatpush1.msra.mxu0 %v2697
  %2931 = vmatprep.subr.mxu0 %v2702
  %2932 = vmatpush1.msra.mxu0 %v2701
  %2933 = vmatprep.subr.mxu0 %v2706
  %2934 = vmatpush1.msra.mxu0 %v2705
  %2935 = vmatprep.subr.mxu0 %v2710
  %2936 = vmatpush1.msra.mxu0 %v2709
  %2937 = vmatprep.subr.mxu0 %v2714
  %2938 = vmatpush1.msra.mxu0 %v2713
  %2939 = vmatprep.subr.mxu0 %v2718
  %2940 = vmatpush1.msra.mxu0 %v2717
  %2941 = vmatprep.subr.mxu0 %v2722
  %2942 = vmatpush1.msra.mxu0 %v2721
  %2943 = vmatprep.subr.mxu0 %v2726
  %2944 = vmatpush1.msra.mxu0 %v2725
  %2945 = vmatprep.subr.mxu0 %v2730
  %2946 = vmatpush1.msra.mxu0 %v2729
  %2947 = vmatprep.subr.mxu0 %v2734
  %2948 = vmatpush1.msra.mxu0 %v2733
  %2949 = vmatprep.subr.mxu0 %v2738
  %2950 = vmatpush1.msra.mxu0 %v2737
  %2951 = vmatprep.subr.mxu0 %v2742
  %2952 = vmatpush1.msra.mxu0 %v2741
  %2953 = vmatprep.subr.mxu0 %v2746
  %2954 = vmatpush1.msra.mxu0 %v2745
  %2955 = vmatprep.subr.mxu0 0.0
  %2956 = vmatpush1.msra.mxu0 0.0
  %2957 = vmatprep.subr.mxu0 0.0
  %2958 = vmatpush1.msra.mxu0 0.0
  %2959 = vmatprep.subr.mxu0 0.0
  %2960 = vmatpush1.msra.mxu0 0.0
  %2961 = vmatprep.subr.mxu0 0.0
  %2962 = vmatpush1.msra.mxu0 0.0
  %2963 = vmatprep.subr.mxu0 0.0
  %2964 = vmatpush1.msra.mxu0 0.0
  %2965 = vmatprep.subr.mxu0 0.0
  %2966 = vmatpush1.msra.mxu0 0.0
  %2967 = vmatprep.subr.mxu0 0.0
  %2968 = vmatpush1.msra.mxu0 0.0
  %2969 = vmatprep.subr.mxu0 0.0
  %2970 = vmatpush1.msra.mxu0 0.0
  %2971 = vmatprep.subr.mxu0 0.0
  %2972 = vmatpush1.msra.mxu0 0.0
  %2973 = vmatprep.subr.mxu0 0.0
  %2974 = vmatpush1.msra.mxu0 0.0
  %2975 = vmatprep.subr.mxu0 0.0
  %2976 = vmatpush1.msra.mxu0 0.0
  %2977 = vmatprep.subr.mxu0 0.0
  %2978 = vmatpush1.msra.mxu0 0.0
  %2979 = vmatprep.subr.mxu0 0.0
  %2980 = vmatpush1.msra.mxu0 0.0
  %2981 = vmatprep.subr.mxu0 0.0
  %2982 = vmatpush1.msra.mxu0 0.0
  %2983 = vmatprep.subr.mxu0 0.0
  %2984 = vmatpush1.msra.mxu0 0.0
  %2985 = vmatprep.subr.mxu0 0.0
  %2986 = vmatpush1.msra.mxu0 0.0
  %2987 = vmatprep.mubr.f32.mxu0 0.0
  %2988 = vmatmul.mubr.f32.gmra.mrb[0].mxu0 %v2918
  %v2989 = vpop.f32.mrb[0].mxu0
  %v2990 = vadd.f32 0.0, %v2989
  %v2991 = vpop.f32.mrb[0].mxu0
  %v2992 = vadd.f32 0.0, %v2991
  %2993 = vdwg.mxu0
  %2994 = vmatprep.subr.mxu0 %v2688
  %2995 = vmatpush1.msra.mxu0 %v2687
  %2996 = vmatprep.subr.mxu0 %v2692
  %2997 = vmatpush1.msra.mxu0 %v2691
  %2998 = vmatprep.subr.mxu0 %v2696
  %2999 = vmatpush1.msra.mxu0 %v2695
  %3000 = vmatprep.subr.mxu0 %v2700
  %3001 = vmatpush1.msra.mxu0 %v2699
  %3002 = vmatprep.subr.mxu0 %v2704
  %3003 = vmatpush1.msra.mxu0 %v2703
  %3004 = vmatprep.subr.mxu0 %v2708
  %3005 = vmatpush1.msra.mxu0 %v2707
  %3006 = vmatprep.subr.mxu0 %v2712
  %3007 = vmatpush1.msra.mxu0 %v2711
  %3008 = vmatprep.subr.mxu0 %v2716
  %3009 = vmatpush1.msra.mxu0 %v2715
  %3010 = vmatprep.subr.mxu0 %v2720
  %3011 = vmatpush1.msra.mxu0 %v2719
  %3012 = vmatprep.subr.mxu0 %v2724
  %3013 = vmatpush1.msra.mxu0 %v2723
  %3014 = vmatprep.subr.mxu0 %v2728
  %3015 = vmatpush1.msra.mxu0 %v2727
  %3016 = vmatprep.subr.mxu0 %v2732
  %3017 = vmatpush1.msra.mxu0 %v2731
  %3018 = vmatprep.subr.mxu0 %v2736
  %3019 = vmatpush1.msra.mxu0 %v2735
  %3020 = vmatprep.subr.mxu0 %v2740
  %3021 = vmatpush1.msra.mxu0 %v2739
  %3022 = vmatprep.subr.mxu0 %v2744
  %3023 = vmatpush1.msra.mxu0 %v2743
  %3024 = vmatprep.subr.mxu0 %v2748
  %3025 = vmatpush1.msra.mxu0 %v2747
  %3026 = vmatprep.subr.mxu0 0.0
  %3027 = vmatpush1.msra.mxu0 0.0
  %3028 = vmatprep.subr.mxu0 0.0
  %3029 = vmatpush1.msra.mxu0 0.0
  %3030 = vmatprep.subr.mxu0 0.0
  %3031 = vmatpush1.msra.mxu0 0.0
  %3032 = vmatprep.subr.mxu0 0.0
  %3033 = vmatpush1.msra.mxu0 0.0
  %3034 = vmatprep.subr.mxu0 0.0
  %3035 = vmatpush1.msra.mxu0 0.0
  %3036 = vmatprep.subr.mxu0 0.0
  %3037 = vmatpush1.msra.mxu0 0.0
  %3038 = vmatprep.subr.mxu0 0.0
  %3039 = vmatpush1.msra.mxu0 0.0
  %3040 = vmatprep.subr.mxu0 0.0
  %3041 = vmatpush1.msra.mxu0 0.0
  %3042 = vmatprep.subr.mxu0 0.0
  %3043 = vmatpush1.msra.mxu0 0.0
  %3044 = vmatprep.subr.mxu0 0.0
  %3045 = vmatpush1.msra.mxu0 0.0
  %3046 = vmatprep.subr.mxu0 0.0
  %3047 = vmatpush1.msra.mxu0 0.0
  %3048 = vmatprep.subr.mxu0 0.0
  %3049 = vmatpush1.msra.mxu0 0.0
  %3050 = vmatprep.subr.mxu0 0.0
  %3051 = vmatpush1.msra.mxu0 0.0
  %3052 = vmatprep.subr.mxu0 0.0
  %3053 = vmatpush1.msra.mxu0 0.0
  %3054 = vmatprep.subr.mxu0 0.0
  %3055 = vmatpush1.msra.mxu0 0.0
  %3056 = vmatprep.subr.mxu0 0.0
  %3057 = vmatpush1.msra.mxu0 0.0
  %3058 = vmatprep.mubr.f32.mxu0 0.0
  %3059 = vmatmul.mubr.f32.gmra.mrb[0].mxu0 %v2918
  %v3060 = vpop.f32.mrb[0].mxu0
  %v3061 = vadd.f32 0.0, %v3060
  %v3062 = vpop.f32.mrb[0].mxu0
  %v3063 = vadd.f32 0.0, %v3062
  %3064 = vdwg.mxu0
  %v3065 = vadd.f32 %v2919, %v2990
  %v3066 = vadd.f32 %v2920, %v2992
  %v3067 = vadd.f32 %v2921, %v3061
  %v3068 = vadd.f32 %v2922, %v3063
  %v3069 = vxor.u32 %v3065, 2147483648
  %v3070 = vmul.f32 %v3069, 1.442695
  %v3071 = vpow.pop %v3070
  %v3072 = vadd.f32 %v3071, 1.0
  %v3073 = vrcp.pop %v3072
  %v3074 = vmul.f32 1.0, %v3073
  %v3075 = vxor.u32 %v3066, 2147483648
  %v3076 = vmul.f32 %v3075, 1.442695
  %v3077 = vpow.pop %v3076
  %v3078 = vadd.f32 %v3077, 1.0
  %v3079 = vrcp.pop %v3078
  %v3080 = vmul.f32 1.0, %v3079
  %v3081 = vtanh.pop %v3067
  %v3082 = vxor.u32 %v3068, 2147483648
  %v3083 = vmul.f32 %v3082, 1.442695
  %v3084 = vpow.pop %v3083
  %v3085 = vadd.f32 %v3084, 1.0
  %v3086 = vrcp.pop %v3085
  %v3087 = vmul.f32 1.0, %v3086
  %v3088 = vmul.f32 %v3080, %v2916
  %v3089 = vmul.f32 %v3074, %v3081
  %v3090 = vadd.f32 %v3088, %v3089
  %v3091 = vtanh.pop %v3090
  %v3092 = vmul.f32 %v3087, %v3091
  %v3093 = vld [vmem:[%s873] sm:$0xff]
  %v3094 = vld [vmem:[%s873 + $0x8] sm:$0xff]
  %v3095 = vld [vmem:[%s873 + $0x10] sm:$0xff]
  %v3096 = vld [vmem:[%s873 + $0x18] sm:$0xff]
  %3097 = vmatprep.subr.mxu0 %v2686
  %3098 = vmatpush1.msra.mxu0 %v2685
  %3099 = vmatprep.subr.mxu0 %v2690
  %3100 = vmatpush1.msra.mxu0 %v2689
  %3101 = vmatprep.subr.mxu0 %v2694
  %3102 = vmatpush1.msra.mxu0 %v2693
  %3103 = vmatprep.subr.mxu0 %v2698
  %3104 = vmatpush1.msra.mxu0 %v2697
  %3105 = vmatprep.subr.mxu0 %v2702
  %3106 = vmatpush1.msra.mxu0 %v2701
  %3107 = vmatprep.subr.mxu0 %v2706
  %3108 = vmatpush1.msra.mxu0 %v2705
  %3109 = vmatprep.subr.mxu0 %v2710
  %3110 = vmatpush1.msra.mxu0 %v2709
  %3111 = vmatprep.subr.mxu0 %v2714
  %3112 = vmatpush1.msra.mxu0 %v2713
  %3113 = vmatprep.subr.mxu0 %v2718
  %3114 = vmatpush1.msra.mxu0 %v2717
  %3115 = vmatprep.subr.mxu0 %v2722
  %3116 = vmatpush1.msra.mxu0 %v2721
  %3117 = vmatprep.subr.mxu0 %v2726
  %3118 = vmatpush1.msra.mxu0 %v2725
  %3119 = vmatprep.subr.mxu0 %v2730
  %3120 = vmatpush1.msra.mxu0 %v2729
  %3121 = vmatprep.subr.mxu0 %v2734
  %3122 = vmatpush1.msra.mxu0 %v2733
  %3123 = vmatprep.subr.mxu0 %v2738
  %3124 = vmatpush1.msra.mxu0 %v2737
  %3125 = vmatprep.subr.mxu0 %v2742
  %3126 = vmatpush1.msra.mxu0 %v2741
  %3127 = vmatprep.subr.mxu0 %v2746
  %3128 = vmatpush1.msra.mxu0 %v2745
  %3129 = vmatprep.subr.mxu0 0.0
  %3130 = vmatpush1.msra.mxu0 0.0
  %3131 = vmatprep.subr.mxu0 0.0
  %3132 = vmatpush1.msra.mxu0 0.0
  %3133 = vmatprep.subr.mxu0 0.0
  %3134 = vmatpush1.msra.mxu0 0.0
  %3135 = vmatprep.subr.mxu0 0.0
  %3136 = vmatpush1.msra.mxu0 0.0
  %3137 = vmatprep.subr.mxu0 0.0
  %3138 = vmatpush1.msra.mxu0 0.0
  %3139 = vmatprep.subr.mxu0 0.0
  %3140 = vmatpush1.msra.mxu0 0.0
  %3141 = vmatprep.subr.mxu0 0.0
  %3142 = vmatpush1.msra.mxu0 0.0
  %3143 = vmatprep.subr.mxu0 0.0
  %3144 = vmatpush1.msra.mxu0 0.0
  %3145 = vmatprep.subr.mxu0 0.0
  %3146 = vmatpush1.msra.mxu0 0.0
  %3147 = vmatprep.subr.mxu0 0.0
  %3148 = vmatpush1.msra.mxu0 0.0
  %3149 = vmatprep.subr.mxu0 0.0
  %3150 = vmatpush1.msra.mxu0 0.0
  %3151 = vmatprep.subr.mxu0 0.0
  %3152 = vmatpush1.msra.mxu0 0.0
  %3153 = vmatprep.subr.mxu0 0.0
  %3154 = vmatpush1.msra.mxu0 0.0
  %3155 = vmatprep.subr.mxu0 0.0
  %3156 = vmatpush1.msra.mxu0 0.0
  %3157 = vmatprep.subr.mxu0 0.0
  %3158 = vmatpush1.msra.mxu0 0.0
  %3159 = vmatprep.subr.mxu0 0.0
  %3160 = vmatpush1.msra.mxu0 0.0
  %3161 = vmatprep.mubr.f32.mxu0 0.0
  %3162 = vmatmul.mubr.f32.gmra.mrb[0].mxu0 %v3092
  %v3163 = vpop.f32.mrb[0].mxu0
  %v3164 = vadd.f32 0.0, %v3163
  %v3165 = vpop.f32.mrb[0].mxu0
  %v3166 = vadd.f32 0.0, %v3165
  %3167 = vdwg.mxu0
  %3168 = vmatprep.subr.mxu0 %v2688
  %3169 = vmatpush1.msra.mxu0 %v2687
  %3170 = vmatprep.subr.mxu0 %v2692
  %3171 = vmatpush1.msra.mxu0 %v2691
  %3172 = vmatprep.subr.mxu0 %v2696
  %3173 = vmatpush1.msra.mxu0 %v2695
  %3174 = vmatprep.subr.mxu0 %v2700
  %3175 = vmatpush1.msra.mxu0 %v2699
  %3176 = vmatprep.subr.mxu0 %v2704
  %3177 = vmatpush1.msra.mxu0 %v2703
  %3178 = vmatprep.subr.mxu0 %v2708
  %3179 = vmatpush1.msra.mxu0 %v2707
  %3180 = vmatprep.subr.mxu0 %v2712
  %3181 = vmatpush1.msra.mxu0 %v2711
  %3182 = vmatprep.subr.mxu0 %v2716
  %3183 = vmatpush1.msra.mxu0 %v2715
  %3184 = vmatprep.subr.mxu0 %v2720
  %3185 = vmatpush1.msra.mxu0 %v2719
  %3186 = vmatprep.subr.mxu0 %v2724
  %3187 = vmatpush1.msra.mxu0 %v2723
  %3188 = vmatprep.subr.mxu0 %v2728
  %3189 = vmatpush1.msra.mxu0 %v2727
  %3190 = vmatprep.subr.mxu0 %v2732
  %3191 = vmatpush1.msra.mxu0 %v2731
  %3192 = vmatprep.subr.mxu0 %v2736
  %3193 = vmatpush1.msra.mxu0 %v2735
  %3194 = vmatprep.subr.mxu0 %v2740
  %3195 = vmatpush1.msra.mxu0 %v2739
  %3196 = vmatprep.subr.mxu0 %v2744
  %3197 = vmatpush1.msra.mxu0 %v2743
  %3198 = vmatprep.subr.mxu0 %v2748
  %3199 = vmatpush1.msra.mxu0 %v2747
  %3200 = vmatprep.subr.mxu0 0.0
  %3201 = vmatpush1.msra.mxu0 0.0
  %3202 = vmatprep.subr.mxu0 0.0
  %3203 = vmatpush1.msra.mxu0 0.0
  %3204 = vmatprep.subr.mxu0 0.0
  %3205 = vmatpush1.msra.mxu0 0.0
  %3206 = vmatprep.subr.mxu0 0.0
  %3207 = vmatpush1.msra.mxu0 0.0
  %3208 = vmatprep.subr.mxu0 0.0
  %3209 = vmatpush1.msra.mxu0 0.0
  %3210 = vmatprep.subr.mxu0 0.0
  %3211 = vmatpush1.msra.mxu0 0.0
  %3212 = vmatprep.subr.mxu0 0.0
  %3213 = vmatpush1.msra.mxu0 0.0
  %3214 = vmatprep.subr.mxu0 0.0
  %3215 = vmatpush1.msra.mxu0 0.0
  %3216 = vmatprep.subr.mxu0 0.0
  %3217 = vmatpush1.msra.mxu0 0.0
  %3218 = vmatprep.subr.mxu0 0.0
  %3219 = vmatpush1.msra.mxu0 0.0
  %3220 = vmatprep.subr.mxu0 0.0
  %3221 = vmatpush1.msra.mxu0 0.0
  %3222 = vmatprep.subr.mxu0 0.0
  %3223 = vmatpush1.msra.mxu0 0.0
  %3224 = vmatprep.subr.mxu0 0.0
  %3225 = vmatpush1.msra.mxu0 0.0
  %3226 = vmatprep.subr.mxu0 0.0
  %3227 = vmatpush1.msra.mxu0 0.0
  %3228 = vmatprep.subr.mxu0 0.0
  %3229 = vmatpush1.msra.mxu0 0.0
  %3230 = vmatprep.subr.mxu0 0.0
  %3231 = vmatpush1.msra.mxu0 0.0
  %3232 = vmatprep.mubr.f32.mxu0 0.0
  %3233 = vmatmul.mubr.f32.gmra.mrb[0].mxu0 %v3092
  %v3234 = vpop.f32.mrb[0].mxu0
  %v3235 = vadd.f32 0.0, %v3234
  %v3236 = vpop.f32.mrb[0].mxu0
  %v3237 = vadd.f32 0.0, %v3236
  %3238 = vdwg.mxu0
  %v3239 = vadd.f32 %v3093, %v3164
  %v3240 = vadd.f32 %v3094, %v3166
  %v3241 = vadd.f32 %v3095, %v3235
  %v3242 = vadd.f32 %v3096, %v3237
  %v3243 = vxor.u32 %v3239, 2147483648
  %v3244 = vmul.f32 %v3243, 1.442695
  %v3245 = vpow.pop %v3244
  %v3246 = vadd.f32 %v3245, 1.0
  %v3247 = vrcp.pop %v3246
  %v3248 = vmul.f32 1.0, %v3247
  %v3249 = vxor.u32 %v3240, 2147483648
  %v3250 = vmul.f32 %v3249, 1.442695
  %v3251 = vpow.pop %v3250
  %v3252 = vadd.f32 %v3251, 1.0
  %v3253 = vrcp.pop %v3252
  %v3254 = vmul.f32 1.0, %v3253
  %v3255 = vtanh.pop %v3241
  %v3256 = vxor.u32 %v3242, 2147483648
  %v3257 = vmul.f32 %v3256, 1.442695
  %v3258 = vpow.pop %v3257
  %v3259 = vadd.f32 %v3258, 1.0
  %v3260 = vrcp.pop %v3259
  %v3261 = vmul.f32 1.0, %v3260
  %v3262 = vmul.f32 %v3254, %v3090
  %v3263 = vmul.f32 %v3248, %v3255
  %v3264 = vadd.f32 %v3262, %v3263
  %v3265 = vtanh.pop %v3264
  %v3266 = vmul.f32 %v3261, %v3265
  %v3267 = vld [vmem:[%s1116] sm:$0xff]
  %v3268 = vld [vmem:[%s1116 + $0x8] sm:$0xff]
  %v3269 = vld [vmem:[%s1116 + $0x10] sm:$0xff]
  %v3270 = vld [vmem:[%s1116 + $0x18] sm:$0xff]
  %3271 = vmatprep.subr.mxu0 %v2686
  %3272 = vmatpush1.msra.mxu0 %v2685
  %3273 = vmatprep.subr.mxu0 %v2690
  %3274 = vmatpush1.msra.mxu0 %v2689
  %3275 = vmatprep.subr.mxu0 %v2694
  %3276 = vmatpush1.msra.mxu0 %v2693
  %3277 = vmatprep.subr.mxu0 %v2698
  %3278 = vmatpush1.msra.mxu0 %v2697
  %3279 = vmatprep.subr.mxu0 %v2702
  %3280 = vmatpush1.msra.mxu0 %v2701
  %3281 = vmatprep.subr.mxu0 %v2706
  %3282 = vmatpush1.msra.mxu0 %v2705
  %3283 = vmatprep.subr.mxu0 %v2710
  %3284 = vmatpush1.msra.mxu0 %v2709
  %3285 = vmatprep.subr.mxu0 %v2714
  %3286 = vmatpush1.msra.mxu0 %v2713
  %3287 = vmatprep.subr.mxu0 %v2718
  %3288 = vmatpush1.msra.mxu0 %v2717
  %3289 = vmatprep.subr.mxu0 %v2722
  %3290 = vmatpush1.msra.mxu0 %v2721
  %3291 = vmatprep.subr.mxu0 %v2726
  %3292 = vmatpush1.msra.mxu0 %v2725
  %3293 = vmatprep.subr.mxu0 %v2730
  %3294 = vmatpush1.msra.mxu0 %v2729
  %3295 = vmatprep.subr.mxu0 %v2734
  %3296 = vmatpush1.msra.mxu0 %v2733
  %3297 = vmatprep.subr.mxu0 %v2738
  %3298 = vmatpush1.msra.mxu0 %v2737
  %3299 = vmatprep.subr.mxu0 %v2742
  %3300 = vmatpush1.msra.mxu0 %v2741
  %3301 = vmatprep.subr.mxu0 %v2746
  %3302 = vmatpush1.msra.mxu0 %v2745
  %3303 = vmatprep.subr.mxu0 0.0
  %3304 = vmatpush1.msra.mxu0 0.0
  %3305 = vmatprep.subr.mxu0 0.0
  %3306 = vmatpush1.msra.mxu0 0.0
  %3307 = vmatprep.subr.mxu0 0.0
  %3308 = vmatpush1.msra.mxu0 0.0
  %3309 = vmatprep.subr.mxu0 0.0
  %3310 = vmatpush1.msra.mxu0 0.0
  %3311 = vmatprep.subr.mxu0 0.0
  %3312 = vmatpush1.msra.mxu0 0.0
  %3313 = vmatprep.subr.mxu0 0.0
  %3314 = vmatpush1.msra.mxu0 0.0
  %3315 = vmatprep.subr.mxu0 0.0
  %3316 = vmatpush1.msra.mxu0 0.0
  %3317 = vmatprep.subr.mxu0 0.0
  %3318 = vmatpush1.msra.mxu0 0.0
  %3319 = vmatprep.subr.mxu0 0.0
  %3320 = vmatpush1.msra.mxu0 0.0
  %3321 = vmatprep.subr.mxu0 0.0
  %3322 = vmatpush1.msra.mxu0 0.0
  %3323 = vmatprep.subr.mxu0 0.0
  %3324 = vmatpush1.msra.mxu0 0.0
  %3325 = vmatprep.subr.mxu0 0.0
  %3326 = vmatpush1.msra.mxu0 0.0
  %3327 = vmatprep.subr.mxu0 0.0
  %3328 = vmatpush1.msra.mxu0 0.0
  %3329 = vmatprep.subr.mxu0 0.0
  %3330 = vmatpush1.msra.mxu0 0.0
  %3331 = vmatprep.subr.mxu0 0.0
  %3332 = vmatpush1.msra.mxu0 0.0
  %3333 = vmatprep.subr.mxu0 0.0
  %3334 = vmatpush1.msra.mxu0 0.0
  %3335 = vmatprep.mubr.f32.mxu0 0.0
  %3336 = vmatmul.mubr.f32.gmra.mrb[0].mxu0 %v3266
  %v3337 = vpop.f32.mrb[0].mxu0
  %v3338 = vadd.f32 0.0, %v3337
  %v3339 = vpop.f32.mrb[0].mxu0
  %v3340 = vadd.f32 0.0, %v3339
  %3341 = vdwg.mxu0
  %3342 = vmatprep.subr.mxu0 %v2688
  %3343 = vmatpush1.msra.mxu0 %v2687
  %3344 = vmatprep.subr.mxu0 %v2692
  %3345 = vmatpush1.msra.mxu0 %v2691
  %3346 = vmatprep.subr.mxu0 %v2696
  %3347 = vmatpush1.msra.mxu0 %v2695
  %3348 = vmatprep.subr.mxu0 %v2700
  %3349 = vmatpush1.msra.mxu0 %v2699
  %3350 = vmatprep.subr.mxu0 %v2704
  %3351 = vmatpush1.msra.mxu0 %v2703
  %3352 = vmatprep.subr.mxu0 %v2708
  %3353 = vmatpush1.msra.mxu0 %v2707
  %3354 = vmatprep.subr.mxu0 %v2712
  %3355 = vmatpush1.msra.mxu0 %v2711
  %3356 = vmatprep.subr.mxu0 %v2716
  %3357 = vmatpush1.msra.mxu0 %v2715
  %3358 = vmatprep.subr.mxu0 %v2720
  %3359 = vmatpush1.msra.mxu0 %v2719
  %3360 = vmatprep.subr.mxu0 %v2724
  %3361 = vmatpush1.msra.mxu0 %v2723
  %3362 = vmatprep.subr.mxu0 %v2728
  %3363 = vmatpush1.msra.mxu0 %v2727
  %3364 = vmatprep.subr.mxu0 %v2732
  %3365 = vmatpush1.msra.mxu0 %v2731
  %3366 = vmatprep.subr.mxu0 %v2736
  %3367 = vmatpush1.msra.mxu0 %v2735
  %3368 = vmatprep.subr.mxu0 %v2740
  %3369 = vmatpush1.msra.mxu0 %v2739
  %3370 = vmatprep.subr.mxu0 %v2744
  %3371 = vmatpush1.msra.mxu0 %v2743
  %3372 = vmatprep.subr.mxu0 %v2748
  %3373 = vmatpush1.msra.mxu0 %v2747
  %3374 = vmatprep.subr.mxu0 0.0
  %3375 = vmatpush1.msra.mxu0 0.0
  %3376 = vmatprep.subr.mxu0 0.0
  %3377 = vmatpush1.msra.mxu0 0.0
  %3378 = vmatprep.subr.mxu0 0.0
  %3379 = vmatpush1.msra.mxu0 0.0
  %3380 = vmatprep.subr.mxu0 0.0
  %3381 = vmatpush1.msra.mxu0 0.0
  %3382 = vmatprep.subr.mxu0 0.0
  %3383 = vmatpush1.msra.mxu0 0.0
  %3384 = vmatprep.subr.mxu0 0.0
  %3385 = vmatpush1.msra.mxu0 0.0
  %3386 = vmatprep.subr.mxu0 0.0
  %3387 = vmatpush1.msra.mxu0 0.0
  %3388 = vmatprep.subr.mxu0 0.0
  %3389 = vmatpush1.msra.mxu0 0.0
  %3390 = vmatprep.subr.mxu0 0.0
  %3391 = vmatpush1.msra.mxu0 0.0
  %3392 = vmatprep.subr.mxu0 0.0
  %3393 = vmatpush1.msra.mxu0 0.0
  %3394 = vmatprep.subr.mxu0 0.0
  %3395 = vmatpush1.msra.mxu0 0.0
  %3396 = vmatprep.subr.mxu0 0.0
  %3397 = vmatpush1.msra.mxu0 0.0
  %3398 = vmatprep.subr.mxu0 0.0
  %3399 = vmatpush1.msra.mxu0 0.0
  %3400 = vmatprep.subr.mxu0 0.0
  %3401 = vmatpush1.msra.mxu0 0.0
  %3402 = vmatprep.subr.mxu0 0.0
  %3403 = vmatpush1.msra.mxu0 0.0
  %3404 = vmatprep.subr.mxu0 0.0
  %3405 = vmatpush1.msra.mxu0 0.0
  %3406 = vmatprep.mubr.f32.mxu0 0.0
  %3407 = vmatmul.mubr.f32.gmra.mrb[0].mxu0 %v3266
  %v3408 = vpop.f32.mrb[0].mxu0
  %v3409 = vadd.f32 0.0, %v3408
  %v3410 = vpop.f32.mrb[0].mxu0
  %v3411 = vadd.f32 0.0, %v3410
  %3412 = vdwg.mxu0
  %v3413 = vadd.f32 %v3267, %v3338
  %v3414 = vadd.f32 %v3268, %v3340
  %v3415 = vadd.f32 %v3269, %v3409
  %v3416 = vadd.f32 %v3270, %v3411
  %v3417 = vxor.u32 %v3413, 2147483648
  %v3418 = vmul.f32 %v3417, 1.442695
  %v3419 = vpow.pop %v3418
  %v3420 = vadd.f32 %v3419, 1.0
  %v3421 = vrcp.pop %v3420
  %v3422 = vmul.f32 1.0, %v3421
  %v3423 = vxor.u32 %v3414, 2147483648
  %v3424 = vmul.f32 %v3423, 1.442695
  %v3425 = vpow.pop %v3424
  %v3426 = vadd.f32 %v3425, 1.0
  %v3427 = vrcp.pop %v3426
  %v3428 = vmul.f32 1.0, %v3427
  %v3429 = vtanh.pop %v3415
  %v3430 = vxor.u32 %v3416, 2147483648
  %v3431 = vmul.f32 %v3430, 1.442695
  %v3432 = vpow.pop %v3431
  %v3433 = vadd.f32 %v3432, 1.0
  %v3434 = vrcp.pop %v3433
  %v3435 = vmul.f32 1.0, %v3434
  %v3436 = vmul.f32 %v3428, %v3264
  %v3437 = vmul.f32 %v3422, %v3429
  %v3438 = vadd.f32 %v3436, %v3437
  %v3439 = vtanh.pop %v3438
  %v3440 = vmul.f32 %v3435, %v3439
  %v3441 = vld [vmem:[%s1359] sm:$0xff]
  %v3442 = vld [vmem:[%s1359 + $0x8] sm:$0xff]
  %v3443 = vld [vmem:[%s1359 + $0x10] sm:$0xff]
  %v3444 = vld [vmem:[%s1359 + $0x18] sm:$0xff]
  %3445 = vmatprep.subr.mxu0 %v2686
  %3446 = vmatpush1.msra.mxu0 %v2685
  %3447 = vmatprep.subr.mxu0 %v2690
  %3448 = vmatpush1.msra.mxu0 %v2689
  %3449 = vmatprep.subr.mxu0 %v2694
  %3450 = vmatpush1.msra.mxu0 %v2693
  %3451 = vmatprep.subr.mxu0 %v2698
  %3452 = vmatpush1.msra.mxu0 %v2697
  %3453 = vmatprep.subr.mxu0 %v2702
  %3454 = vmatpush1.msra.mxu0 %v2701
  %3455 = vmatprep.subr.mxu0 %v2706
  %3456 = vmatpush1.msra.mxu0 %v2705
  %3457 = vmatprep.subr.mxu0 %v2710
  %3458 = vmatpush1.msra.mxu0 %v2709
  %3459 = vmatprep.subr.mxu0 %v2714
  %3460 = vmatpush1.msra.mxu0 %v2713
  %3461 = vmatprep.subr.mxu0 %v2718
  %3462 = vmatpush1.msra.mxu0 %v2717
  %3463 = vmatprep.subr.mxu0 %v2722
  %3464 = vmatpush1.msra.mxu0 %v2721
  %3465 = vmatprep.subr.mxu0 %v2726
  %3466 = vmatpush1.msra.mxu0 %v2725
  %3467 = vmatprep.subr.mxu0 %v2730
  %3468 = vmatpush1.msra.mxu0 %v2729
  %3469 = vmatprep.subr.mxu0 %v2734
  %3470 = vmatpush1.msra.mxu0 %v2733
  %3471 = vmatprep.subr.mxu0 %v2738
  %3472 = vmatpush1.msra.mxu0 %v2737
  %3473 = vmatprep.subr.mxu0 %v2742
  %3474 = vmatpush1.msra.mxu0 %v2741
  %3475 = vmatprep.subr.mxu0 %v2746
  %3476 = vmatpush1.msra.mxu0 %v2745
  %3477 = vmatprep.subr.mxu0 0.0
  %3478 = vmatpush1.msra.mxu0 0.0
  %3479 = vmatprep.subr.mxu0 0.0
  %3480 = vmatpush1.msra.mxu0 0.0
  %3481 = vmatprep.subr.mxu0 0.0
  %3482 = vmatpush1.msra.mxu0 0.0
  %3483 = vmatprep.subr.mxu0 0.0
  %3484 = vmatpush1.msra.mxu0 0.0
  %3485 = vmatprep.subr.mxu0 0.0
  %3486 = vmatpush1.msra.mxu0 0.0
  %3487 = vmatprep.subr.mxu0 0.0
  %3488 = vmatpush1.msra.mxu0 0.0
  %3489 = vmatprep.subr.mxu0 0.0
  %3490 = vmatpush1.msra.mxu0 0.0
  %3491 = vmatprep.subr.mxu0 0.0
  %3492 = vmatpush1.msra.mxu0 0.0
  %3493 = vmatprep.subr.mxu0 0.0
  %3494 = vmatpush1.msra.mxu0 0.0
  %3495 = vmatprep.subr.mxu0 0.0
  %3496 = vmatpush1.msra.mxu0 0.0
  %3497 = vmatprep.subr.mxu0 0.0
  %3498 = vmatpush1.msra.mxu0 0.0
  %3499 = vmatprep.subr.mxu0 0.0
  %3500 = vmatpush1.msra.mxu0 0.0
  %3501 = vmatprep.subr.mxu0 0.0
  %3502 = vmatpush1.msra.mxu0 0.0
  %3503 = vmatprep.subr.mxu0 0.0
  %3504 = vmatpush1.msra.mxu0 0.0
  %3505 = vmatprep.subr.mxu0 0.0
  %3506 = vmatpush1.msra.mxu0 0.0
  %3507 = vmatprep.subr.mxu0 0.0
  %3508 = vmatpush1.msra.mxu0 0.0
  %3509 = vmatprep.mubr.f32.mxu0 0.0
  %3510 = vmatmul.mubr.f32.gmra.mrb[0].mxu0 %v3440
  %v3511 = vpop.f32.mrb[0].mxu0
  %v3512 = vadd.f32 0.0, %v3511
  %v3513 = vpop.f32.mrb[0].mxu0
  %v3514 = vadd.f32 0.0, %v3513
  %3515 = vdwg.mxu0
  %3516 = vmatprep.subr.mxu0 %v2688
  %3517 = vmatpush1.msra.mxu0 %v2687
  %3518 = vmatprep.subr.mxu0 %v2692
  %3519 = vmatpush1.msra.mxu0 %v2691
  %3520 = vmatprep.subr.mxu0 %v2696
  %3521 = vmatpush1.msra.mxu0 %v2695
  %3522 = vmatprep.subr.mxu0 %v2700
  %3523 = vmatpush1.msra.mxu0 %v2699
  %3524 = vmatprep.subr.mxu0 %v2704
  %3525 = vmatpush1.msra.mxu0 %v2703
  %3526 = vmatprep.subr.mxu0 %v2708
  %3527 = vmatpush1.msra.mxu0 %v2707
  %3528 = vmatprep.subr.mxu0 %v2712
  %3529 = vmatpush1.msra.mxu0 %v2711
  %3530 = vmatprep.subr.mxu0 %v2716
  %3531 = vmatpush1.msra.mxu0 %v2715
  %3532 = vmatprep.subr.mxu0 %v2720
  %3533 = vmatpush1.msra.mxu0 %v2719
  %3534 = vmatprep.subr.mxu0 %v2724
  %3535 = vmatpush1.msra.mxu0 %v2723
  %3536 = vmatprep.subr.mxu0 %v2728
  %3537 = vmatpush1.msra.mxu0 %v2727
  %3538 = vmatprep.subr.mxu0 %v2732
  %3539 = vmatpush1.msra.mxu0 %v2731
  %3540 = vmatprep.subr.mxu0 %v2736
  %3541 = vmatpush1.msra.mxu0 %v2735
  %3542 = vmatprep.subr.mxu0 %v2740
  %3543 = vmatpush1.msra.mxu0 %v2739
  %3544 = vmatprep.subr.mxu0 %v2744
  %3545 = vmatpush1.msra.mxu0 %v2743
  %3546 = vmatprep.subr.mxu0 %v2748
  %3547 = vmatpush1.msra.mxu0 %v2747
  %3548 = vmatprep.subr.mxu0 0.0
  %3549 = vmatpush1.msra.mxu0 0.0
  %3550 = vmatprep.subr.mxu0 0.0
  %3551 = vmatpush1.msra.mxu0 0.0
  %3552 = vmatprep.subr.mxu0 0.0
  %3553 = vmatpush1.msra.mxu0 0.0
  %3554 = vmatprep.subr.mxu0 0.0
  %3555 = vmatpush1.msra.mxu0 0.0
  %3556 = vmatprep.subr.mxu0 0.0
  %3557 = vmatpush1.msra.mxu0 0.0
  %3558 = vmatprep.subr.mxu0 0.0
  %3559 = vmatpush1.msra.mxu0 0.0
  %3560 = vmatprep.subr.mxu0 0.0
  %3561 = vmatpush1.msra.mxu0 0.0
  %3562 = vmatprep.subr.mxu0 0.0
  %3563 = vmatpush1.msra.mxu0 0.0
  %3564 = vmatprep.subr.mxu0 0.0
  %3565 = vmatpush1.msra.mxu0 0.0
  %3566 = vmatprep.subr.mxu0 0.0
  %3567 = vmatpush1.msra.mxu0 0.0
  %3568 = vmatprep.subr.mxu0 0.0
  %3569 = vmatpush1.msra.mxu0 0.0
  %3570 = vmatprep.subr.mxu0 0.0
  %3571 = vmatpush1.msra.mxu0 0.0
  %3572 = vmatprep.subr.mxu0 0.0
  %3573 = vmatpush1.msra.mxu0 0.0
  %3574 = vmatprep.subr.mxu0 0.0
  %3575 = vmatpush1.msra.mxu0 0.0
  %3576 = vmatprep.subr.mxu0 0.0
  %3577 = vmatpush1.msra.mxu0 0.0
  %3578 = vmatprep.subr.mxu0 0.0
  %3579 = vmatpush1.msra.mxu0 0.0
  %3580 = vmatprep.mubr.f32.mxu0 0.0
  %3581 = vmatmul.mubr.f32.gmra.mrb[0].mxu0 %v3440
  %v3582 = vpop.f32.mrb[0].mxu0
  %v3583 = vadd.f32 0.0, %v3582
  %v3584 = vpop.f32.mrb[0].mxu0
  %v3585 = vadd.f32 0.0, %v3584
  %3586 = vdwg.mxu0
  %v3587 = vadd.f32 %v3441, %v3512
  %v3588 = vadd.f32 %v3442, %v3514
  %v3589 = vadd.f32 %v3443, %v3583
  %v3590 = vadd.f32 %v3444, %v3585
  %v3591 = vxor.u32 %v3587, 2147483648
  %v3592 = vmul.f32 %v3591, 1.442695
  %v3593 = vpow.pop %v3592
  %v3594 = vadd.f32 %v3593, 1.0
  %v3595 = vrcp.pop %v3594
  %v3596 = vmul.f32 1.0, %v3595
  %v3597 = vxor.u32 %v3588, 2147483648
  %v3598 = vmul.f32 %v3597, 1.442695
  %v3599 = vpow.pop %v3598
  %v3600 = vadd.f32 %v3599, 1.0
  %v3601 = vrcp.pop %v3600
  %v3602 = vmul.f32 1.0, %v3601
  %v3603 = vtanh.pop %v3589
  %v3604 = vxor.u32 %v3590, 2147483648
  %v3605 = vmul.f32 %v3604, 1.442695
  %v3606 = vpow.pop %v3605
  %v3607 = vadd.f32 %v3606, 1.0
  %v3608 = vrcp.pop %v3607
  %v3609 = vmul.f32 1.0, %v3608
  %v3610 = vmul.f32 %v3602, %v3438
  %v3611 = vmul.f32 %v3596, %v3603
  %v3612 = vadd.f32 %v3610, %v3611
  %v3613 = vtanh.pop %v3612
  %v3614 = vmul.f32 %v3609, %v3613
  %v3615 = vld [vmem:[%s1602] sm:$0xff]
  %v3616 = vld [vmem:[%s1602 + $0x8] sm:$0xff]
  %v3617 = vld [vmem:[%s1602 + $0x10] sm:$0xff]
  %v3618 = vld [vmem:[%s1602 + $0x18] sm:$0xff]
  %3619 = vmatprep.subr.mxu0 %v2686
  %3620 = vmatpush1.msra.mxu0 %v2685
  %3621 = vmatprep.subr.mxu0 %v2690
  %3622 = vmatpush1.msra.mxu0 %v2689
  %3623 = vmatprep.subr.mxu0 %v2694
  %3624 = vmatpush1.msra.mxu0 %v2693
  %3625 = vmatprep.subr.mxu0 %v2698
  %3626 = vmatpush1.msra.mxu0 %v2697
  %3627 = vmatprep.subr.mxu0 %v2702
  %3628 = vmatpush1.msra.mxu0 %v2701
  %3629 = vmatprep.subr.mxu0 %v2706
  %3630 = vmatpush1.msra.mxu0 %v2705
  %3631 = vmatprep.subr.mxu0 %v2710
  %3632 = vmatpush1.msra.mxu0 %v2709
  %3633 = vmatprep.subr.mxu0 %v2714
  %3634 = vmatpush1.msra.mxu0 %v2713
  %3635 = vmatprep.subr.mxu0 %v2718
  %3636 = vmatpush1.msra.mxu0 %v2717
  %3637 = vmatprep.subr.mxu0 %v2722
  %3638 = vmatpush1.msra.mxu0 %v2721
  %3639 = vmatprep.subr.mxu0 %v2726
  %3640 = vmatpush1.msra.mxu0 %v2725
  %3641 = vmatprep.subr.mxu0 %v2730
  %3642 = vmatpush1.msra.mxu0 %v2729
  %3643 = vmatprep.subr.mxu0 %v2734
  %3644 = vmatpush1.msra.mxu0 %v2733
  %3645 = vmatprep.subr.mxu0 %v2738
  %3646 = vmatpush1.msra.mxu0 %v2737
  %3647 = vmatprep.subr.mxu0 %v2742
  %3648 = vmatpush1.msra.mxu0 %v2741
  %3649 = vmatprep.subr.mxu0 %v2746
  %3650 = vmatpush1.msra.mxu0 %v2745
  %3651 = vmatprep.subr.mxu0 0.0
  %3652 = vmatpush1.msra.mxu0 0.0
  %3653 = vmatprep.subr.mxu0 0.0
  %3654 = vmatpush1.msra.mxu0 0.0
  %3655 = vmatprep.subr.mxu0 0.0
  %3656 = vmatpush1.msra.mxu0 0.0
  %3657 = vmatprep.subr.mxu0 0.0
  %3658 = vmatpush1.msra.mxu0 0.0
  %3659 = vmatprep.subr.mxu0 0.0
  %3660 = vmatpush1.msra.mxu0 0.0
  %3661 = vmatprep.subr.mxu0 0.0
  %3662 = vmatpush1.msra.mxu0 0.0
  %3663 = vmatprep.subr.mxu0 0.0
  %3664 = vmatpush1.msra.mxu0 0.0
  %3665 = vmatprep.subr.mxu0 0.0
  %3666 = vmatpush1.msra.mxu0 0.0
  %3667 = vmatprep.subr.mxu0 0.0
  %3668 = vmatpush1.msra.mxu0 0.0
  %3669 = vmatprep.subr.mxu0 0.0
  %3670 = vmatpush1.msra.mxu0 0.0
  %3671 = vmatprep.subr.mxu0 0.0
  %3672 = vmatpush1.msra.mxu0 0.0
  %3673 = vmatprep.subr.mxu0 0.0
  %3674 = vmatpush1.msra.mxu0 0.0
  %3675 = vmatprep.subr.mxu0 0.0
  %3676 = vmatpush1.msra.mxu0 0.0
  %3677 = vmatprep.subr.mxu0 0.0
  %3678 = vmatpush1.msra.mxu0 0.0
  %3679 = vmatprep.subr.mxu0 0.0
  %3680 = vmatpush1.msra.mxu0 0.0
  %3681 = vmatprep.subr.mxu0 0.0
  %3682 = vmatpush1.msra.mxu0 0.0
  %3683 = vmatprep.mubr.f32.mxu0 0.0
  %3684 = vmatmul.mubr.f32.gmra.mrb[0].mxu0 %v3614
  %v3685 = vpop.f32.mrb[0].mxu0
  %v3686 = vadd.f32 0.0, %v3685
  %v3687 = vpop.f32.mrb[0].mxu0
  %v3688 = vadd.f32 0.0, %v3687
  %3689 = vdwg.mxu0
  %3690 = vmatprep.subr.mxu0 %v2688
  %3691 = vmatpush1.msra.mxu0 %v2687
  %3692 = vmatprep.subr.mxu0 %v2692
  %3693 = vmatpush1.msra.mxu0 %v2691
  %3694 = vmatprep.subr.mxu0 %v2696
  %3695 = vmatpush1.msra.mxu0 %v2695
  %3696 = vmatprep.subr.mxu0 %v2700
  %3697 = vmatpush1.msra.mxu0 %v2699
  %3698 = vmatprep.subr.mxu0 %v2704
  %3699 = vmatpush1.msra.mxu0 %v2703
  %3700 = vmatprep.subr.mxu0 %v2708
  %3701 = vmatpush1.msra.mxu0 %v2707
  %3702 = vmatprep.subr.mxu0 %v2712
  %3703 = vmatpush1.msra.mxu0 %v2711
  %3704 = vmatprep.subr.mxu0 %v2716
  %3705 = vmatpush1.msra.mxu0 %v2715
  %3706 = vmatprep.subr.mxu0 %v2720
  %3707 = vmatpush1.msra.mxu0 %v2719
  %3708 = vmatprep.subr.mxu0 %v2724
  %3709 = vmatpush1.msra.mxu0 %v2723
  %3710 = vmatprep.subr.mxu0 %v2728
  %3711 = vmatpush1.msra.mxu0 %v2727
  %3712 = vmatprep.subr.mxu0 %v2732
  %3713 = vmatpush1.msra.mxu0 %v2731
  %3714 = vmatprep.subr.mxu0 %v2736
  %3715 = vmatpush1.msra.mxu0 %v2735
  %3716 = vmatprep.subr.mxu0 %v2740
  %3717 = vmatpush1.msra.mxu0 %v2739
  %3718 = vmatprep.subr.mxu0 %v2744
  %3719 = vmatpush1.msra.mxu0 %v2743
  %3720 = vmatprep.subr.mxu0 %v2748
  %3721 = vmatpush1.msra.mxu0 %v2747
  %3722 = vmatprep.subr.mxu0 0.0
  %3723 = vmatpush1.msra.mxu0 0.0
  %3724 = vmatprep.subr.mxu0 0.0
  %3725 = vmatpush1.msra.mxu0 0.0
  %3726 = vmatprep.subr.mxu0 0.0
  %3727 = vmatpush1.msra.mxu0 0.0
  %3728 = vmatprep.subr.mxu0 0.0
  %3729 = vmatpush1.msra.mxu0 0.0
  %3730 = vmatprep.subr.mxu0 0.0
  %3731 = vmatpush1.msra.mxu0 0.0
  %3732 = vmatprep.subr.mxu0 0.0
  %3733 = vmatpush1.msra.mxu0 0.0
  %3734 = vmatprep.subr.mxu0 0.0
  %3735 = vmatpush1.msra.mxu0 0.0
  %3736 = vmatprep.subr.mxu0 0.0
  %3737 = vmatpush1.msra.mxu0 0.0
  %3738 = vmatprep.subr.mxu0 0.0
  %3739 = vmatpush1.msra.mxu0 0.0
  %3740 = vmatprep.subr.mxu0 0.0
  %3741 = vmatpush1.msra.mxu0 0.0
  %3742 = vmatprep.subr.mxu0 0.0
  %3743 = vmatpush1.msra.mxu0 0.0
  %3744 = vmatprep.subr.mxu0 0.0
  %3745 = vmatpush1.msra.mxu0 0.0
  %3746 = vmatprep.subr.mxu0 0.0
  %3747 = vmatpush1.msra.mxu0 0.0
  %3748 = vmatprep.subr.mxu0 0.0
  %3749 = vmatpush1.msra.mxu0 0.0
  %3750 = vmatprep.subr.mxu0 0.0
  %3751 = vmatpush1.msra.mxu0 0.0
  %3752 = vmatprep.subr.mxu0 0.0
  %3753 = vmatpush1.msra.mxu0 0.0
  %3754 = vmatprep.mubr.f32.mxu0 0.0
  %3755 = vmatmul.mubr.f32.gmra.mrb[0].mxu0 %v3614
  %v3756 = vpop.f32.mrb[0].mxu0
  %v3757 = vadd.f32 0.0, %v3756
  %v3758 = vpop.f32.mrb[0].mxu0
  %v3759 = vadd.f32 0.0, %v3758
  %3760 = vdwg.mxu0
  %v3761 = vadd.f32 %v3615, %v3686
  %v3762 = vadd.f32 %v3616, %v3688
  %v3763 = vadd.f32 %v3617, %v3757
  %v3764 = vadd.f32 %v3618, %v3759
  %v3765 = vxor.u32 %v3761, 2147483648
  %v3766 = vmul.f32 %v3765, 1.442695
  %v3767 = vpow.pop %v3766
  %v3768 = vadd.f32 %v3767, 1.0
  %v3769 = vrcp.pop %v3768
  %v3770 = vmul.f32 1.0, %v3769
  %v3771 = vxor.u32 %v3762, 2147483648
  %v3772 = vmul.f32 %v3771, 1.442695
  %v3773 = vpow.pop %v3772
  %v3774 = vadd.f32 %v3773, 1.0
  %v3775 = vrcp.pop %v3774
  %v3776 = vmul.f32 1.0, %v3775
  %v3777 = vtanh.pop %v3763
  %v3778 = vxor.u32 %v3764, 2147483648
  %v3779 = vmul.f32 %v3778, 1.442695
  %v3780 = vpow.pop %v3779
  %v3781 = vadd.f32 %v3780, 1.0
  %v3782 = vrcp.pop %v3781
  %v3783 = vmul.f32 1.0, %v3782
  %v3784 = vmul.f32 %v3776, %v3612
  %v3785 = vmul.f32 %v3770, %v3777
  %v3786 = vadd.f32 %v3784, %v3785
  %v3787 = vtanh.pop %v3786
  %v3788 = vmul.f32 %v3783, %v3787
  %v3789 = vld [vmem:[%s1845] sm:$0xff]
  %v3790 = vld [vmem:[%s1845 + $0x8] sm:$0xff]
  %v3791 = vld [vmem:[%s1845 + $0x10] sm:$0xff]
  %v3792 = vld [vmem:[%s1845 + $0x18] sm:$0xff]
  %3793 = vmatprep.subr.mxu0 %v2686
  %3794 = vmatpush1.msra.mxu0 %v2685
  %3795 = vmatprep.subr.mxu0 %v2690
  %3796 = vmatpush1.msra.mxu0 %v2689
  %3797 = vmatprep.subr.mxu0 %v2694
  %3798 = vmatpush1.msra.mxu0 %v2693
  %3799 = vmatprep.subr.mxu0 %v2698
  %3800 = vmatpush1.msra.mxu0 %v2697
  %3801 = vmatprep.subr.mxu0 %v2702
  %3802 = vmatpush1.msra.mxu0 %v2701
  %3803 = vmatprep.subr.mxu0 %v2706
  %3804 = vmatpush1.msra.mxu0 %v2705
  %3805 = vmatprep.subr.mxu0 %v2710
  %3806 = vmatpush1.msra.mxu0 %v2709
  %3807 = vmatprep.subr.mxu0 %v2714
  %3808 = vmatpush1.msra.mxu0 %v2713
  %3809 = vmatprep.subr.mxu0 %v2718
  %3810 = vmatpush1.msra.mxu0 %v2717
  %3811 = vmatprep.subr.mxu0 %v2722
  %3812 = vmatpush1.msra.mxu0 %v2721
  %3813 = vmatprep.subr.mxu0 %v2726
  %3814 = vmatpush1.msra.mxu0 %v2725
  %3815 = vmatprep.subr.mxu0 %v2730
  %3816 = vmatpush1.msra.mxu0 %v2729
  %3817 = vmatprep.subr.mxu0 %v2734
  %3818 = vmatpush1.msra.mxu0 %v2733
  %3819 = vmatprep.subr.mxu0 %v2738
  %3820 = vmatpush1.msra.mxu0 %v2737
  %3821 = vmatprep.subr.mxu0 %v2742
  %3822 = vmatpush1.msra.mxu0 %v2741
  %3823 = vmatprep.subr.mxu0 %v2746
  %3824 = vmatpush1.msra.mxu0 %v2745
  %3825 = vmatprep.subr.mxu0 0.0
  %3826 = vmatpush1.msra.mxu0 0.0
  %3827 = vmatprep.subr.mxu0 0.0
  %3828 = vmatpush1.msra.mxu0 0.0
  %3829 = vmatprep.subr.mxu0 0.0
  %3830 = vmatpush1.msra.mxu0 0.0
  %3831 = vmatprep.subr.mxu0 0.0
  %3832 = vmatpush1.msra.mxu0 0.0
  %3833 = vmatprep.subr.mxu0 0.0
  %3834 = vmatpush1.msra.mxu0 0.0
  %3835 = vmatprep.subr.mxu0 0.0
  %3836 = vmatpush1.msra.mxu0 0.0
  %3837 = vmatprep.subr.mxu0 0.0
  %3838 = vmatpush1.msra.mxu0 0.0
  %3839 = vmatprep.subr.mxu0 0.0
  %3840 = vmatpush1.msra.mxu0 0.0
  %3841 = vmatprep.subr.mxu0 0.0
  %3842 = vmatpush1.msra.mxu0 0.0
  %3843 = vmatprep.subr.mxu0 0.0
  %3844 = vmatpush1.msra.mxu0 0.0
  %3845 = vmatprep.subr.mxu0 0.0
  %3846 = vmatpush1.msra.mxu0 0.0
  %3847 = vmatprep.subr.mxu0 0.0
  %3848 = vmatpush1.msra.mxu0 0.0
  %3849 = vmatprep.subr.mxu0 0.0
  %3850 = vmatpush1.msra.mxu0 0.0
  %3851 = vmatprep.subr.mxu0 0.0
  %3852 = vmatpush1.msra.mxu0 0.0
  %3853 = vmatprep.subr.mxu0 0.0
  %3854 = vmatpush1.msra.mxu0 0.0
  %3855 = vmatprep.subr.mxu0 0.0
  %3856 = vmatpush1.msra.mxu0 0.0
  %3857 = vmatprep.mubr.f32.mxu0 0.0
  %3858 = vmatmul.mubr.f32.gmra.mrb[0].mxu0 %v3788
  %v3859 = vpop.f32.mrb[0].mxu0
  %v3860 = vadd.f32 0.0, %v3859
  %v3861 = vpop.f32.mrb[0].mxu0
  %v3862 = vadd.f32 0.0, %v3861
  %3863 = vdwg.mxu0
  %3864 = vmatprep.subr.mxu0 %v2688
  %3865 = vmatpush1.msra.mxu0 %v2687
  %3866 = vmatprep.subr.mxu0 %v2692
  %3867 = vmatpush1.msra.mxu0 %v2691
  %3868 = vmatprep.subr.mxu0 %v2696
  %3869 = vmatpush1.msra.mxu0 %v2695
  %3870 = vmatprep.subr.mxu0 %v2700
  %3871 = vmatpush1.msra.mxu0 %v2699
  %3872 = vmatprep.subr.mxu0 %v2704
  %3873 = vmatpush1.msra.mxu0 %v2703
  %3874 = vmatprep.subr.mxu0 %v2708
  %3875 = vmatpush1.msra.mxu0 %v2707
  %3876 = vmatprep.subr.mxu0 %v2712
  %3877 = vmatpush1.msra.mxu0 %v2711
  %3878 = vmatprep.subr.mxu0 %v2716
  %3879 = vmatpush1.msra.mxu0 %v2715
  %3880 = vmatprep.subr.mxu0 %v2720
  %3881 = vmatpush1.msra.mxu0 %v2719
  %3882 = vmatprep.subr.mxu0 %v2724
  %3883 = vmatpush1.msra.mxu0 %v2723
  %3884 = vmatprep.subr.mxu0 %v2728
  %3885 = vmatpush1.msra.mxu0 %v2727
  %3886 = vmatprep.subr.mxu0 %v2732
  %3887 = vmatpush1.msra.mxu0 %v2731
  %3888 = vmatprep.subr.mxu0 %v2736
  %3889 = vmatpush1.msra.mxu0 %v2735
  %3890 = vmatprep.subr.mxu0 %v2740
  %3891 = vmatpush1.msra.mxu0 %v2739
  %3892 = vmatprep.subr.mxu0 %v2744
  %3893 = vmatpush1.msra.mxu0 %v2743
  %3894 = vmatprep.subr.mxu0 %v2748
  %3895 = vmatpush1.msra.mxu0 %v2747
  %3896 = vmatprep.subr.mxu0 0.0
  %3897 = vmatpush1.msra.mxu0 0.0
  %3898 = vmatprep.subr.mxu0 0.0
  %3899 = vmatpush1.msra.mxu0 0.0
  %3900 = vmatprep.subr.mxu0 0.0
  %3901 = vmatpush1.msra.mxu0 0.0
  %3902 = vmatprep.subr.mxu0 0.0
  %3903 = vmatpush1.msra.mxu0 0.0
  %3904 = vmatprep.subr.mxu0 0.0
  %3905 = vmatpush1.msra.mxu0 0.0
  %3906 = vmatprep.subr.mxu0 0.0
  %3907 = vmatpush1.msra.mxu0 0.0
  %3908 = vmatprep.subr.mxu0 0.0
  %3909 = vmatpush1.msra.mxu0 0.0
  %3910 = vmatprep.subr.mxu0 0.0
  %3911 = vmatpush1.msra.mxu0 0.0
  %3912 = vmatprep.subr.mxu0 0.0
  %3913 = vmatpush1.msra.mxu0 0.0
  %3914 = vmatprep.subr.mxu0 0.0
  %3915 = vmatpush1.msra.mxu0 0.0
  %3916 = vmatprep.subr.mxu0 0.0
  %3917 = vmatpush1.msra.mxu0 0.0
  %3918 = vmatprep.subr.mxu0 0.0
  %3919 = vmatpush1.msra.mxu0 0.0
  %3920 = vmatprep.subr.mxu0 0.0
  %3921 = vmatpush1.msra.mxu0 0.0
  %3922 = vmatprep.subr.mxu0 0.0
  %3923 = vmatpush1.msra.mxu0 0.0
  %3924 = vmatprep.subr.mxu0 0.0
  %3925 = vmatpush1.msra.mxu0 0.0
  %3926 = vmatprep.subr.mxu0 0.0
  %3927 = vmatpush1.msra.mxu0 0.0
  %3928 = vmatprep.mubr.f32.mxu0 0.0
  %3929 = vmatmul.mubr.f32.gmra.mrb[0].mxu0 %v3788
  %v3930 = vpop.f32.mrb[0].mxu0
  %v3931 = vadd.f32 0.0, %v3930
  %v3932 = vpop.f32.mrb[0].mxu0
  %v3933 = vadd.f32 0.0, %v3932
  %3934 = vdwg.mxu0
  %v3935 = vadd.f32 %v3789, %v3860
  %v3936 = vadd.f32 %v3790, %v3862
  %v3937 = vadd.f32 %v3791, %v3931
  %v3938 = vadd.f32 %v3792, %v3933
  %v3939 = vxor.u32 %v3935, 2147483648
  %v3940 = vmul.f32 %v3939, 1.442695
  %v3941 = vpow.pop %v3940
  %v3942 = vadd.f32 %v3941, 1.0
  %v3943 = vrcp.pop %v3942
  %v3944 = vmul.f32 1.0, %v3943
  %v3945 = vxor.u32 %v3936, 2147483648
  %v3946 = vmul.f32 %v3945, 1.442695
  %v3947 = vpow.pop %v3946
  %v3948 = vadd.f32 %v3947, 1.0
  %v3949 = vrcp.pop %v3948
  %v3950 = vmul.f32 1.0, %v3949
  %v3951 = vtanh.pop %v3937
  %v3952 = vxor.u32 %v3938, 2147483648
  %v3953 = vmul.f32 %v3952, 1.442695
  %v3954 = vpow.pop %v3953
  %v3955 = vadd.f32 %v3954, 1.0
  %v3956 = vrcp.pop %v3955
  %v3957 = vmul.f32 1.0, %v3956
  %v3958 = vmul.f32 %v3950, %v3786
  %v3959 = vmul.f32 %v3944, %v3951
  %v3960 = vadd.f32 %v3958, %v3959
  %v3961 = vtanh.pop %v3960
  %v3962 = vmul.f32 %v3957, %v3961
  %v3963 = vld [vmem:[%s2088] sm:$0xff]
  %v3964 = vld [vmem:[%s2088 + $0x8] sm:$0xff]
  %v3965 = vld [vmem:[%s2088 + $0x10] sm:$0xff]
  %v3966 = vld [vmem:[%s2088 + $0x18] sm:$0xff]
  %3967 = vmatprep.subr.mxu0 %v2686
  %3968 = vmatpush1.msra.mxu0 %v2685
  %3969 = vmatprep.subr.mxu0 %v2690
  %3970 = vmatpush1.msra.mxu0 %v2689
  %3971 = vmatprep.subr.mxu0 %v2694
  %3972 = vmatpush1.msra.mxu0 %v2693
  %3973 = vmatprep.subr.mxu0 %v2698
  %3974 = vmatpush1.msra.mxu0 %v2697
  %3975 = vmatprep.subr.mxu0 %v2702
  %3976 = vmatpush1.msra.mxu0 %v2701
  %3977 = vmatprep.subr.mxu0 %v2706
  %3978 = vmatpush1.msra.mxu0 %v2705
  %3979 = vmatprep.subr.mxu0 %v2710
  %3980 = vmatpush1.msra.mxu0 %v2709
  %3981 = vmatprep.subr.mxu0 %v2714
  %3982 = vmatpush1.msra.mxu0 %v2713
  %3983 = vmatprep.subr.mxu0 %v2718
  %3984 = vmatpush1.msra.mxu0 %v2717
  %3985 = vmatprep.subr.mxu0 %v2722
  %3986 = vmatpush1.msra.mxu0 %v2721
  %3987 = vmatprep.subr.mxu0 %v2726
  %3988 = vmatpush1.msra.mxu0 %v2725
  %3989 = vmatprep.subr.mxu0 %v2730
  %3990 = vmatpush1.msra.mxu0 %v2729
  %3991 = vmatprep.subr.mxu0 %v2734
  %3992 = vmatpush1.msra.mxu0 %v2733
  %3993 = vmatprep.subr.mxu0 %v2738
  %3994 = vmatpush1.msra.mxu0 %v2737
  %3995 = vmatprep.subr.mxu0 %v2742
  %3996 = vmatpush1.msra.mxu0 %v2741
  %3997 = vmatprep.subr.mxu0 %v2746
  %3998 = vmatpush1.msra.mxu0 %v2745
  %3999 = vmatprep.subr.mxu0 0.0
  %4000 = vmatpush1.msra.mxu0 0.0
  %4001 = vmatprep.subr.mxu0 0.0
  %4002 = vmatpush1.msra.mxu0 0.0
  %4003 = vmatprep.subr.mxu0 0.0
  %4004 = vmatpush1.msra.mxu0 0.0
  %4005 = vmatprep.subr.mxu0 0.0
  %4006 = vmatpush1.msra.mxu0 0.0
  %4007 = vmatprep.subr.mxu0 0.0
  %4008 = vmatpush1.msra.mxu0 0.0
  %4009 = vmatprep.subr.mxu0 0.0
  %4010 = vmatpush1.msra.mxu0 0.0
  %4011 = vmatprep.subr.mxu0 0.0
  %4012 = vmatpush1.msra.mxu0 0.0
  %4013 = vmatprep.subr.mxu0 0.0
  %4014 = vmatpush1.msra.mxu0 0.0
  %4015 = vmatprep.subr.mxu0 0.0
  %4016 = vmatpush1.msra.mxu0 0.0
  %4017 = vmatprep.subr.mxu0 0.0
  %4018 = vmatpush1.msra.mxu0 0.0
  %4019 = vmatprep.subr.mxu0 0.0
  %4020 = vmatpush1.msra.mxu0 0.0
  %4021 = vmatprep.subr.mxu0 0.0
  %4022 = vmatpush1.msra.mxu0 0.0
  %4023 = vmatprep.subr.mxu0 0.0
  %4024 = vmatpush1.msra.mxu0 0.0
  %4025 = vmatprep.subr.mxu0 0.0
  %4026 = vmatpush1.msra.mxu0 0.0
  %4027 = vmatprep.subr.mxu0 0.0
  %4028 = vmatpush1.msra.mxu0 0.0
  %4029 = vmatprep.subr.mxu0 0.0
  %4030 = vmatpush1.msra.mxu0 0.0
  %4031 = vmatprep.mubr.f32.mxu0 0.0
  %4032 = vmatmul.mubr.f32.gmra.mrb[0].mxu0 %v3962
  %v4033 = vpop.f32.mrb[0].mxu0
  %v4034 = vadd.f32 0.0, %v4033
  %v4035 = vpop.f32.mrb[0].mxu0
  %v4036 = vadd.f32 0.0, %v4035
  %4037 = vdwg.mxu0
  %4038 = vmatprep.subr.mxu0 %v2688
  %4039 = vmatpush1.msra.mxu0 %v2687
  %4040 = vmatprep.subr.mxu0 %v2692
  %4041 = vmatpush1.msra.mxu0 %v2691
  %4042 = vmatprep.subr.mxu0 %v2696
  %4043 = vmatpush1.msra.mxu0 %v2695
  %4044 = vmatprep.subr.mxu0 %v2700
  %4045 = vmatpush1.msra.mxu0 %v2699
  %4046 = vmatprep.subr.mxu0 %v2704
  %4047 = vmatpush1.msra.mxu0 %v2703
  %4048 = vmatprep.subr.mxu0 %v2708
  %4049 = vmatpush1.msra.mxu0 %v2707
  %4050 = vmatprep.subr.mxu0 %v2712
  %4051 = vmatpush1.msra.mxu0 %v2711
  %4052 = vmatprep.subr.mxu0 %v2716
  %4053 = vmatpush1.msra.mxu0 %v2715
  %4054 = vmatprep.subr.mxu0 %v2720
  %4055 = vmatpush1.msra.mxu0 %v2719
  %4056 = vmatprep.subr.mxu0 %v2724
  %4057 = vmatpush1.msra.mxu0 %v2723
  %4058 = vmatprep.subr.mxu0 %v2728
  %4059 = vmatpush1.msra.mxu0 %v2727
  %4060 = vmatprep.subr.mxu0 %v2732
  %4061 = vmatpush1.msra.mxu0 %v2731
  %4062 = vmatprep.subr.mxu0 %v2736
  %4063 = vmatpush1.msra.mxu0 %v2735
  %4064 = vmatprep.subr.mxu0 %v2740
  %4065 = vmatpush1.msra.mxu0 %v2739
  %4066 = vmatprep.subr.mxu0 %v2744
  %4067 = vmatpush1.msra.mxu0 %v2743
  %4068 = vmatprep.subr.mxu0 %v2748
  %4069 = vmatpush1.msra.mxu0 %v2747
  %4070 = vmatprep.subr.mxu0 0.0
  %4071 = vmatpush1.msra.mxu0 0.0
  %4072 = vmatprep.subr.mxu0 0.0
  %4073 = vmatpush1.msra.mxu0 0.0
  %4074 = vmatprep.subr.mxu0 0.0
  %4075 = vmatpush1.msra.mxu0 0.0
  %4076 = vmatprep.subr.mxu0 0.0
  %4077 = vmatpush1.msra.mxu0 0.0
  %4078 = vmatprep.subr.mxu0 0.0
  %4079 = vmatpush1.msra.mxu0 0.0
  %4080 = vmatprep.subr.mxu0 0.0
  %4081 = vmatpush1.msra.mxu0 0.0
  %4082 = vmatprep.subr.mxu0 0.0
  %4083 = vmatpush1.msra.mxu0 0.0
  %4084 = vmatprep.subr.mxu0 0.0
  %4085 = vmatpush1.msra.mxu0 0.0
  %4086 = vmatprep.subr.mxu0 0.0
  %4087 = vmatpush1.msra.mxu0 0.0
  %4088 = vmatprep.subr.mxu0 0.0
  %4089 = vmatpush1.msra.mxu0 0.0
  %4090 = vmatprep.subr.mxu0 0.0
  %4091 = vmatpush1.msra.mxu0 0.0
  %4092 = vmatprep.subr.mxu0 0.0
  %4093 = vmatpush1.msra.mxu0 0.0
  %4094 = vmatprep.subr.mxu0 0.0
  %4095 = vmatpush1.msra.mxu0 0.0
  %4096 = vmatprep.subr.mxu0 0.0
  %4097 = vmatpush1.msra.mxu0 0.0
  %4098 = vmatprep.subr.mxu0 0.0
  %4099 = vmatpush1.msra.mxu0 0.0
  %4100 = vmatprep.subr.mxu0 0.0
  %4101 = vmatpush1.msra.mxu0 0.0
  %4102 = vmatprep.mubr.f32.mxu0 0.0
  %4103 = vmatmul.mubr.f32.gmra.mrb[0].mxu0 %v3962
  %v4104 = vpop.f32.mrb[0].mxu0
  %v4105 = vadd.f32 0.0, %v4104
  %v4106 = vpop.f32.mrb[0].mxu0
  %v4107 = vadd.f32 0.0, %v4106
  %4108 = vdwg.mxu0
  %v4109 = vadd.f32 %v3963, %v4034
  %v4110 = vadd.f32 %v3964, %v4036
  %v4111 = vadd.f32 %v3965, %v4105
  %v4112 = vadd.f32 %v3966, %v4107
  %v4113 = vxor.u32 %v4109, 2147483648
  %v4114 = vmul.f32 %v4113, 1.442695
  %v4115 = vpow.pop %v4114
  %v4116 = vadd.f32 %v4115, 1.0
  %v4117 = vrcp.pop %v4116
  %v4118 = vmul.f32 1.0, %v4117
  %v4119 = vxor.u32 %v4110, 2147483648
  %v4120 = vmul.f32 %v4119, 1.442695
  %v4121 = vpow.pop %v4120
  %v4122 = vadd.f32 %v4121, 1.0
  %v4123 = vrcp.pop %v4122
  %v4124 = vmul.f32 1.0, %v4123
  %v4125 = vtanh.pop %v4111
  %v4126 = vxor.u32 %v4112, 2147483648
  %v4127 = vmul.f32 %v4126, 1.442695
  %v4128 = vpow.pop %v4127
  %v4129 = vadd.f32 %v4128, 1.0
  %v4130 = vrcp.pop %v4129
  %v4131 = vmul.f32 1.0, %v4130
  %v4132 = vmul.f32 %v4124, %v3960
  %v4133 = vmul.f32 %v4118, %v4125
  %v4134 = vadd.f32 %v4132, %v4133
  %v4135 = vtanh.pop %v4134
  %v4136 = vmul.f32 %v4131, %v4135
  %v4137 = vld [vmem:[%s7] sm:$0x1]
  %v4139 = vlaneseq
  %v4140 = vshrl.u32 %v4139, 7
  %v4141 = vsub.s32 0, %v4140
  %v4142 = vrot.slane %v4137, %v4141
  %v4144 = vmul.f32 %v4136, %v4142
  %4145 = vadd.xlane.f32.xlu0 %v4144
  %v4146 = vpop.xlane.xlu0 %4145
  %v4147 = vld [vmem:[#allocation4] sm:$0x1]
  %v4149 = vlaneseq
  %v4150 = vshrl.u32 %v4149, 7
  %v4151 = vsub.s32 0, %v4150
  %v4152 = vrot.slane %v4147, %v4151
  %v4154 = vadd.f32 %v4146, %v4152
  %4156 = vset.pattern.permute.xlu0 0
  %4157 = vperm.xlu0 %4156, %v4154
  %v4158 = vpop.permute.xlu0 %4157
  %4160 = vst [vmem:[%s9] sm:$0xff] %v4158
  // Predicated region
  $region38: #{day_model3_forward.1} parent=0 // pred_check
    _
  $region39: #{day_model3_forward.1} parent=0 // pred_check_branch
    %4162 = sbr.rel (0) target = $region41
  $region40: #{day_model3_forward.1} parent=0 // pred_region
    _
  $region41: #{day_model3_forward.1} parent=0 // pred_fallthru
    _
  // Predicated region
  $region42: #{day_model3_forward.1} parent=0 // pred_check
    _
  $region43: #{day_model3_forward.1} parent=0 // pred_check_branch
    %4164 = sbr.rel (0) target = $region45
  $region44: #{day_model3_forward.1} parent=0 // pred_region
    _
  $region45: #{day_model3_forward.1} parent=0 // pred_fallthru
    _

</llo_original>
